<compile_context>
chip_gen: v6e
topology: v6e:2x2x1
jax: 0.10.0
libtpu: 0.0.40
codegen_flags: <defaults>
</compile_context>

<pallas_src>
import jax
import jax.numpy as jnp
import numpy as np
from jax.experimental import pallas as pl
from jax.experimental.pallas import tpu as pltpu


def _sigmoid(x):
    # Numerically stable, exact sigmoid (review: avoid approx reciprocal).
    e = jnp.exp(-jnp.abs(x))
    return jnp.where(x >= 0, 1.0 / (1.0 + e), e / (1.0 + e))


def _make_kernel(B, C, H, W):
    HW = H * W
    BHW = B * HW
    PP = (H // 2) * (W // 2)                    # pooled positions per image

    def shift_lanes(v, s):
        # out[..., p] = v[..., (p + s) % BHW].  Wrapped-around lanes are
        # always zeroed by the halo masks (or never read, for pooling).
        s = s % BHW
        if s == 0:
            return v
        return jnp.concatenate([v[..., s:], v[..., :s]], axis=-1)

    def kernel(x_ref, w13_ref, b13_ref, w2_ref, b2_ref,
               caw1_ref, cab1_ref, caw2_ref, cab2_ref,
               saw_ref, sab_ref, bns_ref, bnb_ref,
               fcw_ref, fcb_ref, m3_ref, m7_ref, sel_ref,
               o_ref, col_ref):

        def im2col3(v):
            # (C, BHW) -> col_ref (9C, BHW); every store is full lane width.
            t = 0
            for oh in (-1, 0, 1):
                for ow in (-1, 0, 1):
                    tap = v if (oh == 0 and ow == 0) else (
                        shift_lanes(v, oh * W + ow) * m3_ref[t:t + 1, :])
                    col_ref[t * C:(t + 1) * C, :] = tap
                    t += 1
            return col_ref[...]

        x = x_ref[...]                                     # (C, BHW)

        # ------------------------------ ResBlock --------------------------
        # conv1 and conv3 read the same input -> one im2col, one stacked dot.
        col_x = im2col3(x)
        z13 = jnp.maximum(
            jnp.dot(w13_ref[...], col_x,
                    preferred_element_type=jnp.float32) + b13_ref[...], 0.0)
        out1 = z13[0:C, :]                                 # relu(bn1(conv1 x))
        res = z13[C:2 * C, :]                              # relu(bn3(conv3 x))

        col_o = im2col3(out1)
        out2 = jnp.maximum(
            jnp.dot(w2_ref[...], col_o,
                    preferred_element_type=jnp.float32) + b2_ref[...], 0.0)
        y = out2 + res                                     # (C, BHW)

        # ----------------------- CBAM: channel attention ------------------
        stats = jnp.concatenate(
            [jnp.mean(y[:, b * HW:(b + 1) * HW], axis=1, keepdims=True)
             for b in range(B)]
            + [jnp.max(y[:, b * HW:(b + 1) * HW], axis=1, keepdims=True)
               for b in range(B)], axis=1)                 # (C, 2B)
        hdn = jnp.maximum(
            jnp.dot(caw1_ref[...], stats,
                    preferred_element_type=jnp.float32) + cab1_ref[...], 0.0)
        lgt = (jnp.dot(caw2_ref[...], hdn,
                       preferred_element_type=jnp.float32) + cab2_ref[...])
        ca = _sigmoid(lgt[:, 0:B] + lgt[:, B:2 * B])       # (C, B)
        y = jnp.concatenate(
            [y[:, b * HW:(b + 1) * HW] * ca[:, b:b + 1] for b in range(B)],
            axis=1)                                        # (C, BHW)

        # ----------------------- CBAM: spatial attention ------------------
        # 7x7 conv over [avg_c, max_c] as 49 shift-and-FMA taps (no im2col,
        # no N=1 MXU dot).
        plane = jnp.concatenate(
            [jnp.mean(y, axis=0, keepdims=True),
             jnp.max(y, axis=0, keepdims=True)], axis=0)   # (2, BHW)
        saw = saw_ref[...]                                 # (2, 49)
        acc = jnp.zeros((2, BHW), jnp.float32)
        t = 0
        for oh in range(-3, 4):
            for ow in range(-3, 4):
                sh = plane if (oh == 0 and ow == 0) else (
                    shift_lanes(plane, oh * W + ow) * m7_ref[t:t + 1, :])
                acc = acc + sh * saw[:, t:t + 1]
                t += 1
        sa = _sigmoid(jnp.sum(acc, axis=0, keepdims=True) + sab_ref[...])
        y = y * sa                                         # (C, BHW)

        # --------------------------- folded final BN ----------------------
        y = y * bns_ref[...] + bnb_ref[...]

        # --------------- MaxPool2d(2) + flatten + Linear -------------------
        m1 = jnp.maximum(y, shift_lanes(y, 1))             # max over w pairs
        m2 = jnp.maximum(m1, shift_lanes(m1, W))           # 2x2 max @ even h,w
        pooled = jnp.dot(m2, sel_ref[...],
                         preferred_element_type=jnp.float32)   # (C, B*PP)
        fc_in = jnp.concatenate(
            [jnp.concatenate([pooled[c:c + 1, b * PP:(b + 1) * PP]
                              for c in range(C)], axis=1)
             for b in range(B)], axis=0)                   # (B, PP*C)
        o_ref[...] = (jnp.dot(fc_in, fcw_ref[...],
                              preferred_element_type=jnp.float32)
                      + fcb_ref[...])

    return kernel


def _halo_masks(B, H, W, r):
    """((2r+1)^2, B*H*W) 0/1 masks: tap (oh, ow) valid at each position."""
    p = np.arange(B * H * W)
    hh = (p // W) % H
    ww = p % W
    rows = []
    for oh in range(-r, r + 1):
        for ow in range(-r, r + 1):
            ok = ((hh + oh >= 0) & (hh + oh < H)
                  & (ww + ow >= 0) & (ww + ow < W))
            rows.append(ok.astype(np.float32))
    return np.stack(rows)


def _pool_sel(B, H, W):
    """(B*H*W, B*(H/2)*(W/2)) 0/1 matrix selecting the 2x2-block lanes."""
    Hp, Wp = H // 2, W // 2
    sel = np.zeros((B * H * W, B * Hp * Wp), np.float32)
    for b in range(B):
        for hp in range(Hp):
            for wp in range(Wp):
                sel[b * H * W + 2 * hp * W + 2 * wp,
                    b * Hp * Wp + hp * Wp + wp] = 1.0
    return sel


def cbam_feature_mapping(x_nchw, p):
    """Forward pass. x_nchw: (B, C, H, W) float32 -> (B, num_classes)."""
    B, C, H, W = x_nchw.shape
    N = p["fc_w"].shape[-1]
    # Channel-first flat layout: B*H*W (= 128 here) on the lane axis so every
    # tile / store in the kernel is lane-dense.
    x_cf = jnp.transpose(x_nchw, (1, 0, 2, 3)).reshape(C, B * H * W)
    x_cf = x_cf.astype(jnp.float32)
    m3 = jnp.asarray(_halo_masks(B, H, W, 1))              # (9,  BHW)
    m7 = jnp.asarray(_halo_masks(B, H, W, 3))              # (49, BHW)
    sel = jnp.asarray(_pool_sel(B, H, W))                  # (BHW, B*PP)
    kernel = _make_kernel(B, C, H, W)
    # TODO(synk): on v7x, split the batch across the two TensorCores
    #             (grid=(B,), dimension_semantics=("parallel",)) once B >= 8;
    #             at B=2 the kernel is fixed-overhead bound, so a single grid
    #             step over the whole batch is used.
    return pl.pallas_call(
        kernel,
        out_shape=jax.ShapeDtypeStruct((B, N), jnp.float32),
        scratch_shapes=[
            pltpu.VMEM((9 * C, B * H * W), jnp.float32),   # shared im2col
        ],
    )(x_cf, p["w13"], p["b13"], p["w2"], p["b2"],
      p["ca_w1"], p["ca_b1"], p["ca_w2"], p["ca_b2"],
      p["sa_w"], p["sa_b"], p["bn_scale"], p["bn_bias"],
      p["fc_w"], p["fc_b"], m3, m7, sel)


# ------------------------- deterministic params ---------------------------

def init_params(C=4, num_classes=10, hidden=2, eps=1e-5):
    keys = iter(jax.random.split(jax.random.PRNGKey(0), 64))

    def nxt():
        return next(keys)

    def conv_bn_folded(cin, cout, ksz):
        # Conv2d (HWIO) + bias with BatchNorm2d (eval) folded in, rearranged
        # to (cout, ksz*ksz*cin) to match the kernel's im2col row order
        # (tap-major, then input channel).
        w = 0.1 * jax.random.normal(nxt(), (ksz, ksz, cin, cout), jnp.float32)
        b = 0.1 * jax.random.normal(nxt(), (cout,), jnp.float32)
        gamma = 1.0 + 0.1 * jax.random.normal(nxt(), (cout,), jnp.float32)
        beta = 0.1 * jax.random.normal(nxt(), (cout,), jnp.float32)
        mean = 0.1 * jax.random.normal(nxt(), (cout,), jnp.float32)
        var = 1.0 + 0.1 * jnp.abs(jax.random.normal(nxt(), (cout,), jnp.float32))
        s = gamma / jnp.sqrt(var + eps)
        w_cf = (w * s).reshape(ksz * ksz * cin, cout).T    # (cout, 9*cin)
        b_cf = ((b - mean) * s + beta).reshape(cout, 1)
        return w_cf, b_cf

    p = {}
    w1, b1 = conv_bn_folded(C, C, 3)
    w2, b2 = conv_bn_folded(C, C, 3)
    w3, b3 = conv_bn_folded(C, C, 3)
    # conv1 and conv3 share the same input -> stack for one fused MXU dot.
    p["w13"] = jnp.concatenate([w1, w3], axis=0)           # (2C, 9C)
    p["b13"] = jnp.concatenate([b1, b3], axis=0)           # (2C, 1)
    p["w2"], p["b2"] = w2, b2

    # CBAM channel-attention shared MLP (reduction=2 -> `hidden` units),
    # channel-first: out = W @ x + b.
    p["ca_w1"] = 0.2 * jax.random.normal(nxt(), (hidden, C), jnp.float32)
    p["ca_b1"] = 0.1 * jax.random.normal(nxt(), (hidden, 1), jnp.float32)
    p["ca_w2"] = 0.2 * jax.random.normal(nxt(), (C, hidden), jnp.float32)
    p["ca_b2"] = 0.1 * jax.random.normal(nxt(), (C, 1), jnp.float32)

    # CBAM spatial-attention 7x7 conv over [avg_c, max_c]: (2, 49), i.e.
    # torch weight (1, 2, 7, 7)[0].reshape(2, 49).
    p["sa_w"] = 0.1 * jax.random.normal(nxt(), (2, 49), jnp.float32)
    p["sa_b"] = 0.1 * jax.random.normal(nxt(), (1, 1), jnp.float32)

    # Final BatchNorm2d (eval mode), folded to per-channel scale/bias.
    gamma = 1.0 + 0.1 * jax.random.normal(nxt(), (C,), jnp.float32)
    beta = 0.1 * jax.random.normal(nxt(), (C,), jnp.float32)
    mean = 0.1 * jax.random.normal(nxt(), (C,), jnp.float32)
    var = 1.0 + 0.1 * jnp.abs(jax.random.normal(nxt(), (C,), jnp.float32))
    s = gamma / jnp.sqrt(var + eps)
    p["bn_scale"] = s.reshape(C, 1)
    p["bn_bias"] = (beta - mean * s).reshape(C, 1)

    # fc: (16C, N) with row index k = c*16 + (hp*4 + wp), which is exactly
    # the PyTorch (c, h, w) flatten order of the pooled NCHW tensor, i.e.
    # torch fc.weight.T.
    p["fc_w"] = 0.1 * jax.random.normal(nxt(), (4 * 4 * C, num_classes),
                                        jnp.float32)
    p["fc_b"] = 0.1 * jax.random.normal(nxt(), (1, num_classes), jnp.float32)
    return p


# --------------------------------- main ------------------------------------

if __name__ == "__main__":
    B, C, H, W = 2, 4, 8, 8          # fc in_features = C*4*4 implies 8x8 input
    num_classes = 10

    params = init_params(C=C, num_classes=num_classes)
    x = jax.random.normal(jax.random.PRNGKey(0), (B, C, H, W), jnp.float32)

    fwd = jax.jit(cbam_feature_mapping)
    logits = jax.block_until_ready(fwd(x, params))

    assert logits.shape == (B, num_classes)
    assert bool(jnp.all(jnp.isfinite(logits)))
    print("KERNEL_OK")
</pallas_src>

<mosaic_0001>
module attributes {stable_mosaic.version = 11 : i64} {
  func.func @kernel(%arg0: memref<4x128xf32, #tpu.memory_space<vmem>>, %arg1: memref<8x36xf32, #tpu.memory_space<vmem>>, %arg2: memref<8x1xf32, #tpu.memory_space<vmem>>, %arg3: memref<4x36xf32, #tpu.memory_space<vmem>>, %arg4: memref<4x1xf32, #tpu.memory_space<vmem>>, %arg5: memref<2x4xf32, #tpu.memory_space<vmem>>, %arg6: memref<2x1xf32, #tpu.memory_space<vmem>>, %arg7: memref<4x2xf32, #tpu.memory_space<vmem>>, %arg8: memref<4x1xf32, #tpu.memory_space<vmem>>, %arg9: memref<2x49xf32, #tpu.memory_space<vmem>>, %arg10: memref<1x1xf32, #tpu.memory_space<vmem>>, %arg11: memref<4x1xf32, #tpu.memory_space<vmem>>, %arg12: memref<4x1xf32, #tpu.memory_space<vmem>>, %arg13: memref<64x10xf32, #tpu.memory_space<vmem>>, %arg14: memref<1x10xf32, #tpu.memory_space<vmem>>, %arg15: memref<9x128xf32, #tpu.memory_space<vmem>>, %arg16: memref<49x128xf32, #tpu.memory_space<vmem>>, %arg17: memref<128x32xf32, #tpu.memory_space<vmem>>, %arg18: memref<2x10xf32, #tpu.memory_space<vmem>>, %arg19: memref<36x128xf32, #tpu.memory_space<vmem>>) attributes {dimension_semantics = [], scalar_prefetch = 0 : i64, scratch_operands = 1 : i64, tpu.core_type = #tpu.core_type<tc>} {
    %c0 = arith.constant 0 : index
    %c0_0 = arith.constant 0 : index
    %0 = vector.load %arg0[%c0, %c0_0] : memref<4x128xf32, #tpu.memory_space<vmem>>, vector<4x128xf32>
    %1 = vector.extract_strided_slice %0 {offsets = [0, 119], sizes = [4, 9], strides = [1, 1]} : vector<4x128xf32> to vector<4x9xf32>
    %2 = vector.extract_strided_slice %0 {offsets = [0, 0], sizes = [4, 119], strides = [1, 1]} : vector<4x128xf32> to vector<4x119xf32>
    %3 = tpu.concatenate %1, %2 in 1 : vector<4x9xf32>, vector<4x119xf32> -> vector<4x128xf32>
    %c0_1 = arith.constant 0 : index
    %c0_2 = arith.constant 0 : index
    %4 = vector.load %arg15[%c0_1, %c0_2] : memref<9x128xf32, #tpu.memory_space<vmem>>, vector<1x128xf32>
    %5 = vector.broadcast %4 : vector<1x128xf32> to vector<4x128xf32>
    %6 = arith.mulf %3, %5 : vector<4x128xf32>
    %c0_3 = arith.constant 0 : index
    %c0_4 = arith.constant 0 : index
    %7 = vector.load %arg19[%c0_3, %c0_4] : memref<36x128xf32, #tpu.memory_space<vmem>>, vector<4x128xf32>
    tpu.vector_store %arg19[%c0_3, %c0_4], %6 {strides = array<i32>} : memref<36x128xf32, #tpu.memory_space<vmem>>, vector<4x128xf32>,
    %8 = vector.extract_strided_slice %0 {offsets = [0, 120], sizes = [4, 8], strides = [1, 1]} : vector<4x128xf32> to vector<4x8xf32>
    %9 = vector.extract_strided_slice %0 {offsets = [0, 0], sizes = [4, 120], strides = [1, 1]} : vector<4x128xf32> to vector<4x120xf32>
    %10 = tpu.concatenate %8, %9 in 1 : vector<4x8xf32>, vector<4x120xf32> -> vector<4x128xf32>
    %c1 = arith.constant 1 : index
    %c0_5 = arith.constant 0 : index
    %11 = vector.load %arg15[%c1, %c0_5] : memref<9x128xf32, #tpu.memory_space<vmem>>, vector<1x128xf32>
    %12 = vector.broadcast %11 : vector<1x128xf32> to vector<4x128xf32>
    %13 = arith.mulf %10, %12 : vector<4x128xf32>
    %c4 = arith.constant 4 : index
    %c0_6 = arith.constant 0 : index
    %14 = vector.load %arg19[%c4, %c0_6] : memref<36x128xf32, #tpu.memory_space<vmem>>, vector<4x128xf32>
    tpu.vector_store %arg19[%c4, %c0_6], %13 {strides = array<i32>} : memref<36x128xf32, #tpu.memory_space<vmem>>, vector<4x128xf32>,
    %15 = vector.extract_strided_slice %0 {offsets = [0, 121], sizes = [4, 7], strides = [1, 1]} : vector<4x128xf32> to vector<4x7xf32>
    %16 = vector.extract_strided_slice %0 {offsets = [0, 0], sizes = [4, 121], strides = [1, 1]} : vector<4x128xf32> to vector<4x121xf32>
    %17 = tpu.concatenate %15, %16 in 1 : vector<4x7xf32>, vector<4x121xf32> -> vector<4x128xf32>
    %c2 = arith.constant 2 : index
    %c0_7 = arith.constant 0 : index
    %18 = vector.load %arg15[%c2, %c0_7] : memref<9x128xf32, #tpu.memory_space<vmem>>, vector<1x128xf32>
    %19 = vector.broadcast %18 : vector<1x128xf32> to vector<4x128xf32>
    %20 = arith.mulf %17, %19 : vector<4x128xf32>
    %c8 = arith.constant 8 : index
    %c0_8 = arith.constant 0 : index
    %21 = vector.load %arg19[%c8, %c0_8] : memref<36x128xf32, #tpu.memory_space<vmem>>, vector<4x128xf32>
    tpu.vector_store %arg19[%c8, %c0_8], %20 {strides = array<i32>} : memref<36x128xf32, #tpu.memory_space<vmem>>, vector<4x128xf32>,
    %22 = vector.extract_strided_slice %0 {offsets = [0, 127], sizes = [4, 1], strides = [1, 1]} : vector<4x128xf32> to vector<4x1xf32>
    %23 = vector.extract_strided_slice %0 {offsets = [0, 0], sizes = [4, 127], strides = [1, 1]} : vector<4x128xf32> to vector<4x127xf32>
    %24 = tpu.concatenate %22, %23 in 1 : vector<4x1xf32>, vector<4x127xf32> -> vector<4x128xf32>
    %c3 = arith.constant 3 : index
    %c0_9 = arith.constant 0 : index
    %25 = vector.load %arg15[%c3, %c0_9] : memref<9x128xf32, #tpu.memory_space<vmem>>, vector<1x128xf32>
    %26 = vector.broadcast %25 : vector<1x128xf32> to vector<4x128xf32>
    %27 = arith.mulf %24, %26 : vector<4x128xf32>
    %c12 = arith.constant 12 : index
    %c0_10 = arith.constant 0 : index
    %28 = vector.load %arg19[%c12, %c0_10] : memref<36x128xf32, #tpu.memory_space<vmem>>, vector<4x128xf32>
    tpu.vector_store %arg19[%c12, %c0_10], %27 {strides = array<i32>} : memref<36x128xf32, #tpu.memory_space<vmem>>, vector<4x128xf32>,
    %c16 = arith.constant 16 : index
    %c0_11 = arith.constant 0 : index
    %29 = vector.load %arg19[%c16, %c0_11] : memref<36x128xf32, #tpu.memory_space<vmem>>, vector<4x128xf32>
    tpu.vector_store %arg19[%c16, %c0_11], %0 {strides = array<i32>} : memref<36x128xf32, #tpu.memory_space<vmem>>, vector<4x128xf32>,
    %30 = vector.extract_strided_slice %0 {offsets = [0, 1], sizes = [4, 127], strides = [1, 1]} : vector<4x128xf32> to vector<4x127xf32>
    %31 = vector.extract_strided_slice %0 {offsets = [0, 0], sizes = [4, 1], strides = [1, 1]} : vector<4x128xf32> to vector<4x1xf32>
    %32 = tpu.concatenate %30, %31 in 1 : vector<4x127xf32>, vector<4x1xf32> -> vector<4x128xf32>
    %c5 = arith.constant 5 : index
    %c0_12 = arith.constant 0 : index
    %33 = vector.load %arg15[%c5, %c0_12] : memref<9x128xf32, #tpu.memory_space<vmem>>, vector<1x128xf32>
    %34 = vector.broadcast %33 : vector<1x128xf32> to vector<4x128xf32>
    %35 = arith.mulf %32, %34 : vector<4x128xf32>
    %c20 = arith.constant 20 : index
    %c0_13 = arith.constant 0 : index
    %36 = vector.load %arg19[%c20, %c0_13] : memref<36x128xf32, #tpu.memory_space<vmem>>, vector<4x128xf32>
    tpu.vector_store %arg19[%c20, %c0_13], %35 {strides = array<i32>} : memref<36x128xf32, #tpu.memory_space<vmem>>, vector<4x128xf32>,
    %37 = vector.extract_strided_slice %0 {offsets = [0, 7], sizes = [4, 121], strides = [1, 1]} : vector<4x128xf32> to vector<4x121xf32>
    %38 = vector.extract_strided_slice %0 {offsets = [0, 0], sizes = [4, 7], strides = [1, 1]} : vector<4x128xf32> to vector<4x7xf32>
    %39 = tpu.concatenate %37, %38 in 1 : vector<4x121xf32>, vector<4x7xf32> -> vector<4x128xf32>
    %c6 = arith.constant 6 : index
    %c0_14 = arith.constant 0 : index
    %40 = vector.load %arg15[%c6, %c0_14] : memref<9x128xf32, #tpu.memory_space<vmem>>, vector<1x128xf32>
    %41 = vector.broadcast %40 : vector<1x128xf32> to vector<4x128xf32>
    %42 = arith.mulf %39, %41 : vector<4x128xf32>
    %c24 = arith.constant 24 : index
    %c0_15 = arith.constant 0 : index
    %43 = vector.load %arg19[%c24, %c0_15] : memref<36x128xf32, #tpu.memory_space<vmem>>, vector<4x128xf32>
    tpu.vector_store %arg19[%c24, %c0_15], %42 {strides = array<i32>} : memref<36x128xf32, #tpu.memory_space<vmem>>, vector<4x128xf32>,
    %44 = vector.extract_strided_slice %0 {offsets = [0, 8], sizes = [4, 120], strides = [1, 1]} : vector<4x128xf32> to vector<4x120xf32>
    %45 = vector.extract_strided_slice %0 {offsets = [0, 0], sizes = [4, 8], strides = [1, 1]} : vector<4x128xf32> to vector<4x8xf32>
    %46 = tpu.concatenate %44, %45 in 1 : vector<4x120xf32>, vector<4x8xf32> -> vector<4x128xf32>
    %c7 = arith.constant 7 : index
    %c0_16 = arith.constant 0 : index
    %47 = vector.load %arg15[%c7, %c0_16] : memref<9x128xf32, #tpu.memory_space<vmem>>, vector<1x128xf32>
    %48 = vector.broadcast %47 : vector<1x128xf32> to vector<4x128xf32>
    %49 = arith.mulf %46, %48 : vector<4x128xf32>
    %c28 = arith.constant 28 : index
    %c0_17 = arith.constant 0 : index
    %50 = vector.load %arg19[%c28, %c0_17] : memref<36x128xf32, #tpu.memory_space<vmem>>, vector<4x128xf32>
    tpu.vector_store %arg19[%c28, %c0_17], %49 {strides = array<i32>} : memref<36x128xf32, #tpu.memory_space<vmem>>, vector<4x128xf32>,
    %51 = vector.extract_strided_slice %0 {offsets = [0, 9], sizes = [4, 119], strides = [1, 1]} : vector<4x128xf32> to vector<4x119xf32>
    %52 = vector.extract_strided_slice %0 {offsets = [0, 0], sizes = [4, 9], strides = [1, 1]} : vector<4x128xf32> to vector<4x9xf32>
    %53 = tpu.concatenate %51, %52 in 1 : vector<4x119xf32>, vector<4x9xf32> -> vector<4x128xf32>
    %c8_18 = arith.constant 8 : index
    %c0_19 = arith.constant 0 : index
    %54 = vector.load %arg15[%c8_18, %c0_19] : memref<9x128xf32, #tpu.memory_space<vmem>>, vector<1x128xf32>
    %55 = vector.broadcast %54 : vector<1x128xf32> to vector<4x128xf32>
    %56 = arith.mulf %53, %55 : vector<4x128xf32>
    %c32 = arith.constant 32 : index
    %c0_20 = arith.constant 0 : index
    %57 = vector.load %arg19[%c32, %c0_20] : memref<36x128xf32, #tpu.memory_space<vmem>>, vector<4x128xf32>
    tpu.vector_store %arg19[%c32, %c0_20], %56 {strides = array<i32>} : memref<36x128xf32, #tpu.memory_space<vmem>>, vector<4x128xf32>,
    %c0_21 = arith.constant 0 : index
    %c0_22 = arith.constant 0 : index
    %58 = vector.load %arg19[%c0_21, %c0_22] : memref<36x128xf32, #tpu.memory_space<vmem>>, vector<36x128xf32>
    %c0_23 = arith.constant 0 : index
    %c0_24 = arith.constant 0 : index
    %59 = vector.load %arg1[%c0_23, %c0_24] : memref<8x36xf32, #tpu.memory_space<vmem>>, vector<8x36xf32>
    %cst = arith.constant dense<0.000000e+00> : vector<8x128xf32>
    %60 = tpu.matmul %59, %58, %cst {dimension_numbers = #tpu.dot_dimension_numbers<[1], [0], [0], [1], [0, 0, 1, 1], [], []>} : vector<8x36xf32>, vector<36x128xf32>, vector<8x128xf32> -> vector<8x128xf32>
    %c0_25 = arith.constant 0 : index
    %c0_26 = arith.constant 0 : index
    %61 = vector.load %arg2[%c0_25, %c0_26] : memref<8x1xf32, #tpu.memory_space<vmem>>, vector<8x1xf32>
    %62 = vector.broadcast %61 : vector<8x1xf32> to vector<8x128xf32>
    %63 = arith.addf %60, %62 : vector<8x128xf32>
    %cst_27 = arith.constant 0.000000e+00 : f32
    %64 = vector.broadcast %cst_27 : f32 to vector<8x128xf32>
    %65 = arith.maximumf %63, %64 : vector<8x128xf32>
    %66 = vector.extract_strided_slice %65 {offsets = [0, 0], sizes = [4, 128], strides = [1, 1]} : vector<8x128xf32> to vector<4x128xf32>
    %67 = vector.extract_strided_slice %65 {offsets = [4, 0], sizes = [4, 128], strides = [1, 1]} : vector<8x128xf32> to vector<4x128xf32>
    %68 = vector.extract_strided_slice %66 {offsets = [0, 119], sizes = [4, 9], strides = [1, 1]} : vector<4x128xf32> to vector<4x9xf32>
    %69 = vector.extract_strided_slice %66 {offsets = [0, 0], sizes = [4, 119], strides = [1, 1]} : vector<4x128xf32> to vector<4x119xf32>
    %70 = tpu.concatenate %68, %69 in 1 : vector<4x9xf32>, vector<4x119xf32> -> vector<4x128xf32>
    %c0_28 = arith.constant 0 : index
    %c0_29 = arith.constant 0 : index
    %71 = vector.load %arg15[%c0_28, %c0_29] : memref<9x128xf32, #tpu.memory_space<vmem>>, vector<1x128xf32>
    %72 = vector.broadcast %71 : vector<1x128xf32> to vector<4x128xf32>
    %73 = arith.mulf %70, %72 : vector<4x128xf32>
    %c0_30 = arith.constant 0 : index
    %c0_31 = arith.constant 0 : index
    %74 = vector.load %arg19[%c0_30, %c0_31] : memref<36x128xf32, #tpu.memory_space<vmem>>, vector<4x128xf32>
    tpu.vector_store %arg19[%c0_30, %c0_31], %73 {strides = array<i32>} : memref<36x128xf32, #tpu.memory_space<vmem>>, vector<4x128xf32>,
    %75 = vector.extract_strided_slice %66 {offsets = [0, 120], sizes = [4, 8], strides = [1, 1]} : vector<4x128xf32> to vector<4x8xf32>
    %76 = vector.extract_strided_slice %66 {offsets = [0, 0], sizes = [4, 120], strides = [1, 1]} : vector<4x128xf32> to vector<4x120xf32>
    %77 = tpu.concatenate %75, %76 in 1 : vector<4x8xf32>, vector<4x120xf32> -> vector<4x128xf32>
    %c1_32 = arith.constant 1 : index
    %c0_33 = arith.constant 0 : index
    %78 = vector.load %arg15[%c1_32, %c0_33] : memref<9x128xf32, #tpu.memory_space<vmem>>, vector<1x128xf32>
    %79 = vector.broadcast %78 : vector<1x128xf32> to vector<4x128xf32>
    %80 = arith.mulf %77, %79 : vector<4x128xf32>
    %c4_34 = arith.constant 4 : index
    %c0_35 = arith.constant 0 : index
    %81 = vector.load %arg19[%c4_34, %c0_35] : memref<36x128xf32, #tpu.memory_space<vmem>>, vector<4x128xf32>
    tpu.vector_store %arg19[%c4_34, %c0_35], %80 {strides = array<i32>} : memref<36x128xf32, #tpu.memory_space<vmem>>, vector<4x128xf32>,
    %82 = vector.extract_strided_slice %66 {offsets = [0, 121], sizes = [4, 7], strides = [1, 1]} : vector<4x128xf32> to vector<4x7xf32>
    %83 = vector.extract_strided_slice %66 {offsets = [0, 0], sizes = [4, 121], strides = [1, 1]} : vector<4x128xf32> to vector<4x121xf32>
    %84 = tpu.concatenate %82, %83 in 1 : vector<4x7xf32>, vector<4x121xf32> -> vector<4x128xf32>
    %c2_36 = arith.constant 2 : index
    %c0_37 = arith.constant 0 : index
    %85 = vector.load %arg15[%c2_36, %c0_37] : memref<9x128xf32, #tpu.memory_space<vmem>>, vector<1x128xf32>
    %86 = vector.broadcast %85 : vector<1x128xf32> to vector<4x128xf32>
    %87 = arith.mulf %84, %86 : vector<4x128xf32>
    %c8_38 = arith.constant 8 : index
    %c0_39 = arith.constant 0 : index
    %88 = vector.load %arg19[%c8_38, %c0_39] : memref<36x128xf32, #tpu.memory_space<vmem>>, vector<4x128xf32>
    tpu.vector_store %arg19[%c8_38, %c0_39], %87 {strides = array<i32>} : memref<36x128xf32, #tpu.memory_space<vmem>>, vector<4x128xf32>,
    %89 = vector.extract_strided_slice %66 {offsets = [0, 127], sizes = [4, 1], strides = [1, 1]} : vector<4x128xf32> to vector<4x1xf32>
    %90 = vector.extract_strided_slice %66 {offsets = [0, 0], sizes = [4, 127], strides = [1, 1]} : vector<4x128xf32> to vector<4x127xf32>
    %91 = tpu.concatenate %89, %90 in 1 : vector<4x1xf32>, vector<4x127xf32> -> vector<4x128xf32>
    %c3_40 = arith.constant 3 : index
    %c0_41 = arith.constant 0 : index
    %92 = vector.load %arg15[%c3_40, %c0_41] : memref<9x128xf32, #tpu.memory_space<vmem>>, vector<1x128xf32>
    %93 = vector.broadcast %92 : vector<1x128xf32> to vector<4x128xf32>
    %94 = arith.mulf %91, %93 : vector<4x128xf32>
    %c12_42 = arith.constant 12 : index
    %c0_43 = arith.constant 0 : index
    %95 = vector.load %arg19[%c12_42, %c0_43] : memref<36x128xf32, #tpu.memory_space<vmem>>, vector<4x128xf32>
    tpu.vector_store %arg19[%c12_42, %c0_43], %94 {strides = array<i32>} : memref<36x128xf32, #tpu.memory_space<vmem>>, vector<4x128xf32>,
    %c16_44 = arith.constant 16 : index
    %c0_45 = arith.constant 0 : index
    %96 = vector.load %arg19[%c16_44, %c0_45] : memref<36x128xf32, #tpu.memory_space<vmem>>, vector<4x128xf32>
    tpu.vector_store %arg19[%c16_44, %c0_45], %66 {strides = array<i32>} : memref<36x128xf32, #tpu.memory_space<vmem>>, vector<4x128xf32>,
    %97 = vector.extract_strided_slice %66 {offsets = [0, 1], sizes = [4, 127], strides = [1, 1]} : vector<4x128xf32> to vector<4x127xf32>
    %98 = vector.extract_strided_slice %66 {offsets = [0, 0], sizes = [4, 1], strides = [1, 1]} : vector<4x128xf32> to vector<4x1xf32>
    %99 = tpu.concatenate %97, %98 in 1 : vector<4x127xf32>, vector<4x1xf32> -> vector<4x128xf32>
    %c5_46 = arith.constant 5 : index
    %c0_47 = arith.constant 0 : index
    %100 = vector.load %arg15[%c5_46, %c0_47] : memref<9x128xf32, #tpu.memory_space<vmem>>, vector<1x128xf32>
    %101 = vector.broadcast %100 : vector<1x128xf32> to vector<4x128xf32>
    %102 = arith.mulf %99, %101 : vector<4x128xf32>
    %c20_48 = arith.constant 20 : index
    %c0_49 = arith.constant 0 : index
    %103 = vector.load %arg19[%c20_48, %c0_49] : memref<36x128xf32, #tpu.memory_space<vmem>>, vector<4x128xf32>
    tpu.vector_store %arg19[%c20_48, %c0_49], %102 {strides = array<i32>} : memref<36x128xf32, #tpu.memory_space<vmem>>, vector<4x128xf32>,
    %104 = vector.extract_strided_slice %66 {offsets = [0, 7], sizes = [4, 121], strides = [1, 1]} : vector<4x128xf32> to vector<4x121xf32>
    %105 = vector.extract_strided_slice %66 {offsets = [0, 0], sizes = [4, 7], strides = [1, 1]} : vector<4x128xf32> to vector<4x7xf32>
    %106 = tpu.concatenate %104, %105 in 1 : vector<4x121xf32>, vector<4x7xf32> -> vector<4x128xf32>
    %c6_50 = arith.constant 6 : index
    %c0_51 = arith.constant 0 : index
    %107 = vector.load %arg15[%c6_50, %c0_51] : memref<9x128xf32, #tpu.memory_space<vmem>>, vector<1x128xf32>
    %108 = vector.broadcast %107 : vector<1x128xf32> to vector<4x128xf32>
    %109 = arith.mulf %106, %108 : vector<4x128xf32>
    %c24_52 = arith.constant 24 : index
    %c0_53 = arith.constant 0 : index
    %110 = vector.load %arg19[%c24_52, %c0_53] : memref<36x128xf32, #tpu.memory_space<vmem>>, vector<4x128xf32>
    tpu.vector_store %arg19[%c24_52, %c0_53], %109 {strides = array<i32>} : memref<36x128xf32, #tpu.memory_space<vmem>>, vector<4x128xf32>,
    %111 = vector.extract_strided_slice %66 {offsets = [0, 8], sizes = [4, 120], strides = [1, 1]} : vector<4x128xf32> to vector<4x120xf32>
    %112 = vector.extract_strided_slice %66 {offsets = [0, 0], sizes = [4, 8], strides = [1, 1]} : vector<4x128xf32> to vector<4x8xf32>
    %113 = tpu.concatenate %111, %112 in 1 : vector<4x120xf32>, vector<4x8xf32> -> vector<4x128xf32>
    %c7_54 = arith.constant 7 : index
    %c0_55 = arith.constant 0 : index
    %114 = vector.load %arg15[%c7_54, %c0_55] : memref<9x128xf32, #tpu.memory_space<vmem>>, vector<1x128xf32>
    %115 = vector.broadcast %114 : vector<1x128xf32> to vector<4x128xf32>
    %116 = arith.mulf %113, %115 : vector<4x128xf32>
    %c28_56 = arith.constant 28 : index
    %c0_57 = arith.constant 0 : index
    %117 = vector.load %arg19[%c28_56, %c0_57] : memref<36x128xf32, #tpu.memory_space<vmem>>, vector<4x128xf32>
    tpu.vector_store %arg19[%c28_56, %c0_57], %116 {strides = array<i32>} : memref<36x128xf32, #tpu.memory_space<vmem>>, vector<4x128xf32>,
    %118 = vector.extract_strided_slice %66 {offsets = [0, 9], sizes = [4, 119], strides = [1, 1]} : vector<4x128xf32> to vector<4x119xf32>
    %119 = vector.extract_strided_slice %66 {offsets = [0, 0], sizes = [4, 9], strides = [1, 1]} : vector<4x128xf32> to vector<4x9xf32>
    %120 = tpu.concatenate %118, %119 in 1 : vector<4x119xf32>, vector<4x9xf32> -> vector<4x128xf32>
    %c8_58 = arith.constant 8 : index
    %c0_59 = arith.constant 0 : index
    %121 = vector.load %arg15[%c8_58, %c0_59] : memref<9x128xf32, #tpu.memory_space<vmem>>, vector<1x128xf32>
    %122 = vector.broadcast %121 : vector<1x128xf32> to vector<4x128xf32>
    %123 = arith.mulf %120, %122 : vector<4x128xf32>
    %c32_60 = arith.constant 32 : index
    %c0_61 = arith.constant 0 : index
    %124 = vector.load %arg19[%c32_60, %c0_61] : memref<36x128xf32, #tpu.memory_space<vmem>>, vector<4x128xf32>
    tpu.vector_store %arg19[%c32_60, %c0_61], %123 {strides = array<i32>} : memref<36x128xf32, #tpu.memory_space<vmem>>, vector<4x128xf32>,
    %c0_62 = arith.constant 0 : index
    %c0_63 = arith.constant 0 : index
    %125 = vector.load %arg19[%c0_62, %c0_63] : memref<36x128xf32, #tpu.memory_space<vmem>>, vector<36x128xf32>
    %c0_64 = arith.constant 0 : index
    %c0_65 = arith.constant 0 : index
    %126 = vector.load %arg3[%c0_64, %c0_65] : memref<4x36xf32, #tpu.memory_space<vmem>>, vector<4x36xf32>
    %cst_66 = arith.constant dense<0.000000e+00> : vector<4x128xf32>
    %127 = tpu.matmul %126, %125, %cst_66 {dimension_numbers = #tpu.dot_dimension_numbers<[1], [0], [0], [1], [0, 0, 1, 1], [], []>} : vector<4x36xf32>, vector<36x128xf32>, vector<4x128xf32> -> vector<4x128xf32>
    %c0_67 = arith.constant 0 : index
    %c0_68 = arith.constant 0 : index
    %128 = vector.load %arg4[%c0_67, %c0_68] : memref<4x1xf32, #tpu.memory_space<vmem>>, vector<4x1xf32>
    %129 = vector.broadcast %128 : vector<4x1xf32> to vector<4x128xf32>
    %130 = arith.addf %127, %129 : vector<4x128xf32>
    %cst_69 = arith.constant 0.000000e+00 : f32
    %131 = vector.broadcast %cst_69 : f32 to vector<4x128xf32>
    %132 = arith.maximumf %130, %131 : vector<4x128xf32>
    %133 = arith.addf %132, %67 : vector<4x128xf32>
    %134 = vector.extract_strided_slice %133 {offsets = [0, 0], sizes = [4, 64], strides = [1, 1]} : vector<4x128xf32> to vector<4x64xf32>
    %cst_70 = arith.constant dense<0.000000e+00> : vector<4xf32>
    %135 = vector.multi_reduction <add>, %134, %cst_70 [1] : vector<4x64xf32> to vector<4xf32>
    %136 = vector.shape_cast %135 : vector<4xf32> to vector<4x1xf32>
    %cst_71 = arith.constant 6.400000e+01 : f32
    %137 = vector.broadcast %cst_71 : f32 to vector<4x1xf32>
    %138 = arith.divf %136, %137 : vector<4x1xf32>
    %139 = vector.extract_strided_slice %133 {offsets = [0, 64], sizes = [4, 64], strides = [1, 1]} : vector<4x128xf32> to vector<4x64xf32>
    %cst_72 = arith.constant dense<0.000000e+00> : vector<4xf32>
    %140 = vector.multi_reduction <add>, %139, %cst_72 [1] : vector<4x64xf32> to vector<4xf32>
    %141 = vector.shape_cast %140 : vector<4xf32> to vector<4x1xf32>
    %cst_73 = arith.constant 6.400000e+01 : f32
    %142 = vector.broadcast %cst_73 : f32 to vector<4x1xf32>
    %143 = arith.divf %141, %142 : vector<4x1xf32>
    %144 = vector.extract_strided_slice %133 {offsets = [0, 0], sizes = [4, 64], strides = [1, 1]} : vector<4x128xf32> to vector<4x64xf32>
    %cst_74 = arith.constant dense<0xFF800000> : vector<4xf32>
    %145 = vector.multi_reduction <maximumf>, %144, %cst_74 [1] : vector<4x64xf32> to vector<4xf32>
    %146 = vector.shape_cast %145 : vector<4xf32> to vector<4x1xf32>
    %147 = vector.extract_strided_slice %133 {offsets = [0, 64], sizes = [4, 64], strides = [1, 1]} : vector<4x128xf32> to vector<4x64xf32>
    %cst_75 = arith.constant dense<0xFF800000> : vector<4xf32>
    %148 = vector.multi_reduction <maximumf>, %147, %cst_75 [1] : vector<4x64xf32> to vector<4xf32>
    %149 = vector.shape_cast %148 : vector<4xf32> to vector<4x1xf32>
    %150 = tpu.concatenate %138, %143, %146, %149 in 1 : vector<4x1xf32>, vector<4x1xf32>, vector<4x1xf32>, vector<4x1xf32> -> vector<4x4xf32>
    %c0_76 = arith.constant 0 : index
    %c0_77 = arith.constant 0 : index
    %151 = vector.load %arg5[%c0_76, %c0_77] : memref<2x4xf32, #tpu.memory_space<vmem>>, vector<2x4xf32>
    %cst_78 = arith.constant dense<0.000000e+00> : vector<2x4xf32>
    %152 = tpu.matmul %151, %150, %cst_78 {dimension_numbers = #tpu.dot_dimension_numbers<[1], [0], [0], [1], [0, 0, 1, 1], [], []>} : vector<2x4xf32>, vector<4x4xf32>, vector<2x4xf32> -> vector<2x4xf32>
    %c0_79 = arith.constant 0 : index
    %c0_80 = arith.constant 0 : index
    %153 = vector.load %arg6[%c0_79, %c0_80] : memref<2x1xf32, #tpu.memory_space<vmem>>, vector<2x1xf32>
    %154 = vector.broadcast %153 : vector<2x1xf32> to vector<2x4xf32>
    %155 = arith.addf %152, %154 : vector<2x4xf32>
    %cst_81 = arith.constant 0.000000e+00 : f32
    %156 = vector.broadcast %cst_81 : f32 to vector<2x4xf32>
    %157 = arith.maximumf %155, %156 : vector<2x4xf32>
    %c0_82 = arith.constant 0 : index
    %c0_83 = arith.constant 0 : index
    %158 = vector.load %arg7[%c0_82, %c0_83] : memref<4x2xf32, #tpu.memory_space<vmem>>, vector<4x2xf32>
    %cst_84 = arith.constant dense<0.000000e+00> : vector<4x4xf32>
    %159 = tpu.matmul %158, %157, %cst_84 {dimension_numbers = #tpu.dot_dimension_numbers<[1], [0], [0], [1], [0, 0, 1, 1], [], []>} : vector<4x2xf32>, vector<2x4xf32>, vector<4x4xf32> -> vector<4x4xf32>
    %c0_85 = arith.constant 0 : index
    %c0_86 = arith.constant 0 : index
    %160 = vector.load %arg8[%c0_85, %c0_86] : memref<4x1xf32, #tpu.memory_space<vmem>>, vector<4x1xf32>
    %161 = vector.broadcast %160 : vector<4x1xf32> to vector<4x4xf32>
    %162 = arith.addf %159, %161 : vector<4x4xf32>
    %163 = vector.extract_strided_slice %162 {offsets = [0, 0], sizes = [4, 2], strides = [1, 1]} : vector<4x4xf32> to vector<4x2xf32>
    %164 = vector.extract_strided_slice %162 {offsets = [0, 2], sizes = [4, 2], strides = [1, 1]} : vector<4x4xf32> to vector<4x2xf32>
    %165 = arith.addf %163, %164 : vector<4x2xf32>
    %166 = math.absf %165 : vector<4x2xf32>
    %cst_87 = arith.constant 0.000000e+00 : f32
    %167 = vector.broadcast %cst_87 : f32 to vector<4x2xf32>
    %168 = arith.subf %167, %166 : vector<4x2xf32>
    %169 = math.exp %168 : vector<4x2xf32>
    %cst_88 = arith.constant 0.000000e+00 : f32
    %170 = vector.broadcast %cst_88 : f32 to vector<4x2xf32>
    %171 = arith.cmpf oge, %165, %170 : vector<4x2xf32>
    %cst_89 = arith.constant 1.000000e+00 : f32
    %172 = vector.broadcast %cst_89 : f32 to vector<4x2xf32>
    %173 = arith.addf %172, %169 : vector<4x2xf32>
    %cst_90 = arith.constant 1.000000e+00 : f32
    %174 = vector.broadcast %cst_90 : f32 to vector<4x2xf32>
    %175 = arith.divf %174, %173 : vector<4x2xf32>
    %cst_91 = arith.constant 1.000000e+00 : f32
    %176 = vector.broadcast %cst_91 : f32 to vector<4x2xf32>
    %177 = arith.addf %176, %169 : vector<4x2xf32>
    %178 = arith.divf %169, %177 : vector<4x2xf32>
    %179 = arith.select %171, %175, %178 : vector<4x2xi1>, vector<4x2xf32>
    %180 = vector.extract_strided_slice %133 {offsets = [0, 0], sizes = [4, 64], strides = [1, 1]} : vector<4x128xf32> to vector<4x64xf32>
    %181 = vector.extract_strided_slice %179 {offsets = [0, 0], sizes = [4, 1], strides = [1, 1]} : vector<4x2xf32> to vector<4x1xf32>
    %182 = vector.broadcast %181 : vector<4x1xf32> to vector<4x64xf32>
    %183 = arith.mulf %180, %182 : vector<4x64xf32>
    %184 = vector.extract_strided_slice %133 {offsets = [0, 64], sizes = [4, 64], strides = [1, 1]} : vector<4x128xf32> to vector<4x64xf32>
    %185 = vector.extract_strided_slice %179 {offsets = [0, 1], sizes = [4, 1], strides = [1, 1]} : vector<4x2xf32> to vector<4x1xf32>
    %186 = vector.broadcast %185 : vector<4x1xf32> to vector<4x64xf32>
    %187 = arith.mulf %184, %186 : vector<4x64xf32>
    %188 = tpu.concatenate %183, %187 in 1 : vector<4x64xf32>, vector<4x64xf32> -> vector<4x128xf32>
    %cst_92 = arith.constant dense<0.000000e+00> : vector<128xf32>
    %189 = vector.multi_reduction <add>, %188, %cst_92 [0] : vector<4x128xf32> to vector<128xf32>
    %190 = vector.shape_cast %189 : vector<128xf32> to vector<1x128xf32>
    %cst_93 = arith.constant 4.000000e+00 : f32
    %191 = vector.broadcast %cst_93 : f32 to vector<1x128xf32>
    %192 = arith.divf %190, %191 : vector<1x128xf32>
    %cst_94 = arith.constant dense<0xFF800000> : vector<128xf32>
    %193 = vector.multi_reduction <maximumf>, %188, %cst_94 [0] : vector<4x128xf32> to vector<128xf32>
    %194 = vector.shape_cast %193 : vector<128xf32> to vector<1x128xf32>
    %195 = tpu.concatenate %192, %194 in 0 : vector<1x128xf32>, vector<1x128xf32> -> vector<2x128xf32>
    %c0_95 = arith.constant 0 : index
    %c0_96 = arith.constant 0 : index
    %196 = vector.load %arg9[%c0_95, %c0_96] : memref<2x49xf32, #tpu.memory_space<vmem>>, vector<2x49xf32>
    %cst_97 = arith.constant 0.000000e+00 : f32
    %197 = vector.broadcast %cst_97 : f32 to vector<2x128xf32>
    %198 = vector.extract_strided_slice %195 {offsets = [0, 101], sizes = [2, 27], strides = [1, 1]} : vector<2x128xf32> to vector<2x27xf32>
    %199 = vector.extract_strided_slice %195 {offsets = [0, 0], sizes = [2, 101], strides = [1, 1]} : vector<2x128xf32> to vector<2x101xf32>
    %200 = tpu.concatenate %198, %199 in 1 : vector<2x27xf32>, vector<2x101xf32> -> vector<2x128xf32>
    %c0_98 = arith.constant 0 : index
    %c0_99 = arith.constant 0 : index
    %201 = vector.load %arg16[%c0_98, %c0_99] : memref<49x128xf32, #tpu.memory_space<vmem>>, vector<1x128xf32>
    %202 = vector.broadcast %201 : vector<1x128xf32> to vector<2x128xf32>
    %203 = arith.mulf %200, %202 : vector<2x128xf32>
    %204 = vector.extract_strided_slice %196 {offsets = [0, 0], sizes = [2, 1], strides = [1, 1]} : vector<2x49xf32> to vector<2x1xf32>
    %205 = vector.broadcast %204 : vector<2x1xf32> to vector<2x128xf32>
    %206 = arith.mulf %203, %205 : vector<2x128xf32>
    %207 = arith.addf %197, %206 : vector<2x128xf32>
    %208 = vector.extract_strided_slice %195 {offsets = [0, 102], sizes = [2, 26], strides = [1, 1]} : vector<2x128xf32> to vector<2x26xf32>
    %209 = vector.extract_strided_slice %195 {offsets = [0, 0], sizes = [2, 102], strides = [1, 1]} : vector<2x128xf32> to vector<2x102xf32>
    %210 = tpu.concatenate %208, %209 in 1 : vector<2x26xf32>, vector<2x102xf32> -> vector<2x128xf32>
    %c1_100 = arith.constant 1 : index
    %c0_101 = arith.constant 0 : index
    %211 = vector.load %arg16[%c1_100, %c0_101] : memref<49x128xf32, #tpu.memory_space<vmem>>, vector<1x128xf32>
    %212 = vector.broadcast %211 : vector<1x128xf32> to vector<2x128xf32>
    %213 = arith.mulf %210, %212 : vector<2x128xf32>
    %214 = vector.extract_strided_slice %196 {offsets = [0, 1], sizes = [2, 1], strides = [1, 1]} : vector<2x49xf32> to vector<2x1xf32>
    %215 = vector.broadcast %214 : vector<2x1xf32> to vector<2x128xf32>
    %216 = arith.mulf %213, %215 : vector<2x128xf32>
    %217 = arith.addf %207, %216 : vector<2x128xf32>
    %218 = vector.extract_strided_slice %195 {offsets = [0, 103], sizes = [2, 25], strides = [1, 1]} : vector<2x128xf32> to vector<2x25xf32>
    %219 = vector.extract_strided_slice %195 {offsets = [0, 0], sizes = [2, 103], strides = [1, 1]} : vector<2x128xf32> to vector<2x103xf32>
    %220 = tpu.concatenate %218, %219 in 1 : vector<2x25xf32>, vector<2x103xf32> -> vector<2x128xf32>
    %c2_102 = arith.constant 2 : index
    %c0_103 = arith.constant 0 : index
    %221 = vector.load %arg16[%c2_102, %c0_103] : memref<49x128xf32, #tpu.memory_space<vmem>>, vector<1x128xf32>
    %222 = vector.broadcast %221 : vector<1x128xf32> to vector<2x128xf32>
    %223 = arith.mulf %220, %222 : vector<2x128xf32>
    %224 = vector.extract_strided_slice %196 {offsets = [0, 2], sizes = [2, 1], strides = [1, 1]} : vector<2x49xf32> to vector<2x1xf32>
    %225 = vector.broadcast %224 : vector<2x1xf32> to vector<2x128xf32>
    %226 = arith.mulf %223, %225 : vector<2x128xf32>
    %227 = arith.addf %217, %226 : vector<2x128xf32>
    %228 = vector.extract_strided_slice %195 {offsets = [0, 104], sizes = [2, 24], strides = [1, 1]} : vector<2x128xf32> to vector<2x24xf32>
    %229 = vector.extract_strided_slice %195 {offsets = [0, 0], sizes = [2, 104], strides = [1, 1]} : vector<2x128xf32> to vector<2x104xf32>
    %230 = tpu.concatenate %228, %229 in 1 : vector<2x24xf32>, vector<2x104xf32> -> vector<2x128xf32>
    %c3_104 = arith.constant 3 : index
    %c0_105 = arith.constant 0 : index
    %231 = vector.load %arg16[%c3_104, %c0_105] : memref<49x128xf32, #tpu.memory_space<vmem>>, vector<1x128xf32>
    %232 = vector.broadcast %231 : vector<1x128xf32> to vector<2x128xf32>
    %233 = arith.mulf %230, %232 : vector<2x128xf32>
    %234 = vector.extract_strided_slice %196 {offsets = [0, 3], sizes = [2, 1], strides = [1, 1]} : vector<2x49xf32> to vector<2x1xf32>
    %235 = vector.broadcast %234 : vector<2x1xf32> to vector<2x128xf32>
    %236 = arith.mulf %233, %235 : vector<2x128xf32>
    %237 = arith.addf %227, %236 : vector<2x128xf32>
    %238 = vector.extract_strided_slice %195 {offsets = [0, 105], sizes = [2, 23], strides = [1, 1]} : vector<2x128xf32> to vector<2x23xf32>
    %239 = vector.extract_strided_slice %195 {offsets = [0, 0], sizes = [2, 105], strides = [1, 1]} : vector<2x128xf32> to vector<2x105xf32>
    %240 = tpu.concatenate %238, %239 in 1 : vector<2x23xf32>, vector<2x105xf32> -> vector<2x128xf32>
    %c4_106 = arith.constant 4 : index
    %c0_107 = arith.constant 0 : index
    %241 = vector.load %arg16[%c4_106, %c0_107] : memref<49x128xf32, #tpu.memory_space<vmem>>, vector<1x128xf32>
    %242 = vector.broadcast %241 : vector<1x128xf32> to vector<2x128xf32>
    %243 = arith.mulf %240, %242 : vector<2x128xf32>
    %244 = vector.extract_strided_slice %196 {offsets = [0, 4], sizes = [2, 1], strides = [1, 1]} : vector<2x49xf32> to vector<2x1xf32>
    %245 = vector.broadcast %244 : vector<2x1xf32> to vector<2x128xf32>
    %246 = arith.mulf %243, %245 : vector<2x128xf32>
    %247 = arith.addf %237, %246 : vector<2x128xf32>
    %248 = vector.extract_strided_slice %195 {offsets = [0, 106], sizes = [2, 22], strides = [1, 1]} : vector<2x128xf32> to vector<2x22xf32>
    %249 = vector.extract_strided_slice %195 {offsets = [0, 0], sizes = [2, 106], strides = [1, 1]} : vector<2x128xf32> to vector<2x106xf32>
    %250 = tpu.concatenate %248, %249 in 1 : vector<2x22xf32>, vector<2x106xf32> -> vector<2x128xf32>
    %c5_108 = arith.constant 5 : index
    %c0_109 = arith.constant 0 : index
    %251 = vector.load %arg16[%c5_108, %c0_109] : memref<49x128xf32, #tpu.memory_space<vmem>>, vector<1x128xf32>
    %252 = vector.broadcast %251 : vector<1x128xf32> to vector<2x128xf32>
    %253 = arith.mulf %250, %252 : vector<2x128xf32>
    %254 = vector.extract_strided_slice %196 {offsets = [0, 5], sizes = [2, 1], strides = [1, 1]} : vector<2x49xf32> to vector<2x1xf32>
    %255 = vector.broadcast %254 : vector<2x1xf32> to vector<2x128xf32>
    %256 = arith.mulf %253, %255 : vector<2x128xf32>
    %257 = arith.addf %247, %256 : vector<2x128xf32>
    %258 = vector.extract_strided_slice %195 {offsets = [0, 107], sizes = [2, 21], strides = [1, 1]} : vector<2x128xf32> to vector<2x21xf32>
    %259 = vector.extract_strided_slice %195 {offsets = [0, 0], sizes = [2, 107], strides = [1, 1]} : vector<2x128xf32> to vector<2x107xf32>
    %260 = tpu.concatenate %258, %259 in 1 : vector<2x21xf32>, vector<2x107xf32> -> vector<2x128xf32>
    %c6_110 = arith.constant 6 : index
    %c0_111 = arith.constant 0 : index
    %261 = vector.load %arg16[%c6_110, %c0_111] : memref<49x128xf32, #tpu.memory_space<vmem>>, vector<1x128xf32>
    %262 = vector.broadcast %261 : vector<1x128xf32> to vector<2x128xf32>
    %263 = arith.mulf %260, %262 : vector<2x128xf32>
    %264 = vector.extract_strided_slice %196 {offsets = [0, 6], sizes = [2, 1], strides = [1, 1]} : vector<2x49xf32> to vector<2x1xf32>
    %265 = vector.broadcast %264 : vector<2x1xf32> to vector<2x128xf32>
    %266 = arith.mulf %263, %265 : vector<2x128xf32>
    %267 = arith.addf %257, %266 : vector<2x128xf32>
    %268 = vector.extract_strided_slice %195 {offsets = [0, 109], sizes = [2, 19], strides = [1, 1]} : vector<2x128xf32> to vector<2x19xf32>
    %269 = vector.extract_strided_slice %195 {offsets = [0, 0], sizes = [2, 109], strides = [1, 1]} : vector<2x128xf32> to vector<2x109xf32>
    %270 = tpu.concatenate %268, %269 in 1 : vector<2x19xf32>, vector<2x109xf32> -> vector<2x128xf32>
    %c7_112 = arith.constant 7 : index
    %c0_113 = arith.constant 0 : index
    %271 = vector.load %arg16[%c7_112, %c0_113] : memref<49x128xf32, #tpu.memory_space<vmem>>, vector<1x128xf32>
    %272 = vector.broadcast %271 : vector<1x128xf32> to vector<2x128xf32>
    %273 = arith.mulf %270, %272 : vector<2x128xf32>
    %274 = vector.extract_strided_slice %196 {offsets = [0, 7], sizes = [2, 1], strides = [1, 1]} : vector<2x49xf32> to vector<2x1xf32>
    %275 = vector.broadcast %274 : vector<2x1xf32> to vector<2x128xf32>
    %276 = arith.mulf %273, %275 : vector<2x128xf32>
    %277 = arith.addf %267, %276 : vector<2x128xf32>
    %278 = vector.extract_strided_slice %195 {offsets = [0, 110], sizes = [2, 18], strides = [1, 1]} : vector<2x128xf32> to vector<2x18xf32>
    %279 = vector.extract_strided_slice %195 {offsets = [0, 0], sizes = [2, 110], strides = [1, 1]} : vector<2x128xf32> to vector<2x110xf32>
    %280 = tpu.concatenate %278, %279 in 1 : vector<2x18xf32>, vector<2x110xf32> -> vector<2x128xf32>
    %c8_114 = arith.constant 8 : index
    %c0_115 = arith.constant 0 : index
    %281 = vector.load %arg16[%c8_114, %c0_115] : memref<49x128xf32, #tpu.memory_space<vmem>>, vector<1x128xf32>
    %282 = vector.broadcast %281 : vector<1x128xf32> to vector<2x128xf32>
    %283 = arith.mulf %280, %282 : vector<2x128xf32>
    %284 = vector.extract_strided_slice %196 {offsets = [0, 8], sizes = [2, 1], strides = [1, 1]} : vector<2x49xf32> to vector<2x1xf32>
    %285 = vector.broadcast %284 : vector<2x1xf32> to vector<2x128xf32>
    %286 = arith.mulf %283, %285 : vector<2x128xf32>
    %287 = arith.addf %277, %286 : vector<2x128xf32>
    %288 = vector.extract_strided_slice %195 {offsets = [0, 111], sizes = [2, 17], strides = [1, 1]} : vector<2x128xf32> to vector<2x17xf32>
    %289 = vector.extract_strided_slice %195 {offsets = [0, 0], sizes = [2, 111], strides = [1, 1]} : vector<2x128xf32> to vector<2x111xf32>
    %290 = tpu.concatenate %288, %289 in 1 : vector<2x17xf32>, vector<2x111xf32> -> vector<2x128xf32>
    %c9 = arith.constant 9 : index
    %c0_116 = arith.constant 0 : index
    %291 = vector.load %arg16[%c9, %c0_116] : memref<49x128xf32, #tpu.memory_space<vmem>>, vector<1x128xf32>
    %292 = vector.broadcast %291 : vector<1x128xf32> to vector<2x128xf32>
    %293 = arith.mulf %290, %292 : vector<2x128xf32>
    %294 = vector.extract_strided_slice %196 {offsets = [0, 9], sizes = [2, 1], strides = [1, 1]} : vector<2x49xf32> to vector<2x1xf32>
    %295 = vector.broadcast %294 : vector<2x1xf32> to vector<2x128xf32>
    %296 = arith.mulf %293, %295 : vector<2x128xf32>
    %297 = arith.addf %287, %296 : vector<2x128xf32>
    %298 = vector.extract_strided_slice %195 {offsets = [0, 112], sizes = [2, 16], strides = [1, 1]} : vector<2x128xf32> to vector<2x16xf32>
    %299 = vector.extract_strided_slice %195 {offsets = [0, 0], sizes = [2, 112], strides = [1, 1]} : vector<2x128xf32> to vector<2x112xf32>
    %300 = tpu.concatenate %298, %299 in 1 : vector<2x16xf32>, vector<2x112xf32> -> vector<2x128xf32>
    %c10 = arith.constant 10 : index
    %c0_117 = arith.constant 0 : index
    %301 = vector.load %arg16[%c10, %c0_117] : memref<49x128xf32, #tpu.memory_space<vmem>>, vector<1x128xf32>
    %302 = vector.broadcast %301 : vector<1x128xf32> to vector<2x128xf32>
    %303 = arith.mulf %300, %302 : vector<2x128xf32>
    %304 = vector.extract_strided_slice %196 {offsets = [0, 10], sizes = [2, 1], strides = [1, 1]} : vector<2x49xf32> to vector<2x1xf32>
    %305 = vector.broadcast %304 : vector<2x1xf32> to vector<2x128xf32>
    %306 = arith.mulf %303, %305 : vector<2x128xf32>
    %307 = arith.addf %297, %306 : vector<2x128xf32>
    %308 = vector.extract_strided_slice %195 {offsets = [0, 113], sizes = [2, 15], strides = [1, 1]} : vector<2x128xf32> to vector<2x15xf32>
    %309 = vector.extract_strided_slice %195 {offsets = [0, 0], sizes = [2, 113], strides = [1, 1]} : vector<2x128xf32> to vector<2x113xf32>
    %310 = tpu.concatenate %308, %309 in 1 : vector<2x15xf32>, vector<2x113xf32> -> vector<2x128xf32>
    %c11 = arith.constant 11 : index
    %c0_118 = arith.constant 0 : index
    %311 = vector.load %arg16[%c11, %c0_118] : memref<49x128xf32, #tpu.memory_space<vmem>>, vector<1x128xf32>
    %312 = vector.broadcast %311 : vector<1x128xf32> to vector<2x128xf32>
    %313 = arith.mulf %310, %312 : vector<2x128xf32>
    %314 = vector.extract_strided_slice %196 {offsets = [0, 11], sizes = [2, 1], strides = [1, 1]} : vector<2x49xf32> to vector<2x1xf32>
    %315 = vector.broadcast %314 : vector<2x1xf32> to vector<2x128xf32>
    %316 = arith.mulf %313, %315 : vector<2x128xf32>
    %317 = arith.addf %307, %316 : vector<2x128xf32>
    %318 = vector.extract_strided_slice %195 {offsets = [0, 114], sizes = [2, 14], strides = [1, 1]} : vector<2x128xf32> to vector<2x14xf32>
    %319 = vector.extract_strided_slice %195 {offsets = [0, 0], sizes = [2, 114], strides = [1, 1]} : vector<2x128xf32> to vector<2x114xf32>
    %320 = tpu.concatenate %318, %319 in 1 : vector<2x14xf32>, vector<2x114xf32> -> vector<2x128xf32>
    %c12_119 = arith.constant 12 : index
    %c0_120 = arith.constant 0 : index
    %321 = vector.load %arg16[%c12_119, %c0_120] : memref<49x128xf32, #tpu.memory_space<vmem>>, vector<1x128xf32>
    %322 = vector.broadcast %321 : vector<1x128xf32> to vector<2x128xf32>
    %323 = arith.mulf %320, %322 : vector<2x128xf32>
    %324 = vector.extract_strided_slice %196 {offsets = [0, 12], sizes = [2, 1], strides = [1, 1]} : vector<2x49xf32> to vector<2x1xf32>
    %325 = vector.broadcast %324 : vector<2x1xf32> to vector<2x128xf32>
    %326 = arith.mulf %323, %325 : vector<2x128xf32>
    %327 = arith.addf %317, %326 : vector<2x128xf32>
    %328 = vector.extract_strided_slice %195 {offsets = [0, 115], sizes = [2, 13], strides = [1, 1]} : vector<2x128xf32> to vector<2x13xf32>
    %329 = vector.extract_strided_slice %195 {offsets = [0, 0], sizes = [2, 115], strides = [1, 1]} : vector<2x128xf32> to vector<2x115xf32>
    %330 = tpu.concatenate %328, %329 in 1 : vector<2x13xf32>, vector<2x115xf32> -> vector<2x128xf32>
    %c13 = arith.constant 13 : index
    %c0_121 = arith.constant 0 : index
    %331 = vector.load %arg16[%c13, %c0_121] : memref<49x128xf32, #tpu.memory_space<vmem>>, vector<1x128xf32>
    %332 = vector.broadcast %331 : vector<1x128xf32> to vector<2x128xf32>
    %333 = arith.mulf %330, %332 : vector<2x128xf32>
    %334 = vector.extract_strided_slice %196 {offsets = [0, 13], sizes = [2, 1], strides = [1, 1]} : vector<2x49xf32> to vector<2x1xf32>
    %335 = vector.broadcast %334 : vector<2x1xf32> to vector<2x128xf32>
    %336 = arith.mulf %333, %335 : vector<2x128xf32>
    %337 = arith.addf %327, %336 : vector<2x128xf32>
    %338 = vector.extract_strided_slice %195 {offsets = [0, 117], sizes = [2, 11], strides = [1, 1]} : vector<2x128xf32> to vector<2x11xf32>
    %339 = vector.extract_strided_slice %195 {offsets = [0, 0], sizes = [2, 117], strides = [1, 1]} : vector<2x128xf32> to vector<2x117xf32>
    %340 = tpu.concatenate %338, %339 in 1 : vector<2x11xf32>, vector<2x117xf32> -> vector<2x128xf32>
    %c14 = arith.constant 14 : index
    %c0_122 = arith.constant 0 : index
    %341 = vector.load %arg16[%c14, %c0_122] : memref<49x128xf32, #tpu.memory_space<vmem>>, vector<1x128xf32>
    %342 = vector.broadcast %341 : vector<1x128xf32> to vector<2x128xf32>
    %343 = arith.mulf %340, %342 : vector<2x128xf32>
    %344 = vector.extract_strided_slice %196 {offsets = [0, 14], sizes = [2, 1], strides = [1, 1]} : vector<2x49xf32> to vector<2x1xf32>
    %345 = vector.broadcast %344 : vector<2x1xf32> to vector<2x128xf32>
    %346 = arith.mulf %343, %345 : vector<2x128xf32>
    %347 = arith.addf %337, %346 : vector<2x128xf32>
    %348 = vector.extract_strided_slice %195 {offsets = [0, 118], sizes = [2, 10], strides = [1, 1]} : vector<2x128xf32> to vector<2x10xf32>
    %349 = vector.extract_strided_slice %195 {offsets = [0, 0], sizes = [2, 118], strides = [1, 1]} : vector<2x128xf32> to vector<2x118xf32>
    %350 = tpu.concatenate %348, %349 in 1 : vector<2x10xf32>, vector<2x118xf32> -> vector<2x128xf32>
    %c15 = arith.constant 15 : index
    %c0_123 = arith.constant 0 : index
    %351 = vector.load %arg16[%c15, %c0_123] : memref<49x128xf32, #tpu.memory_space<vmem>>, vector<1x128xf32>
    %352 = vector.broadcast %351 : vector<1x128xf32> to vector<2x128xf32>
    %353 = arith.mulf %350, %352 : vector<2x128xf32>
    %354 = vector.extract_strided_slice %196 {offsets = [0, 15], sizes = [2, 1], strides = [1, 1]} : vector<2x49xf32> to vector<2x1xf32>
    %355 = vector.broadcast %354 : vector<2x1xf32> to vector<2x128xf32>
    %356 = arith.mulf %353, %355 : vector<2x128xf32>
    %357 = arith.addf %347, %356 : vector<2x128xf32>
    %358 = vector.extract_strided_slice %195 {offsets = [0, 119], sizes = [2, 9], strides = [1, 1]} : vector<2x128xf32> to vector<2x9xf32>
    %359 = vector.extract_strided_slice %195 {offsets = [0, 0], sizes = [2, 119], strides = [1, 1]} : vector<2x128xf32> to vector<2x119xf32>
    %360 = tpu.concatenate %358, %359 in 1 : vector<2x9xf32>, vector<2x119xf32> -> vector<2x128xf32>
    %c16_124 = arith.constant 16 : index
    %c0_125 = arith.constant 0 : index
    %361 = vector.load %arg16[%c16_124, %c0_125] : memref<49x128xf32, #tpu.memory_space<vmem>>, vector<1x128xf32>
    %362 = vector.broadcast %361 : vector<1x128xf32> to vector<2x128xf32>
    %363 = arith.mulf %360, %362 : vector<2x128xf32>
    %364 = vector.extract_strided_slice %196 {offsets = [0, 16], sizes = [2, 1], strides = [1, 1]} : vector<2x49xf32> to vector<2x1xf32>
    %365 = vector.broadcast %364 : vector<2x1xf32> to vector<2x128xf32>
    %366 = arith.mulf %363, %365 : vector<2x128xf32>
    %367 = arith.addf %357, %366 : vector<2x128xf32>
    %368 = vector.extract_strided_slice %195 {offsets = [0, 120], sizes = [2, 8], strides = [1, 1]} : vector<2x128xf32> to vector<2x8xf32>
    %369 = vector.extract_strided_slice %195 {offsets = [0, 0], sizes = [2, 120], strides = [1, 1]} : vector<2x128xf32> to vector<2x120xf32>
    %370 = tpu.concatenate %368, %369 in 1 : vector<2x8xf32>, vector<2x120xf32> -> vector<2x128xf32>
    %c17 = arith.constant 17 : index
    %c0_126 = arith.constant 0 : index
    %371 = vector.load %arg16[%c17, %c0_126] : memref<49x128xf32, #tpu.memory_space<vmem>>, vector<1x128xf32>
    %372 = vector.broadcast %371 : vector<1x128xf32> to vector<2x128xf32>
    %373 = arith.mulf %370, %372 : vector<2x128xf32>
    %374 = vector.extract_strided_slice %196 {offsets = [0, 17], sizes = [2, 1], strides = [1, 1]} : vector<2x49xf32> to vector<2x1xf32>
    %375 = vector.broadcast %374 : vector<2x1xf32> to vector<2x128xf32>
    %376 = arith.mulf %373, %375 : vector<2x128xf32>
    %377 = arith.addf %367, %376 : vector<2x128xf32>
    %378 = vector.extract_strided_slice %195 {offsets = [0, 121], sizes = [2, 7], strides = [1, 1]} : vector<2x128xf32> to vector<2x7xf32>
    %379 = vector.extract_strided_slice %195 {offsets = [0, 0], sizes = [2, 121], strides = [1, 1]} : vector<2x128xf32> to vector<2x121xf32>
    %380 = tpu.concatenate %378, %379 in 1 : vector<2x7xf32>, vector<2x121xf32> -> vector<2x128xf32>
    %c18 = arith.constant 18 : index
    %c0_127 = arith.constant 0 : index
    %381 = vector.load %arg16[%c18, %c0_127] : memref<49x128xf32, #tpu.memory_space<vmem>>, vector<1x128xf32>
    %382 = vector.broadcast %381 : vector<1x128xf32> to vector<2x128xf32>
    %383 = arith.mulf %380, %382 : vector<2x128xf32>
    %384 = vector.extract_strided_slice %196 {offsets = [0, 18], sizes = [2, 1], strides = [1, 1]} : vector<2x49xf32> to vector<2x1xf32>
    %385 = vector.broadcast %384 : vector<2x1xf32> to vector<2x128xf32>
    %386 = arith.mulf %383, %385 : vector<2x128xf32>
    %387 = arith.addf %377, %386 : vector<2x128xf32>
    %388 = vector.extract_strided_slice %195 {offsets = [0, 122], sizes = [2, 6], strides = [1, 1]} : vector<2x128xf32> to vector<2x6xf32>
    %389 = vector.extract_strided_slice %195 {offsets = [0, 0], sizes = [2, 122], strides = [1, 1]} : vector<2x128xf32> to vector<2x122xf32>
    %390 = tpu.concatenate %388, %389 in 1 : vector<2x6xf32>, vector<2x122xf32> -> vector<2x128xf32>
    %c19 = arith.constant 19 : index
    %c0_128 = arith.constant 0 : index
    %391 = vector.load %arg16[%c19, %c0_128] : memref<49x128xf32, #tpu.memory_space<vmem>>, vector<1x128xf32>
    %392 = vector.broadcast %391 : vector<1x128xf32> to vector<2x128xf32>
    %393 = arith.mulf %390, %392 : vector<2x128xf32>
    %394 = vector.extract_strided_slice %196 {offsets = [0, 19], sizes = [2, 1], strides = [1, 1]} : vector<2x49xf32> to vector<2x1xf32>
    %395 = vector.broadcast %394 : vector<2x1xf32> to vector<2x128xf32>
    %396 = arith.mulf %393, %395 : vector<2x128xf32>
    %397 = arith.addf %387, %396 : vector<2x128xf32>
    %398 = vector.extract_strided_slice %195 {offsets = [0, 123], sizes = [2, 5], strides = [1, 1]} : vector<2x128xf32> to vector<2x5xf32>
    %399 = vector.extract_strided_slice %195 {offsets = [0, 0], sizes = [2, 123], strides = [1, 1]} : vector<2x128xf32> to vector<2x123xf32>
    %400 = tpu.concatenate %398, %399 in 1 : vector<2x5xf32>, vector<2x123xf32> -> vector<2x128xf32>
    %c20_129 = arith.constant 20 : index
    %c0_130 = arith.constant 0 : index
    %401 = vector.load %arg16[%c20_129, %c0_130] : memref<49x128xf32, #tpu.memory_space<vmem>>, vector<1x128xf32>
    %402 = vector.broadcast %401 : vector<1x128xf32> to vector<2x128xf32>
    %403 = arith.mulf %400, %402 : vector<2x128xf32>
    %404 = vector.extract_strided_slice %196 {offsets = [0, 20], sizes = [2, 1], strides = [1, 1]} : vector<2x49xf32> to vector<2x1xf32>
    %405 = vector.broadcast %404 : vector<2x1xf32> to vector<2x128xf32>
    %406 = arith.mulf %403, %405 : vector<2x128xf32>
    %407 = arith.addf %397, %406 : vector<2x128xf32>
    %408 = vector.extract_strided_slice %195 {offsets = [0, 125], sizes = [2, 3], strides = [1, 1]} : vector<2x128xf32> to vector<2x3xf32>
    %409 = vector.extract_strided_slice %195 {offsets = [0, 0], sizes = [2, 125], strides = [1, 1]} : vector<2x128xf32> to vector<2x125xf32>
    %410 = tpu.concatenate %408, %409 in 1 : vector<2x3xf32>, vector<2x125xf32> -> vector<2x128xf32>
    %c21 = arith.constant 21 : index
    %c0_131 = arith.constant 0 : index
    %411 = vector.load %arg16[%c21, %c0_131] : memref<49x128xf32, #tpu.memory_space<vmem>>, vector<1x128xf32>
    %412 = vector.broadcast %411 : vector<1x128xf32> to vector<2x128xf32>
    %413 = arith.mulf %410, %412 : vector<2x128xf32>
    %414 = vector.extract_strided_slice %196 {offsets = [0, 21], sizes = [2, 1], strides = [1, 1]} : vector<2x49xf32> to vector<2x1xf32>
    %415 = vector.broadcast %414 : vector<2x1xf32> to vector<2x128xf32>
    %416 = arith.mulf %413, %415 : vector<2x128xf32>
    %417 = arith.addf %407, %416 : vector<2x128xf32>
    %418 = vector.extract_strided_slice %195 {offsets = [0, 126], sizes = [2, 2], strides = [1, 1]} : vector<2x128xf32> to vector<2x2xf32>
    %419 = vector.extract_strided_slice %195 {offsets = [0, 0], sizes = [2, 126], strides = [1, 1]} : vector<2x128xf32> to vector<2x126xf32>
    %420 = tpu.concatenate %418, %419 in 1 : vector<2x2xf32>, vector<2x126xf32> -> vector<2x128xf32>
    %c22 = arith.constant 22 : index
    %c0_132 = arith.constant 0 : index
    %421 = vector.load %arg16[%c22, %c0_132] : memref<49x128xf32, #tpu.memory_space<vmem>>, vector<1x128xf32>
    %422 = vector.broadcast %421 : vector<1x128xf32> to vector<2x128xf32>
    %423 = arith.mulf %420, %422 : vector<2x128xf32>
    %424 = vector.extract_strided_slice %196 {offsets = [0, 22], sizes = [2, 1], strides = [1, 1]} : vector<2x49xf32> to vector<2x1xf32>
    %425 = vector.broadcast %424 : vector<2x1xf32> to vector<2x128xf32>
    %426 = arith.mulf %423, %425 : vector<2x128xf32>
    %427 = arith.addf %417, %426 : vector<2x128xf32>
    %428 = vector.extract_strided_slice %195 {offsets = [0, 127], sizes = [2, 1], strides = [1, 1]} : vector<2x128xf32> to vector<2x1xf32>
    %429 = vector.extract_strided_slice %195 {offsets = [0, 0], sizes = [2, 127], strides = [1, 1]} : vector<2x128xf32> to vector<2x127xf32>
    %430 = tpu.concatenate %428, %429 in 1 : vector<2x1xf32>, vector<2x127xf32> -> vector<2x128xf32>
    %c23 = arith.constant 23 : index
    %c0_133 = arith.constant 0 : index
    %431 = vector.load %arg16[%c23, %c0_133] : memref<49x128xf32, #tpu.memory_space<vmem>>, vector<1x128xf32>
    %432 = vector.broadcast %431 : vector<1x128xf32> to vector<2x128xf32>
    %433 = arith.mulf %430, %432 : vector<2x128xf32>
    %434 = vector.extract_strided_slice %196 {offsets = [0, 23], sizes = [2, 1], strides = [1, 1]} : vector<2x49xf32> to vector<2x1xf32>
    %435 = vector.broadcast %434 : vector<2x1xf32> to vector<2x128xf32>
    %436 = arith.mulf %433, %435 : vector<2x128xf32>
    %437 = arith.addf %427, %436 : vector<2x128xf32>
    %438 = vector.extract_strided_slice %196 {offsets = [0, 24], sizes = [2, 1], strides = [1, 1]} : vector<2x49xf32> to vector<2x1xf32>
    %439 = vector.broadcast %438 : vector<2x1xf32> to vector<2x128xf32>
    %440 = arith.mulf %195, %439 : vector<2x128xf32>
    %441 = arith.addf %437, %440 : vector<2x128xf32>
    %442 = vector.extract_strided_slice %195 {offsets = [0, 1], sizes = [2, 127], strides = [1, 1]} : vector<2x128xf32> to vector<2x127xf32>
    %443 = vector.extract_strided_slice %195 {offsets = [0, 0], sizes = [2, 1], strides = [1, 1]} : vector<2x128xf32> to vector<2x1xf32>
    %444 = tpu.concatenate %442, %443 in 1 : vector<2x127xf32>, vector<2x1xf32> -> vector<2x128xf32>
    %c25 = arith.constant 25 : index
    %c0_134 = arith.constant 0 : index
    %445 = vector.load %arg16[%c25, %c0_134] : memref<49x128xf32, #tpu.memory_space<vmem>>, vector<1x128xf32>
    %446 = vector.broadcast %445 : vector<1x128xf32> to vector<2x128xf32>
    %447 = arith.mulf %444, %446 : vector<2x128xf32>
    %448 = vector.extract_strided_slice %196 {offsets = [0, 25], sizes = [2, 1], strides = [1, 1]} : vector<2x49xf32> to vector<2x1xf32>
    %449 = vector.broadcast %448 : vector<2x1xf32> to vector<2x128xf32>
    %450 = arith.mulf %447, %449 : vector<2x128xf32>
    %451 = arith.addf %441, %450 : vector<2x128xf32>
    %452 = vector.extract_strided_slice %195 {offsets = [0, 2], sizes = [2, 126], strides = [1, 1]} : vector<2x128xf32> to vector<2x126xf32>
    %453 = vector.extract_strided_slice %195 {offsets = [0, 0], sizes = [2, 2], strides = [1, 1]} : vector<2x128xf32> to vector<2x2xf32>
    %454 = tpu.concatenate %452, %453 in 1 : vector<2x126xf32>, vector<2x2xf32> -> vector<2x128xf32>
    %c26 = arith.constant 26 : index
    %c0_135 = arith.constant 0 : index
    %455 = vector.load %arg16[%c26, %c0_135] : memref<49x128xf32, #tpu.memory_space<vmem>>, vector<1x128xf32>
    %456 = vector.broadcast %455 : vector<1x128xf32> to vector<2x128xf32>
    %457 = arith.mulf %454, %456 : vector<2x128xf32>
    %458 = vector.extract_strided_slice %196 {offsets = [0, 26], sizes = [2, 1], strides = [1, 1]} : vector<2x49xf32> to vector<2x1xf32>
    %459 = vector.broadcast %458 : vector<2x1xf32> to vector<2x128xf32>
    %460 = arith.mulf %457, %459 : vector<2x128xf32>
    %461 = arith.addf %451, %460 : vector<2x128xf32>
    %462 = vector.extract_strided_slice %195 {offsets = [0, 3], sizes = [2, 125], strides = [1, 1]} : vector<2x128xf32> to vector<2x125xf32>
    %463 = vector.extract_strided_slice %195 {offsets = [0, 0], sizes = [2, 3], strides = [1, 1]} : vector<2x128xf32> to vector<2x3xf32>
    %464 = tpu.concatenate %462, %463 in 1 : vector<2x125xf32>, vector<2x3xf32> -> vector<2x128xf32>
    %c27 = arith.constant 27 : index
    %c0_136 = arith.constant 0 : index
    %465 = vector.load %arg16[%c27, %c0_136] : memref<49x128xf32, #tpu.memory_space<vmem>>, vector<1x128xf32>
    %466 = vector.broadcast %465 : vector<1x128xf32> to vector<2x128xf32>
    %467 = arith.mulf %464, %466 : vector<2x128xf32>
    %468 = vector.extract_strided_slice %196 {offsets = [0, 27], sizes = [2, 1], strides = [1, 1]} : vector<2x49xf32> to vector<2x1xf32>
    %469 = vector.broadcast %468 : vector<2x1xf32> to vector<2x128xf32>
    %470 = arith.mulf %467, %469 : vector<2x128xf32>
    %471 = arith.addf %461, %470 : vector<2x128xf32>
    %472 = vector.extract_strided_slice %195 {offsets = [0, 5], sizes = [2, 123], strides = [1, 1]} : vector<2x128xf32> to vector<2x123xf32>
    %473 = vector.extract_strided_slice %195 {offsets = [0, 0], sizes = [2, 5], strides = [1, 1]} : vector<2x128xf32> to vector<2x5xf32>
    %474 = tpu.concatenate %472, %473 in 1 : vector<2x123xf32>, vector<2x5xf32> -> vector<2x128xf32>
    %c28_137 = arith.constant 28 : index
    %c0_138 = arith.constant 0 : index
    %475 = vector.load %arg16[%c28_137, %c0_138] : memref<49x128xf32, #tpu.memory_space<vmem>>, vector<1x128xf32>
    %476 = vector.broadcast %475 : vector<1x128xf32> to vector<2x128xf32>
    %477 = arith.mulf %474, %476 : vector<2x128xf32>
    %478 = vector.extract_strided_slice %196 {offsets = [0, 28], sizes = [2, 1], strides = [1, 1]} : vector<2x49xf32> to vector<2x1xf32>
    %479 = vector.broadcast %478 : vector<2x1xf32> to vector<2x128xf32>
    %480 = arith.mulf %477, %479 : vector<2x128xf32>
    %481 = arith.addf %471, %480 : vector<2x128xf32>
    %482 = vector.extract_strided_slice %195 {offsets = [0, 6], sizes = [2, 122], strides = [1, 1]} : vector<2x128xf32> to vector<2x122xf32>
    %483 = vector.extract_strided_slice %195 {offsets = [0, 0], sizes = [2, 6], strides = [1, 1]} : vector<2x128xf32> to vector<2x6xf32>
    %484 = tpu.concatenate %482, %483 in 1 : vector<2x122xf32>, vector<2x6xf32> -> vector<2x128xf32>
    %c29 = arith.constant 29 : index
    %c0_139 = arith.constant 0 : index
    %485 = vector.load %arg16[%c29, %c0_139] : memref<49x128xf32, #tpu.memory_space<vmem>>, vector<1x128xf32>
    %486 = vector.broadcast %485 : vector<1x128xf32> to vector<2x128xf32>
    %487 = arith.mulf %484, %486 : vector<2x128xf32>
    %488 = vector.extract_strided_slice %196 {offsets = [0, 29], sizes = [2, 1], strides = [1, 1]} : vector<2x49xf32> to vector<2x1xf32>
    %489 = vector.broadcast %488 : vector<2x1xf32> to vector<2x128xf32>
    %490 = arith.mulf %487, %489 : vector<2x128xf32>
    %491 = arith.addf %481, %490 : vector<2x128xf32>
    %492 = vector.extract_strided_slice %195 {offsets = [0, 7], sizes = [2, 121], strides = [1, 1]} : vector<2x128xf32> to vector<2x121xf32>
    %493 = vector.extract_strided_slice %195 {offsets = [0, 0], sizes = [2, 7], strides = [1, 1]} : vector<2x128xf32> to vector<2x7xf32>
    %494 = tpu.concatenate %492, %493 in 1 : vector<2x121xf32>, vector<2x7xf32> -> vector<2x128xf32>
    %c30 = arith.constant 30 : index
    %c0_140 = arith.constant 0 : index
    %495 = vector.load %arg16[%c30, %c0_140] : memref<49x128xf32, #tpu.memory_space<vmem>>, vector<1x128xf32>
    %496 = vector.broadcast %495 : vector<1x128xf32> to vector<2x128xf32>
    %497 = arith.mulf %494, %496 : vector<2x128xf32>
    %498 = vector.extract_strided_slice %196 {offsets = [0, 30], sizes = [2, 1], strides = [1, 1]} : vector<2x49xf32> to vector<2x1xf32>
    %499 = vector.broadcast %498 : vector<2x1xf32> to vector<2x128xf32>
    %500 = arith.mulf %497, %499 : vector<2x128xf32>
    %501 = arith.addf %491, %500 : vector<2x128xf32>
    %502 = vector.extract_strided_slice %195 {offsets = [0, 8], sizes = [2, 120], strides = [1, 1]} : vector<2x128xf32> to vector<2x120xf32>
    %503 = vector.extract_strided_slice %195 {offsets = [0, 0], sizes = [2, 8], strides = [1, 1]} : vector<2x128xf32> to vector<2x8xf32>
    %504 = tpu.concatenate %502, %503 in 1 : vector<2x120xf32>, vector<2x8xf32> -> vector<2x128xf32>
    %c31 = arith.constant 31 : index
    %c0_141 = arith.constant 0 : index
    %505 = vector.load %arg16[%c31, %c0_141] : memref<49x128xf32, #tpu.memory_space<vmem>>, vector<1x128xf32>
    %506 = vector.broadcast %505 : vector<1x128xf32> to vector<2x128xf32>
    %507 = arith.mulf %504, %506 : vector<2x128xf32>
    %508 = vector.extract_strided_slice %196 {offsets = [0, 31], sizes = [2, 1], strides = [1, 1]} : vector<2x49xf32> to vector<2x1xf32>
    %509 = vector.broadcast %508 : vector<2x1xf32> to vector<2x128xf32>
    %510 = arith.mulf %507, %509 : vector<2x128xf32>
    %511 = arith.addf %501, %510 : vector<2x128xf32>
    %512 = vector.extract_strided_slice %195 {offsets = [0, 9], sizes = [2, 119], strides = [1, 1]} : vector<2x128xf32> to vector<2x119xf32>
    %513 = vector.extract_strided_slice %195 {offsets = [0, 0], sizes = [2, 9], strides = [1, 1]} : vector<2x128xf32> to vector<2x9xf32>
    %514 = tpu.concatenate %512, %513 in 1 : vector<2x119xf32>, vector<2x9xf32> -> vector<2x128xf32>
    %c32_142 = arith.constant 32 : index
    %c0_143 = arith.constant 0 : index
    %515 = vector.load %arg16[%c32_142, %c0_143] : memref<49x128xf32, #tpu.memory_space<vmem>>, vector<1x128xf32>
    %516 = vector.broadcast %515 : vector<1x128xf32> to vector<2x128xf32>
    %517 = arith.mulf %514, %516 : vector<2x128xf32>
    %518 = vector.extract_strided_slice %196 {offsets = [0, 32], sizes = [2, 1], strides = [1, 1]} : vector<2x49xf32> to vector<2x1xf32>
    %519 = vector.broadcast %518 : vector<2x1xf32> to vector<2x128xf32>
    %520 = arith.mulf %517, %519 : vector<2x128xf32>
    %521 = arith.addf %511, %520 : vector<2x128xf32>
    %522 = vector.extract_strided_slice %195 {offsets = [0, 10], sizes = [2, 118], strides = [1, 1]} : vector<2x128xf32> to vector<2x118xf32>
    %523 = vector.extract_strided_slice %195 {offsets = [0, 0], sizes = [2, 10], strides = [1, 1]} : vector<2x128xf32> to vector<2x10xf32>
    %524 = tpu.concatenate %522, %523 in 1 : vector<2x118xf32>, vector<2x10xf32> -> vector<2x128xf32>
    %c33 = arith.constant 33 : index
    %c0_144 = arith.constant 0 : index
    %525 = vector.load %arg16[%c33, %c0_144] : memref<49x128xf32, #tpu.memory_space<vmem>>, vector<1x128xf32>
    %526 = vector.broadcast %525 : vector<1x128xf32> to vector<2x128xf32>
    %527 = arith.mulf %524, %526 : vector<2x128xf32>
    %528 = vector.extract_strided_slice %196 {offsets = [0, 33], sizes = [2, 1], strides = [1, 1]} : vector<2x49xf32> to vector<2x1xf32>
    %529 = vector.broadcast %528 : vector<2x1xf32> to vector<2x128xf32>
    %530 = arith.mulf %527, %529 : vector<2x128xf32>
    %531 = arith.addf %521, %530 : vector<2x128xf32>
    %532 = vector.extract_strided_slice %195 {offsets = [0, 11], sizes = [2, 117], strides = [1, 1]} : vector<2x128xf32> to vector<2x117xf32>
    %533 = vector.extract_strided_slice %195 {offsets = [0, 0], sizes = [2, 11], strides = [1, 1]} : vector<2x128xf32> to vector<2x11xf32>
    %534 = tpu.concatenate %532, %533 in 1 : vector<2x117xf32>, vector<2x11xf32> -> vector<2x128xf32>
    %c34 = arith.constant 34 : index
    %c0_145 = arith.constant 0 : index
    %535 = vector.load %arg16[%c34, %c0_145] : memref<49x128xf32, #tpu.memory_space<vmem>>, vector<1x128xf32>
    %536 = vector.broadcast %535 : vector<1x128xf32> to vector<2x128xf32>
    %537 = arith.mulf %534, %536 : vector<2x128xf32>
    %538 = vector.extract_strided_slice %196 {offsets = [0, 34], sizes = [2, 1], strides = [1, 1]} : vector<2x49xf32> to vector<2x1xf32>
    %539 = vector.broadcast %538 : vector<2x1xf32> to vector<2x128xf32>
    %540 = arith.mulf %537, %539 : vector<2x128xf32>
    %541 = arith.addf %531, %540 : vector<2x128xf32>
    %542 = vector.extract_strided_slice %195 {offsets = [0, 13], sizes = [2, 115], strides = [1, 1]} : vector<2x128xf32> to vector<2x115xf32>
    %543 = vector.extract_strided_slice %195 {offsets = [0, 0], sizes = [2, 13], strides = [1, 1]} : vector<2x128xf32> to vector<2x13xf32>
    %544 = tpu.concatenate %542, %543 in 1 : vector<2x115xf32>, vector<2x13xf32> -> vector<2x128xf32>
    %c35 = arith.constant 35 : index
    %c0_146 = arith.constant 0 : index
    %545 = vector.load %arg16[%c35, %c0_146] : memref<49x128xf32, #tpu.memory_space<vmem>>, vector<1x128xf32>
    %546 = vector.broadcast %545 : vector<1x128xf32> to vector<2x128xf32>
    %547 = arith.mulf %544, %546 : vector<2x128xf32>
    %548 = vector.extract_strided_slice %196 {offsets = [0, 35], sizes = [2, 1], strides = [1, 1]} : vector<2x49xf32> to vector<2x1xf32>
    %549 = vector.broadcast %548 : vector<2x1xf32> to vector<2x128xf32>
    %550 = arith.mulf %547, %549 : vector<2x128xf32>
    %551 = arith.addf %541, %550 : vector<2x128xf32>
    %552 = vector.extract_strided_slice %195 {offsets = [0, 14], sizes = [2, 114], strides = [1, 1]} : vector<2x128xf32> to vector<2x114xf32>
    %553 = vector.extract_strided_slice %195 {offsets = [0, 0], sizes = [2, 14], strides = [1, 1]} : vector<2x128xf32> to vector<2x14xf32>
    %554 = tpu.concatenate %552, %553 in 1 : vector<2x114xf32>, vector<2x14xf32> -> vector<2x128xf32>
    %c36 = arith.constant 36 : index
    %c0_147 = arith.constant 0 : index
    %555 = vector.load %arg16[%c36, %c0_147] : memref<49x128xf32, #tpu.memory_space<vmem>>, vector<1x128xf32>
    %556 = vector.broadcast %555 : vector<1x128xf32> to vector<2x128xf32>
    %557 = arith.mulf %554, %556 : vector<2x128xf32>
    %558 = vector.extract_strided_slice %196 {offsets = [0, 36], sizes = [2, 1], strides = [1, 1]} : vector<2x49xf32> to vector<2x1xf32>
    %559 = vector.broadcast %558 : vector<2x1xf32> to vector<2x128xf32>
    %560 = arith.mulf %557, %559 : vector<2x128xf32>
    %561 = arith.addf %551, %560 : vector<2x128xf32>
    %562 = vector.extract_strided_slice %195 {offsets = [0, 15], sizes = [2, 113], strides = [1, 1]} : vector<2x128xf32> to vector<2x113xf32>
    %563 = vector.extract_strided_slice %195 {offsets = [0, 0], sizes = [2, 15], strides = [1, 1]} : vector<2x128xf32> to vector<2x15xf32>
    %564 = tpu.concatenate %562, %563 in 1 : vector<2x113xf32>, vector<2x15xf32> -> vector<2x128xf32>
    %c37 = arith.constant 37 : index
    %c0_148 = arith.constant 0 : index
    %565 = vector.load %arg16[%c37, %c0_148] : memref<49x128xf32, #tpu.memory_space<vmem>>, vector<1x128xf32>
    %566 = vector.broadcast %565 : vector<1x128xf32> to vector<2x128xf32>
    %567 = arith.mulf %564, %566 : vector<2x128xf32>
    %568 = vector.extract_strided_slice %196 {offsets = [0, 37], sizes = [2, 1], strides = [1, 1]} : vector<2x49xf32> to vector<2x1xf32>
    %569 = vector.broadcast %568 : vector<2x1xf32> to vector<2x128xf32>
    %570 = arith.mulf %567, %569 : vector<2x128xf32>
    %571 = arith.addf %561, %570 : vector<2x128xf32>
    %572 = vector.extract_strided_slice %195 {offsets = [0, 16], sizes = [2, 112], strides = [1, 1]} : vector<2x128xf32> to vector<2x112xf32>
    %573 = vector.extract_strided_slice %195 {offsets = [0, 0], sizes = [2, 16], strides = [1, 1]} : vector<2x128xf32> to vector<2x16xf32>
    %574 = tpu.concatenate %572, %573 in 1 : vector<2x112xf32>, vector<2x16xf32> -> vector<2x128xf32>
    %c38 = arith.constant 38 : index
    %c0_149 = arith.constant 0 : index
    %575 = vector.load %arg16[%c38, %c0_149] : memref<49x128xf32, #tpu.memory_space<vmem>>, vector<1x128xf32>
    %576 = vector.broadcast %575 : vector<1x128xf32> to vector<2x128xf32>
    %577 = arith.mulf %574, %576 : vector<2x128xf32>
    %578 = vector.extract_strided_slice %196 {offsets = [0, 38], sizes = [2, 1], strides = [1, 1]} : vector<2x49xf32> to vector<2x1xf32>
    %579 = vector.broadcast %578 : vector<2x1xf32> to vector<2x128xf32>
    %580 = arith.mulf %577, %579 : vector<2x128xf32>
    %581 = arith.addf %571, %580 : vector<2x128xf32>
    %582 = vector.extract_strided_slice %195 {offsets = [0, 17], sizes = [2, 111], strides = [1, 1]} : vector<2x128xf32> to vector<2x111xf32>
    %583 = vector.extract_strided_slice %195 {offsets = [0, 0], sizes = [2, 17], strides = [1, 1]} : vector<2x128xf32> to vector<2x17xf32>
    %584 = tpu.concatenate %582, %583 in 1 : vector<2x111xf32>, vector<2x17xf32> -> vector<2x128xf32>
    %c39 = arith.constant 39 : index
    %c0_150 = arith.constant 0 : index
    %585 = vector.load %arg16[%c39, %c0_150] : memref<49x128xf32, #tpu.memory_space<vmem>>, vector<1x128xf32>
    %586 = vector.broadcast %585 : vector<1x128xf32> to vector<2x128xf32>
    %587 = arith.mulf %584, %586 : vector<2x128xf32>
    %588 = vector.extract_strided_slice %196 {offsets = [0, 39], sizes = [2, 1], strides = [1, 1]} : vector<2x49xf32> to vector<2x1xf32>
    %589 = vector.broadcast %588 : vector<2x1xf32> to vector<2x128xf32>
    %590 = arith.mulf %587, %589 : vector<2x128xf32>
    %591 = arith.addf %581, %590 : vector<2x128xf32>
    %592 = vector.extract_strided_slice %195 {offsets = [0, 18], sizes = [2, 110], strides = [1, 1]} : vector<2x128xf32> to vector<2x110xf32>
    %593 = vector.extract_strided_slice %195 {offsets = [0, 0], sizes = [2, 18], strides = [1, 1]} : vector<2x128xf32> to vector<2x18xf32>
    %594 = tpu.concatenate %592, %593 in 1 : vector<2x110xf32>, vector<2x18xf32> -> vector<2x128xf32>
    %c40 = arith.constant 40 : index
    %c0_151 = arith.constant 0 : index
    %595 = vector.load %arg16[%c40, %c0_151] : memref<49x128xf32, #tpu.memory_space<vmem>>, vector<1x128xf32>
    %596 = vector.broadcast %595 : vector<1x128xf32> to vector<2x128xf32>
    %597 = arith.mulf %594, %596 : vector<2x128xf32>
    %598 = vector.extract_strided_slice %196 {offsets = [0, 40], sizes = [2, 1], strides = [1, 1]} : vector<2x49xf32> to vector<2x1xf32>
    %599 = vector.broadcast %598 : vector<2x1xf32> to vector<2x128xf32>
    %600 = arith.mulf %597, %599 : vector<2x128xf32>
    %601 = arith.addf %591, %600 : vector<2x128xf32>
    %602 = vector.extract_strided_slice %195 {offsets = [0, 19], sizes = [2, 109], strides = [1, 1]} : vector<2x128xf32> to vector<2x109xf32>
    %603 = vector.extract_strided_slice %195 {offsets = [0, 0], sizes = [2, 19], strides = [1, 1]} : vector<2x128xf32> to vector<2x19xf32>
    %604 = tpu.concatenate %602, %603 in 1 : vector<2x109xf32>, vector<2x19xf32> -> vector<2x128xf32>
    %c41 = arith.constant 41 : index
    %c0_152 = arith.constant 0 : index
    %605 = vector.load %arg16[%c41, %c0_152] : memref<49x128xf32, #tpu.memory_space<vmem>>, vector<1x128xf32>
    %606 = vector.broadcast %605 : vector<1x128xf32> to vector<2x128xf32>
    %607 = arith.mulf %604, %606 : vector<2x128xf32>
    %608 = vector.extract_strided_slice %196 {offsets = [0, 41], sizes = [2, 1], strides = [1, 1]} : vector<2x49xf32> to vector<2x1xf32>
    %609 = vector.broadcast %608 : vector<2x1xf32> to vector<2x128xf32>
    %610 = arith.mulf %607, %609 : vector<2x128xf32>
    %611 = arith.addf %601, %610 : vector<2x128xf32>
    %612 = vector.extract_strided_slice %195 {offsets = [0, 21], sizes = [2, 107], strides = [1, 1]} : vector<2x128xf32> to vector<2x107xf32>
    %613 = vector.extract_strided_slice %195 {offsets = [0, 0], sizes = [2, 21], strides = [1, 1]} : vector<2x128xf32> to vector<2x21xf32>
    %614 = tpu.concatenate %612, %613 in 1 : vector<2x107xf32>, vector<2x21xf32> -> vector<2x128xf32>
    %c42 = arith.constant 42 : index
    %c0_153 = arith.constant 0 : index
    %615 = vector.load %arg16[%c42, %c0_153] : memref<49x128xf32, #tpu.memory_space<vmem>>, vector<1x128xf32>
    %616 = vector.broadcast %615 : vector<1x128xf32> to vector<2x128xf32>
    %617 = arith.mulf %614, %616 : vector<2x128xf32>
    %618 = vector.extract_strided_slice %196 {offsets = [0, 42], sizes = [2, 1], strides = [1, 1]} : vector<2x49xf32> to vector<2x1xf32>
    %619 = vector.broadcast %618 : vector<2x1xf32> to vector<2x128xf32>
    %620 = arith.mulf %617, %619 : vector<2x128xf32>
    %621 = arith.addf %611, %620 : vector<2x128xf32>
    %622 = vector.extract_strided_slice %195 {offsets = [0, 22], sizes = [2, 106], strides = [1, 1]} : vector<2x128xf32> to vector<2x106xf32>
    %623 = vector.extract_strided_slice %195 {offsets = [0, 0], sizes = [2, 22], strides = [1, 1]} : vector<2x128xf32> to vector<2x22xf32>
    %624 = tpu.concatenate %622, %623 in 1 : vector<2x106xf32>, vector<2x22xf32> -> vector<2x128xf32>
    %c43 = arith.constant 43 : index
    %c0_154 = arith.constant 0 : index
    %625 = vector.load %arg16[%c43, %c0_154] : memref<49x128xf32, #tpu.memory_space<vmem>>, vector<1x128xf32>
    %626 = vector.broadcast %625 : vector<1x128xf32> to vector<2x128xf32>
    %627 = arith.mulf %624, %626 : vector<2x128xf32>
    %628 = vector.extract_strided_slice %196 {offsets = [0, 43], sizes = [2, 1], strides = [1, 1]} : vector<2x49xf32> to vector<2x1xf32>
    %629 = vector.broadcast %628 : vector<2x1xf32> to vector<2x128xf32>
    %630 = arith.mulf %627, %629 : vector<2x128xf32>
    %631 = arith.addf %621, %630 : vector<2x128xf32>
    %632 = vector.extract_strided_slice %195 {offsets = [0, 23], sizes = [2, 105], strides = [1, 1]} : vector<2x128xf32> to vector<2x105xf32>
    %633 = vector.extract_strided_slice %195 {offsets = [0, 0], sizes = [2, 23], strides = [1, 1]} : vector<2x128xf32> to vector<2x23xf32>
    %634 = tpu.concatenate %632, %633 in 1 : vector<2x105xf32>, vector<2x23xf32> -> vector<2x128xf32>
    %c44 = arith.constant 44 : index
    %c0_155 = arith.constant 0 : index
    %635 = vector.load %arg16[%c44, %c0_155] : memref<49x128xf32, #tpu.memory_space<vmem>>, vector<1x128xf32>
    %636 = vector.broadcast %635 : vector<1x128xf32> to vector<2x128xf32>
    %637 = arith.mulf %634, %636 : vector<2x128xf32>
    %638 = vector.extract_strided_slice %196 {offsets = [0, 44], sizes = [2, 1], strides = [1, 1]} : vector<2x49xf32> to vector<2x1xf32>
    %639 = vector.broadcast %638 : vector<2x1xf32> to vector<2x128xf32>
    %640 = arith.mulf %637, %639 : vector<2x128xf32>
    %641 = arith.addf %631, %640 : vector<2x128xf32>
    %642 = vector.extract_strided_slice %195 {offsets = [0, 24], sizes = [2, 104], strides = [1, 1]} : vector<2x128xf32> to vector<2x104xf32>
    %643 = vector.extract_strided_slice %195 {offsets = [0, 0], sizes = [2, 24], strides = [1, 1]} : vector<2x128xf32> to vector<2x24xf32>
    %644 = tpu.concatenate %642, %643 in 1 : vector<2x104xf32>, vector<2x24xf32> -> vector<2x128xf32>
    %c45 = arith.constant 45 : index
    %c0_156 = arith.constant 0 : index
    %645 = vector.load %arg16[%c45, %c0_156] : memref<49x128xf32, #tpu.memory_space<vmem>>, vector<1x128xf32>
    %646 = vector.broadcast %645 : vector<1x128xf32> to vector<2x128xf32>
    %647 = arith.mulf %644, %646 : vector<2x128xf32>
    %648 = vector.extract_strided_slice %196 {offsets = [0, 45], sizes = [2, 1], strides = [1, 1]} : vector<2x49xf32> to vector<2x1xf32>
    %649 = vector.broadcast %648 : vector<2x1xf32> to vector<2x128xf32>
    %650 = arith.mulf %647, %649 : vector<2x128xf32>
    %651 = arith.addf %641, %650 : vector<2x128xf32>
    %652 = vector.extract_strided_slice %195 {offsets = [0, 25], sizes = [2, 103], strides = [1, 1]} : vector<2x128xf32> to vector<2x103xf32>
    %653 = vector.extract_strided_slice %195 {offsets = [0, 0], sizes = [2, 25], strides = [1, 1]} : vector<2x128xf32> to vector<2x25xf32>
    %654 = tpu.concatenate %652, %653 in 1 : vector<2x103xf32>, vector<2x25xf32> -> vector<2x128xf32>
    %c46 = arith.constant 46 : index
    %c0_157 = arith.constant 0 : index
    %655 = vector.load %arg16[%c46, %c0_157] : memref<49x128xf32, #tpu.memory_space<vmem>>, vector<1x128xf32>
    %656 = vector.broadcast %655 : vector<1x128xf32> to vector<2x128xf32>
    %657 = arith.mulf %654, %656 : vector<2x128xf32>
    %658 = vector.extract_strided_slice %196 {offsets = [0, 46], sizes = [2, 1], strides = [1, 1]} : vector<2x49xf32> to vector<2x1xf32>
    %659 = vector.broadcast %658 : vector<2x1xf32> to vector<2x128xf32>
    %660 = arith.mulf %657, %659 : vector<2x128xf32>
    %661 = arith.addf %651, %660 : vector<2x128xf32>
    %662 = vector.extract_strided_slice %195 {offsets = [0, 26], sizes = [2, 102], strides = [1, 1]} : vector<2x128xf32> to vector<2x102xf32>
    %663 = vector.extract_strided_slice %195 {offsets = [0, 0], sizes = [2, 26], strides = [1, 1]} : vector<2x128xf32> to vector<2x26xf32>
    %664 = tpu.concatenate %662, %663 in 1 : vector<2x102xf32>, vector<2x26xf32> -> vector<2x128xf32>
    %c47 = arith.constant 47 : index
    %c0_158 = arith.constant 0 : index
    %665 = vector.load %arg16[%c47, %c0_158] : memref<49x128xf32, #tpu.memory_space<vmem>>, vector<1x128xf32>
    %666 = vector.broadcast %665 : vector<1x128xf32> to vector<2x128xf32>
    %667 = arith.mulf %664, %666 : vector<2x128xf32>
    %668 = vector.extract_strided_slice %196 {offsets = [0, 47], sizes = [2, 1], strides = [1, 1]} : vector<2x49xf32> to vector<2x1xf32>
    %669 = vector.broadcast %668 : vector<2x1xf32> to vector<2x128xf32>
    %670 = arith.mulf %667, %669 : vector<2x128xf32>
    %671 = arith.addf %661, %670 : vector<2x128xf32>
    %672 = vector.extract_strided_slice %195 {offsets = [0, 27], sizes = [2, 101], strides = [1, 1]} : vector<2x128xf32> to vector<2x101xf32>
    %673 = vector.extract_strided_slice %195 {offsets = [0, 0], sizes = [2, 27], strides = [1, 1]} : vector<2x128xf32> to vector<2x27xf32>
    %674 = tpu.concatenate %672, %673 in 1 : vector<2x101xf32>, vector<2x27xf32> -> vector<2x128xf32>
    %c48 = arith.constant 48 : index
    %c0_159 = arith.constant 0 : index
    %675 = vector.load %arg16[%c48, %c0_159] : memref<49x128xf32, #tpu.memory_space<vmem>>, vector<1x128xf32>
    %676 = vector.broadcast %675 : vector<1x128xf32> to vector<2x128xf32>
    %677 = arith.mulf %674, %676 : vector<2x128xf32>
    %678 = vector.extract_strided_slice %196 {offsets = [0, 48], sizes = [2, 1], strides = [1, 1]} : vector<2x49xf32> to vector<2x1xf32>
    %679 = vector.broadcast %678 : vector<2x1xf32> to vector<2x128xf32>
    %680 = arith.mulf %677, %679 : vector<2x128xf32>
    %681 = arith.addf %671, %680 : vector<2x128xf32>
    %cst_160 = arith.constant dense<0.000000e+00> : vector<128xf32>
    %682 = vector.multi_reduction <add>, %681, %cst_160 [0] : vector<2x128xf32> to vector<128xf32>
    %683 = vector.shape_cast %682 : vector<128xf32> to vector<1x128xf32>
    %c0_161 = arith.constant 0 : index
    %c0_162 = arith.constant 0 : index
    %684 = vector.load %arg10[%c0_161, %c0_162] : memref<1x1xf32, #tpu.memory_space<vmem>>, vector<1x1xf32>
    %685 = vector.broadcast %684 : vector<1x1xf32> to vector<1x128xf32>
    %686 = arith.addf %683, %685 : vector<1x128xf32>
    %687 = math.absf %686 : vector<1x128xf32>
    %cst_163 = arith.constant 0.000000e+00 : f32
    %688 = vector.broadcast %cst_163 : f32 to vector<1x128xf32>
    %689 = arith.subf %688, %687 : vector<1x128xf32>
    %690 = math.exp %689 : vector<1x128xf32>
    %cst_164 = arith.constant 0.000000e+00 : f32
    %691 = vector.broadcast %cst_164 : f32 to vector<1x128xf32>
    %692 = arith.cmpf oge, %686, %691 : vector<1x128xf32>
    %cst_165 = arith.constant 1.000000e+00 : f32
    %693 = vector.broadcast %cst_165 : f32 to vector<1x128xf32>
    %694 = arith.addf %693, %690 : vector<1x128xf32>
    %cst_166 = arith.constant 1.000000e+00 : f32
    %695 = vector.broadcast %cst_166 : f32 to vector<1x128xf32>
    %696 = arith.divf %695, %694 : vector<1x128xf32>
    %cst_167 = arith.constant 1.000000e+00 : f32
    %697 = vector.broadcast %cst_167 : f32 to vector<1x128xf32>
    %698 = arith.addf %697, %690 : vector<1x128xf32>
    %699 = arith.divf %690, %698 : vector<1x128xf32>
    %700 = arith.select %692, %696, %699 : vector<1x128xi1>, vector<1x128xf32>
    %701 = vector.broadcast %700 : vector<1x128xf32> to vector<4x128xf32>
    %702 = arith.mulf %188, %701 : vector<4x128xf32>
    %c0_168 = arith.constant 0 : index
    %c0_169 = arith.constant 0 : index
    %703 = vector.load %arg11[%c0_168, %c0_169] : memref<4x1xf32, #tpu.memory_space<vmem>>, vector<4x1xf32>
    %704 = vector.broadcast %703 : vector<4x1xf32> to vector<4x128xf32>
    %705 = arith.mulf %702, %704 : vector<4x128xf32>
    %c0_170 = arith.constant 0 : index
    %c0_171 = arith.constant 0 : index
    %706 = vector.load %arg12[%c0_170, %c0_171] : memref<4x1xf32, #tpu.memory_space<vmem>>, vector<4x1xf32>
    %707 = vector.broadcast %706 : vector<4x1xf32> to vector<4x128xf32>
    %708 = arith.addf %705, %707 : vector<4x128xf32>
    %709 = vector.extract_strided_slice %708 {offsets = [0, 1], sizes = [4, 127], strides = [1, 1]} : vector<4x128xf32> to vector<4x127xf32>
    %710 = vector.extract_strided_slice %708 {offsets = [0, 0], sizes = [4, 1], strides = [1, 1]} : vector<4x128xf32> to vector<4x1xf32>
    %711 = tpu.concatenate %709, %710 in 1 : vector<4x127xf32>, vector<4x1xf32> -> vector<4x128xf32>
    %712 = arith.maximumf %708, %711 : vector<4x128xf32>
    %713 = vector.extract_strided_slice %712 {offsets = [0, 8], sizes = [4, 120], strides = [1, 1]} : vector<4x128xf32> to vector<4x120xf32>
    %714 = vector.extract_strided_slice %712 {offsets = [0, 0], sizes = [4, 8], strides = [1, 1]} : vector<4x128xf32> to vector<4x8xf32>
    %715 = tpu.concatenate %713, %714 in 1 : vector<4x120xf32>, vector<4x8xf32> -> vector<4x128xf32>
    %716 = arith.maximumf %712, %715 : vector<4x128xf32>
    %c0_172 = arith.constant 0 : index
    %c0_173 = arith.constant 0 : index
    %717 = vector.load %arg17[%c0_172, %c0_173] : memref<128x32xf32, #tpu.memory_space<vmem>>, vector<128x32xf32>
    %cst_174 = arith.constant dense<0.000000e+00> : vector<4x32xf32>
    %718 = tpu.matmul %716, %717, %cst_174 {dimension_numbers = #tpu.dot_dimension_numbers<[1], [0], [0], [1], [0, 0, 1, 1], [], []>} : vector<4x128xf32>, vector<128x32xf32>, vector<4x32xf32> -> vector<4x32xf32>
    %719 = vector.extract_strided_slice %718 {offsets = [0, 0], sizes = [1, 16], strides = [1, 1]} : vector<4x32xf32> to vector<1x16xf32>
    %720 = vector.extract_strided_slice %718 {offsets = [1, 0], sizes = [1, 16], strides = [1, 1]} : vector<4x32xf32> to vector<1x16xf32>
    %721 = vector.extract_strided_slice %718 {offsets = [2, 0], sizes = [1, 16], strides = [1, 1]} : vector<4x32xf32> to vector<1x16xf32>
    %722 = vector.extract_strided_slice %718 {offsets = [3, 0], sizes = [1, 16], strides = [1, 1]} : vector<4x32xf32> to vector<1x16xf32>
    %723 = tpu.concatenate %719, %720, %721, %722 in 1 : vector<1x16xf32>, vector<1x16xf32>, vector<1x16xf32>, vector<1x16xf32> -> vector<1x64xf32>
    %724 = vector.extract_strided_slice %718 {offsets = [0, 16], sizes = [1, 16], strides = [1, 1]} : vector<4x32xf32> to vector<1x16xf32>
    %725 = vector.extract_strided_slice %718 {offsets = [1, 16], sizes = [1, 16], strides = [1, 1]} : vector<4x32xf32> to vector<1x16xf32>
    %726 = vector.extract_strided_slice %718 {offsets = [2, 16], sizes = [1, 16], strides = [1, 1]} : vector<4x32xf32> to vector<1x16xf32>
    %727 = vector.extract_strided_slice %718 {offsets = [3, 16], sizes = [1, 16], strides = [1, 1]} : vector<4x32xf32> to vector<1x16xf32>
    %728 = tpu.concatenate %724, %725, %726, %727 in 1 : vector<1x16xf32>, vector<1x16xf32>, vector<1x16xf32>, vector<1x16xf32> -> vector<1x64xf32>
    %729 = tpu.concatenate %723, %728 in 0 : vector<1x64xf32>, vector<1x64xf32> -> vector<2x64xf32>
    %c0_175 = arith.constant 0 : index
    %c0_176 = arith.constant 0 : index
    %730 = vector.load %arg13[%c0_175, %c0_176] : memref<64x10xf32, #tpu.memory_space<vmem>>, vector<64x10xf32>
    %cst_177 = arith.constant dense<0.000000e+00> : vector<2x10xf32>
    %731 = tpu.matmul %729, %730, %cst_177 {dimension_numbers = #tpu.dot_dimension_numbers<[1], [0], [0], [1], [0, 0, 1, 1], [], []>} : vector<2x64xf32>, vector<64x10xf32>, vector<2x10xf32> -> vector<2x10xf32>
    %c0_178 = arith.constant 0 : index
    %c0_179 = arith.constant 0 : index
    %732 = vector.load %arg14[%c0_178, %c0_179] : memref<1x10xf32, #tpu.memory_space<vmem>>, vector<1x10xf32>
    %733 = vector.broadcast %732 : vector<1x10xf32> to vector<2x10xf32>
    %734 = arith.addf %731, %733 : vector<2x10xf32>
    %c0_180 = arith.constant 0 : index
    %c0_181 = arith.constant 0 : index
    %735 = vector.load %arg18[%c0_180, %c0_181] : memref<2x10xf32, #tpu.memory_space<vmem>>, vector<2x10xf32>
    tpu.vector_store %arg18[%c0_180, %c0_181], %734 {strides = array<i32>} : memref<2x10xf32, #tpu.memory_space<vmem>>, vector<2x10xf32>,
    return
  }
}

</mosaic_0001>

<llo_original>
// kernel: cbam_feature_mapping.1
$region0: #{cbam_feature_mapping.1}
  #allocation0 [shape = 'u32[]', space=smem, size = 0x4, offset = 0x4, fixed_abs, tag = 'smem constant byte address 0x4 - core index']
  #allocation1 [shape = 'u32[144,128]{1,0:T(1,128)}', space=vmem, size = 0x12000, scoped, tag = 'internal scratch']
  #allocation2 [shape = 'f32[36,128]{1,0:T(8,128)}', space=vmem, size = 0x5000, scoped, tag = 'scratch operand']
  #allocation3 [shape = 'f32[1,1]{1,0:T(1,128)S(1)}', space=vmem, size = 0x200, scoped, tag = 'scoped memory for cbam_feature_mapping.1']
  %s0 = inlined_call_operand.vmem [shape: f32[4,128], index: 0, kind: input, shape index: {}]
  %s1 = inlined_call_operand.vmem [shape: f32[8,36], index: 1, kind: input, shape index: {}]
  %s2 = inlined_call_operand.vmem [shape: f32[8,1], index: 2, kind: input, shape index: {}]
  %s3 = inlined_call_operand.vmem [shape: f32[4,36], index: 3, kind: input, shape index: {}]
  %s4 = inlined_call_operand.vmem [shape: f32[4,1], index: 4, kind: input, shape index: {}]
  %s5 = inlined_call_operand.vmem [shape: f32[2,4], index: 5, kind: input, shape index: {}]
  %s6 = inlined_call_operand.vmem [shape: f32[2,1], index: 6, kind: input, shape index: {}]
  %s7 = inlined_call_operand.vmem [shape: f32[4,2], index: 7, kind: input, shape index: {}]
  %s8 = inlined_call_operand.vmem [shape: f32[4,1], index: 8, kind: input, shape index: {}]
  %s9 = inlined_call_operand.vmem [shape: f32[2,49], index: 9, kind: input, shape index: {}]
  %s10 = inlined_call_operand.<no memory space> [shape: f32[1,1], index: 10, kind: input, shape index: {}]
  %s11 = inlined_call_operand.vmem [shape: f32[4,1], index: 11, kind: input, shape index: {}]
  %s12 = inlined_call_operand.vmem [shape: f32[4,1], index: 12, kind: input, shape index: {}]
  %s13 = inlined_call_operand.vmem [shape: f32[64,10], index: 13, kind: input, shape index: {}]
  %s14 = inlined_call_operand.vmem [shape: f32[1,10], index: 14, kind: input, shape index: {}]
  %s15 = inlined_call_operand.vmem [shape: f32[9,128], index: 15, kind: input, shape index: {}]
  %s16 = inlined_call_operand.vmem [shape: f32[49,128], index: 16, kind: input, shape index: {}]
  %s17 = inlined_call_operand.vmem [shape: f32[128,32], index: 17, kind: input, shape index: {}]
  %s18 = inlined_call_operand.hbm [shape: f32[2,10], index: 18, kind: output, shape index: {}]
  %s19 = sld [smem:[#allocation0]]
  $region82: #{cbam_feature_mapping.1} parent=0
    _
  %s21 = ssub.s32 1, %s19
  %s22 = scalar_select 0, %s21, %s19
  %v23 = vstv %s10
  %24 = vst [vmem:[#allocation3] sm:$0x1] %v23
  $region1: #{cbam_feature_mapping.1} parent=0
    #allocation4 [shape = 'u8[1024]{0}', space=vmem, size = 0x400, scoped, tag = 'output window, operand 0, single buffered']
    #allocation5 [shape = 's32[1]{0}', space=sflag, size = 0x4, scoped, tag = 'scoped memory for cbam_feature_mapping.1']
    %25 = vsyncpa [#allocation5], 0
    // Predicated region
    $region2: #{cbam_feature_mapping.1} parent=1 // pred_check
      _
    $region3: #{cbam_feature_mapping.1} parent=1 // pred_check_branch
      %27 = sbr.rel (0) target = $region5
    $region4: #{cbam_feature_mapping.1} parent=1 // pred_region
      _
    $region5: #{cbam_feature_mapping.1} parent=1 // pred_fallthru
      _
    // Predicated region
    $region6: #{cbam_feature_mapping.1} parent=1 // pred_check
      _
    $region7: #{cbam_feature_mapping.1} parent=1 // pred_check_branch
      %29 = sbr.rel (0) target = $region9
    $region8: #{cbam_feature_mapping.1} parent=1 // pred_region
      _
    $region9: #{cbam_feature_mapping.1} parent=1 // pred_fallthru
      _
    // Predicated region
    $region10: #{cbam_feature_mapping.1} parent=1 // pred_check
      _
    $region11: #{cbam_feature_mapping.1} parent=1 // pred_check_branch
      %31 = sbr.rel (0) target = $region13
    $region12: #{cbam_feature_mapping.1} parent=1 // pred_region
      _
    $region13: #{cbam_feature_mapping.1} parent=1 // pred_fallthru
      _
    // Predicated region
    $region14: #{cbam_feature_mapping.1} parent=1 // pred_check
      _
    $region15: #{cbam_feature_mapping.1} parent=1 // pred_check_branch
      %33 = sbr.rel (0) target = $region17
    $region16: #{cbam_feature_mapping.1} parent=1 // pred_region
      _
    $region17: #{cbam_feature_mapping.1} parent=1 // pred_fallthru
      _
    // Predicated region
    $region18: #{cbam_feature_mapping.1} parent=1 // pred_check
      _
    $region19: #{cbam_feature_mapping.1} parent=1 // pred_check_branch
      %35 = sbr.rel (0) target = $region21
    $region20: #{cbam_feature_mapping.1} parent=1 // pred_region
      _
    $region21: #{cbam_feature_mapping.1} parent=1 // pred_fallthru
      _
    // Predicated region
    $region22: #{cbam_feature_mapping.1} parent=1 // pred_check
      _
    $region23: #{cbam_feature_mapping.1} parent=1 // pred_check_branch
      %37 = sbr.rel (0) target = $region25
    $region24: #{cbam_feature_mapping.1} parent=1 // pred_region
      _
    $region25: #{cbam_feature_mapping.1} parent=1 // pred_fallthru
      _
    // Predicated region
    $region26: #{cbam_feature_mapping.1} parent=1 // pred_check
      _
    $region27: #{cbam_feature_mapping.1} parent=1 // pred_check_branch
      %39 = sbr.rel (0) target = $region29
    $region28: #{cbam_feature_mapping.1} parent=1 // pred_region
      _
    $region29: #{cbam_feature_mapping.1} parent=1 // pred_fallthru
      _
    // Predicated region
    $region30: #{cbam_feature_mapping.1} parent=1 // pred_check
      _
    $region31: #{cbam_feature_mapping.1} parent=1 // pred_check_branch
      %41 = sbr.rel (0) target = $region33
    $region32: #{cbam_feature_mapping.1} parent=1 // pred_region
      _
    $region33: #{cbam_feature_mapping.1} parent=1 // pred_fallthru
      _
    // Predicated region
    $region34: #{cbam_feature_mapping.1} parent=1 // pred_check
      _
    $region35: #{cbam_feature_mapping.1} parent=1 // pred_check_branch
      %43 = sbr.rel (0) target = $region37
    $region36: #{cbam_feature_mapping.1} parent=1 // pred_region
      _
    $region37: #{cbam_feature_mapping.1} parent=1 // pred_fallthru
      _
    // Predicated region
    $region38: #{cbam_feature_mapping.1} parent=1 // pred_check
      _
    $region39: #{cbam_feature_mapping.1} parent=1 // pred_check_branch
      %45 = sbr.rel (0) target = $region41
    $region40: #{cbam_feature_mapping.1} parent=1 // pred_region
      _
    $region41: #{cbam_feature_mapping.1} parent=1 // pred_fallthru
      _
    // Predicated region
    $region42: #{cbam_feature_mapping.1} parent=1 // pred_check
      _
    $region43: #{cbam_feature_mapping.1} parent=1 // pred_check_branch
      %47 = sbr.rel (0) target = $region45
    $region44: #{cbam_feature_mapping.1} parent=1 // pred_region
      _
    $region45: #{cbam_feature_mapping.1} parent=1 // pred_fallthru
      _
    // Predicated region
    $region46: #{cbam_feature_mapping.1} parent=1 // pred_check
      _
    $region47: #{cbam_feature_mapping.1} parent=1 // pred_check_branch
      %49 = sbr.rel (0) target = $region49
    $region48: #{cbam_feature_mapping.1} parent=1 // pred_region
      _
    $region49: #{cbam_feature_mapping.1} parent=1 // pred_fallthru
      _
    // Predicated region
    $region50: #{cbam_feature_mapping.1} parent=1 // pred_check
      _
    $region51: #{cbam_feature_mapping.1} parent=1 // pred_check_branch
      %51 = sbr.rel (0) target = $region53
    $region52: #{cbam_feature_mapping.1} parent=1 // pred_region
      _
    $region53: #{cbam_feature_mapping.1} parent=1 // pred_fallthru
      _
    // Predicated region
    $region54: #{cbam_feature_mapping.1} parent=1 // pred_check
      _
    $region55: #{cbam_feature_mapping.1} parent=1 // pred_check_branch
      %53 = sbr.rel (0) target = $region57
    $region56: #{cbam_feature_mapping.1} parent=1 // pred_region
      _
    $region57: #{cbam_feature_mapping.1} parent=1 // pred_fallthru
      _
    // Predicated region
    $region58: #{cbam_feature_mapping.1} parent=1 // pred_check
      _
    $region59: #{cbam_feature_mapping.1} parent=1 // pred_check_branch
      %55 = sbr.rel (0) target = $region61
    $region60: #{cbam_feature_mapping.1} parent=1 // pred_region
      _
    $region61: #{cbam_feature_mapping.1} parent=1 // pred_fallthru
      _
    // Predicated region
    $region62: #{cbam_feature_mapping.1} parent=1 // pred_check
      _
    $region63: #{cbam_feature_mapping.1} parent=1 // pred_check_branch
      %57 = sbr.rel (0) target = $region65
    $region64: #{cbam_feature_mapping.1} parent=1 // pred_region
      _
    $region65: #{cbam_feature_mapping.1} parent=1 // pred_fallthru
      _
    // Predicated region
    $region66: #{cbam_feature_mapping.1} parent=1 // pred_check
      _
    $region67: #{cbam_feature_mapping.1} parent=1 // pred_check_branch
      %59 = sbr.rel (0) target = $region69
    $region68: #{cbam_feature_mapping.1} parent=1 // pred_region
      _
    $region69: #{cbam_feature_mapping.1} parent=1 // pred_fallthru
      _
    // Predicated region
    $region70: #{cbam_feature_mapping.1} parent=1 // pred_check
      _
    $region71: #{cbam_feature_mapping.1} parent=1 // pred_check_branch
      %61 = sbr.rel (0) target = $region73
    $region72: #{cbam_feature_mapping.1} parent=1 // pred_region
      _
    $region73: #{cbam_feature_mapping.1} parent=1 // pred_fallthru
      _
    %v62 = vld [vmem:[%s0] sm:$0xf]
    %64 = vrot.lane.b32.xlu0 %v62, 9
    %v65 = vpop.permute.xlu0 %64
    %v67 = vld [vmem:[%s15] sm:$0x1]
    %v68 = vlaneseq
    %v69 = vshrl.u32 %v68, 7
    %v70 = vsub.s32 0, %v69
    %v71 = vrot.slane %v67, %v70
    %v72 = vmul.f32 %v65, %v71
    %73 = vst [vmem:[#allocation2] sm:$0xf] %v72
    %74 = vrot.lane.b32.xlu0 %v62, 8
    %v75 = vpop.permute.xlu0 %74
    %v77 = vld [vmem:[%s15 + $0x1] sm:$0x1]
    %v78 = vlaneseq
    %v79 = vshrl.u32 %v78, 7
    %v80 = vsub.s32 0, %v79
    %v81 = vrot.slane %v77, %v80
    %v82 = vmul.f32 %v75, %v81
    %83 = vst [vmem:[#allocation2 + $0x4] sm:$0xf] %v82
    %84 = vrot.lane.b32.xlu0 %v62, 7
    %v85 = vpop.permute.xlu0 %84
    %v87 = vld [vmem:[%s15 + $0x2] sm:$0x1]
    %v88 = vlaneseq
    %v89 = vshrl.u32 %v88, 7
    %v90 = vsub.s32 0, %v89
    %v91 = vrot.slane %v87, %v90
    %v92 = vmul.f32 %v85, %v91
    %93 = vst [vmem:[#allocation2 + $0x8] sm:$0xf] %v92
    %94 = vrot.lane.b32.xlu0 %v62, 1
    %v95 = vpop.permute.xlu0 %94
    %vm97 = vcmask 7168
    %v98 = vld [vmem:[%s15 + $0x3] sm:$0x1]
    %v99 = vlaneseq
    %v100 = vshrl.u32 %v99, 7
    %v101 = vsub.s32 0, %v100
    %v102 = vrot.slane %v98, %v101
    %v103 = vmul.f32 %v95, %v102
    %104 = vst [vmem:[#allocation2 + $0xc] sm:$0xf] %v103
    %105 = vst [vmem:[#allocation2 + $0x10] sm:$0xf] %v62
    %106 = vrot.lane.b32.xlu0 %v62, 127
    %v107 = vpop.permute.xlu0 %106
    %v109 = vld [vmem:[%s15 + $0x5] sm:$0x1]
    %v110 = vlaneseq
    %v111 = vshrl.u32 %v110, 7
    %v112 = vsub.s32 0, %v111
    %v113 = vrot.slane %v109, %v112
    %v114 = vmul.f32 %v107, %v113
    %115 = vst [vmem:[#allocation2 + $0x14] sm:$0xf] %v114
    %116 = vrot.lane.b32.xlu0 %v62, 121
    %v117 = vpop.permute.xlu0 %116
    %v119 = vld [vmem:[%s15 + $0x6] sm:$0x1]
    %v120 = vlaneseq
    %v121 = vshrl.u32 %v120, 7
    %v122 = vsub.s32 0, %v121
    %v123 = vrot.slane %v119, %v122
    %v124 = vmul.f32 %v117, %v123
    %125 = vst [vmem:[#allocation2 + $0x18] sm:$0xf] %v124
    %126 = vrot.lane.b32.xlu0 %v62, 120
    %v127 = vpop.permute.xlu0 %126
    %v129 = vld [vmem:[%s15 + $0x7] sm:$0x1]
    %v130 = vlaneseq
    %v131 = vshrl.u32 %v130, 7
    %v132 = vsub.s32 0, %v131
    %v133 = vrot.slane %v129, %v132
    %v134 = vmul.f32 %v127, %v133
    %135 = vst [vmem:[#allocation2 + $0x1c] sm:$0xf] %v134
    %136 = vrot.lane.b32.xlu0 %v62, 119
    %v137 = vpop.permute.xlu0 %136
    %v139 = vld [vmem:[%s15 + $0x8] sm:$0x1]
    %v140 = vlaneseq
    %v141 = vshrl.u32 %v140, 7
    %v142 = vsub.s32 0, %v141
    %v143 = vrot.slane %v139, %v142
    %v144 = vmul.f32 %v137, %v143
    %145 = vst [vmem:[#allocation2 + $0x20] sm:$0xf] %v144
    %v146 = vld [vmem:[#allocation2] sm:$0xff]
    %v147 = vld [vmem:[#allocation2 + $0x8] sm:$0xff]
    %v148 = vld [vmem:[#allocation2 + $0x10] sm:$0xff]
    %v149 = vld [vmem:[#allocation2 + $0x18] sm:$0xff]
    %v150 = vld [vmem:[#allocation2 + $0x20] sm:$0xf]
    %v151 = vld [vmem:[%s1] sm:$0xff]
    %v152 = vld [vmem:[%s2] sm:$0xff]
    %154 = vset.pattern.permute.xlu0 0
    %155 = vperm.xlu0 %154, %v152
    %v156 = vpop.permute.xlu0 %155
    %vm158 = vcmask 293888
    %v160 = vsel %vm158, %v151, 0
    %vm162 = vcmask 1043456
    %v164 = vsel %vm162, %v150, 0
    %166 = vmatprep.subr.mxu0 0.0
    %167 = vmatpush1.msra.mxu0 0.0
    %168 = vmatprep.subr.mxu0 0.0
    %169 = vmatpush1.msra.mxu0 0.0
    %170 = vmatprep.subr.mxu0 0.0
    %171 = vmatpush1.msra.mxu0 0.0
    %172 = vmatprep.subr.mxu0 0.0
    %173 = vmatpush1.msra.mxu0 0.0
    %174 = vmatprep.subr.mxu0 0.0
    %175 = vmatpush1.msra.mxu0 0.0
    %176 = vmatprep.subr.mxu0 0.0
    %177 = vmatpush1.msra.mxu0 0.0
    %178 = vmatprep.subr.mxu0 0.0
    %179 = vmatpush1.msra.mxu0 0.0
    %180 = vmatprep.subr.mxu0 0.0
    %181 = vmatpush1.msra.mxu0 0.0
    %182 = vmatprep.subr.mxu0 0.0
    %183 = vmatpush1.msra.mxu0 0.0
    %184 = vmatprep.subr.mxu0 0.0
    %185 = vmatpush1.msra.mxu0 0.0
    %186 = vmatprep.subr.mxu0 0.0
    %187 = vmatpush1.msra.mxu0 0.0
    %188 = vmatprep.subr.mxu0 0.0
    %189 = vmatpush1.msra.mxu0 %v164
    %190 = vmatprep.subr.mxu0 0.0
    %191 = vmatpush1.msra.mxu0 %v149
    %192 = vmatprep.subr.mxu0 0.0
    %193 = vmatpush1.msra.mxu0 %v148
    %194 = vmatprep.subr.mxu0 0.0
    %195 = vmatpush1.msra.mxu0 %v147
    %196 = vmatprep.subr.mxu0 0.0
    %197 = vmatpush1.msra.mxu0 %v146
    %198 = vmatprep.subr.mxu0 0.0
    %199 = vmatpush2.msra.mxu0 0.0
    %200 = vmatprep.subr.mxu0 0.0
    %201 = vmatpush2.msra.mxu0 0.0
    %202 = vmatprep.subr.mxu0 0.0
    %203 = vmatpush2.msra.mxu0 0.0
    %204 = vmatprep.subr.mxu0 0.0
    %205 = vmatpush2.msra.mxu0 0.0
    %206 = vmatprep.subr.mxu0 0.0
    %207 = vmatpush2.msra.mxu0 0.0
    %208 = vmatprep.subr.mxu0 0.0
    %209 = vmatpush2.msra.mxu0 0.0
    %210 = vmatprep.subr.mxu0 0.0
    %211 = vmatpush2.msra.mxu0 0.0
    %212 = vmatprep.subr.mxu0 0.0
    %213 = vmatpush2.msra.mxu0 0.0
    %214 = vmatprep.subr.mxu0 0.0
    %215 = vmatpush2.msra.mxu0 0.0
    %216 = vmatprep.subr.mxu0 0.0
    %217 = vmatpush2.msra.mxu0 0.0
    %218 = vmatprep.subr.mxu0 0.0
    %219 = vmatpush2.msra.mxu0 0.0
    %220 = vmatprep.subr.mxu0 0.0
    %221 = vmatpush2.msra.mxu0 0.0
    %222 = vmatprep.subr.mxu0 0.0
    %223 = vmatpush2.msra.mxu0 0.0
    %224 = vmatprep.subr.mxu0 0.0
    %225 = vmatpush2.msra.mxu0 0.0
    %226 = vmatprep.subr.mxu0 0.0
    %227 = vmatpush2.msra.mxu0 0.0
    %228 = vmatprep.subr.mxu0 0.0
    %229 = vmatpush2.msra.mxu0 0.0
    %230 = vmatprep.mubr.f32.mxu0 0.0
    %231 = vmatmul.mubr.f32.gmra.mxu0 %v160
    %v232 = vpop.f32.mrf.mxu0
    %v233 = vadd.f32 %v156, %v232
    %v234 = vpop.f32.mrf.mxu0
    %235 = vdwg.mxu0
    %v236 = vmax.f32 %v233, 0.0
    %238 = vrot.lane.b32.xlu0 %v236, 9
    %v239 = vpop.permute.xlu0 %238
    %v241 = vld [vmem:[%s15] sm:$0x1]
    %v242 = vlaneseq
    %v243 = vshrl.u32 %v242, 7
    %v244 = vsub.s32 0, %v243
    %v245 = vrot.slane %v241, %v244
    %v246 = vmul.f32 %v239, %v245
    %247 = vst [vmem:[#allocation2] sm:$0xf] %v246
    %248 = vrot.lane.b32.xlu0 %v236, 8
    %v249 = vpop.permute.xlu0 %248
    %v251 = vld [vmem:[%s15 + $0x1] sm:$0x1]
    %v252 = vlaneseq
    %v253 = vshrl.u32 %v252, 7
    %v254 = vsub.s32 0, %v253
    %v255 = vrot.slane %v251, %v254
    %v256 = vmul.f32 %v249, %v255
    %257 = vst [vmem:[#allocation2 + $0x4] sm:$0xf] %v256
    %258 = vrot.lane.b32.xlu0 %v236, 7
    %v259 = vpop.permute.xlu0 %258
    %v261 = vld [vmem:[%s15 + $0x2] sm:$0x1]
    %v262 = vlaneseq
    %v263 = vshrl.u32 %v262, 7
    %v264 = vsub.s32 0, %v263
    %v265 = vrot.slane %v261, %v264
    %v266 = vmul.f32 %v259, %v265
    %267 = vst [vmem:[#allocation2 + $0x8] sm:$0xf] %v266
    %268 = vrot.lane.b32.xlu0 %v236, 1
    %v269 = vpop.permute.xlu0 %268
    %v271 = vld [vmem:[%s15 + $0x3] sm:$0x1]
    %v272 = vlaneseq
    %v273 = vshrl.u32 %v272, 7
    %v274 = vsub.s32 0, %v273
    %v275 = vrot.slane %v271, %v274
    %v276 = vmul.f32 %v269, %v275
    %277 = vst [vmem:[#allocation2 + $0xc] sm:$0xf] %v276
    %278 = vst [vmem:[#allocation2 + $0x10] sm:$0xf] %v236
    %279 = vrot.lane.b32.xlu0 %v236, 127
    %v280 = vpop.permute.xlu0 %279
    %v282 = vld [vmem:[%s15 + $0x5] sm:$0x1]
    %v283 = vlaneseq
    %v284 = vshrl.u32 %v283, 7
    %v285 = vsub.s32 0, %v284
    %v286 = vrot.slane %v282, %v285
    %v287 = vmul.f32 %v280, %v286
    %288 = vst [vmem:[#allocation2 + $0x14] sm:$0xf] %v287
    %289 = vrot.lane.b32.xlu0 %v236, 121
    %v290 = vpop.permute.xlu0 %289
    %v292 = vld [vmem:[%s15 + $0x6] sm:$0x1]
    %v293 = vlaneseq
    %v294 = vshrl.u32 %v293, 7
    %v295 = vsub.s32 0, %v294
    %v296 = vrot.slane %v292, %v295
    %v297 = vmul.f32 %v290, %v296
    %298 = vst [vmem:[#allocation2 + $0x18] sm:$0xf] %v297
    %299 = vrot.lane.b32.xlu0 %v236, 120
    %v300 = vpop.permute.xlu0 %299
    %v302 = vld [vmem:[%s15 + $0x7] sm:$0x1]
    %v303 = vlaneseq
    %v304 = vshrl.u32 %v303, 7
    %v305 = vsub.s32 0, %v304
    %v306 = vrot.slane %v302, %v305
    %v307 = vmul.f32 %v300, %v306
    %308 = vst [vmem:[#allocation2 + $0x1c] sm:$0xf] %v307
    %309 = vrot.lane.b32.xlu0 %v236, 119
    %v310 = vpop.permute.xlu0 %309
    %v312 = vld [vmem:[%s15 + $0x8] sm:$0x1]
    %v313 = vlaneseq
    %v314 = vshrl.u32 %v313, 7
    %v315 = vsub.s32 0, %v314
    %v316 = vrot.slane %v312, %v315
    %v317 = vmul.f32 %v310, %v316
    %318 = vst [vmem:[#allocation2 + $0x20] sm:$0xf] %v317
    %v319 = vld [vmem:[#allocation2] sm:$0xff]
    %v320 = vld [vmem:[#allocation2 + $0x8] sm:$0xff]
    %v321 = vld [vmem:[#allocation2 + $0x10] sm:$0xff]
    %v322 = vld [vmem:[#allocation2 + $0x18] sm:$0xff]
    %v323 = vld [vmem:[#allocation2 + $0x20] sm:$0xf]
    %v324 = vld [vmem:[%s3] sm:$0xf]
    %v325 = vld [vmem:[%s4] sm:$0xf]
    %327 = vset.pattern.permute.xlu0 0
    %328 = vperm.xlu0 %327, %v325
    %v329 = vpop.permute.xlu0 %328
    %v332 = vsel %vm158, %v324, 0
    %v335 = vsel %vm162, %v323, 0
    %337 = vmatprep.subr.mxu0 0.0
    %338 = vmatpush1.msra.mxu0 0.0
    %339 = vmatprep.subr.mxu0 0.0
    %340 = vmatpush1.msra.mxu0 0.0
    %341 = vmatprep.subr.mxu0 0.0
    %342 = vmatpush1.msra.mxu0 0.0
    %343 = vmatprep.subr.mxu0 0.0
    %344 = vmatpush1.msra.mxu0 0.0
    %345 = vmatprep.subr.mxu0 0.0
    %346 = vmatpush1.msra.mxu0 0.0
    %347 = vmatprep.subr.mxu0 0.0
    %348 = vmatpush1.msra.mxu0 0.0
    %349 = vmatprep.subr.mxu0 0.0
    %350 = vmatpush1.msra.mxu0 0.0
    %351 = vmatprep.subr.mxu0 0.0
    %352 = vmatpush1.msra.mxu0 0.0
    %353 = vmatprep.subr.mxu0 0.0
    %354 = vmatpush1.msra.mxu0 0.0
    %355 = vmatprep.subr.mxu0 0.0
    %356 = vmatpush1.msra.mxu0 0.0
    %357 = vmatprep.subr.mxu0 0.0
    %358 = vmatpush1.msra.mxu0 0.0
    %359 = vmatprep.subr.mxu0 0.0
    %360 = vmatpush1.msra.mxu0 %v335
    %361 = vmatprep.subr.mxu0 0.0
    %362 = vmatpush1.msra.mxu0 %v322
    %363 = vmatprep.subr.mxu0 0.0
    %364 = vmatpush1.msra.mxu0 %v321
    %365 = vmatprep.subr.mxu0 0.0
    %366 = vmatpush1.msra.mxu0 %v320
    %367 = vmatprep.subr.mxu0 0.0
    %368 = vmatpush1.msra.mxu0 %v319
    %369 = vmatprep.subr.mxu0 0.0
    %370 = vmatpush2.msra.mxu0 0.0
    %371 = vmatprep.subr.mxu0 0.0
    %372 = vmatpush2.msra.mxu0 0.0
    %373 = vmatprep.subr.mxu0 0.0
    %374 = vmatpush2.msra.mxu0 0.0
    %375 = vmatprep.subr.mxu0 0.0
    %376 = vmatpush2.msra.mxu0 0.0
    %377 = vmatprep.subr.mxu0 0.0
    %378 = vmatpush2.msra.mxu0 0.0
    %379 = vmatprep.subr.mxu0 0.0
    %380 = vmatpush2.msra.mxu0 0.0
    %381 = vmatprep.subr.mxu0 0.0
    %382 = vmatpush2.msra.mxu0 0.0
    %383 = vmatprep.subr.mxu0 0.0
    %384 = vmatpush2.msra.mxu0 0.0
    %385 = vmatprep.subr.mxu0 0.0
    %386 = vmatpush2.msra.mxu0 0.0
    %387 = vmatprep.subr.mxu0 0.0
    %388 = vmatpush2.msra.mxu0 0.0
    %389 = vmatprep.subr.mxu0 0.0
    %390 = vmatpush2.msra.mxu0 0.0
    %391 = vmatprep.subr.mxu0 0.0
    %392 = vmatpush2.msra.mxu0 0.0
    %393 = vmatprep.subr.mxu0 0.0
    %394 = vmatpush2.msra.mxu0 0.0
    %395 = vmatprep.subr.mxu0 0.0
    %396 = vmatpush2.msra.mxu0 0.0
    %397 = vmatprep.subr.mxu0 0.0
    %398 = vmatpush2.msra.mxu0 0.0
    %399 = vmatprep.subr.mxu0 0.0
    %400 = vmatpush2.msra.mxu0 0.0
    %401 = vmatprep.mubr.f32.mxu0 0.0
    %402 = vmatmul.mubr.f32.gmra.mxu0 %v332
    %v403 = vpop.f32.mrf.mxu0
    %v404 = vadd.f32 %v329, %v403
    %v405 = vpop.f32.mrf.mxu0
    %406 = vdwg.mxu0
    %v407 = vmax.f32 %v404, 0.0
    %v408 = vrot.slane %v236, 4
    %v410 = vadd.f32 %v407, %v408
    %vm411 = vcmask 519168
    %v412 = vsel %vm411, %v410, 0.0
    %413 = vadd.xlane.f32.xlu0 %v412
    %v414 = vpop.xlane.xlu0 %413
    %v415 = vrcp.pop 64.0
    %v416 = vmul.f32 %v414, %v415
    %418 = vrot.lane.b32.xlu0 %v410, 64
    %v419 = vpop.permute.xlu0 %418
    %v421 = vsel %vm411, %v419, 0.0
    %422 = vadd.xlane.f32.xlu0 %v421
    %v423 = vpop.xlane.xlu0 %422
    %v424 = vmul.f32 %v423, %v415
    %v425 = vsel %vm411, %v410, -inf
    %426 = vmax.xlane.f32.xlu0 %v425
    %v427 = vpop.xlane.xlu0 %426
    %vm428 = vcmask 1043968
    %v429 = vsel %vm428, %v410, -inf
    %430 = vmax.xlane.f32.xlu0 %v429
    %v431 = vpop.xlane.xlu0 %430
    %v432 = vsel %vm97, %v416, %v424
    %vm433 = vcmask 15360
    %v434 = vsel %vm433, %v432, %v427
    %vm435 = vcmask 23552
    %v436 = vsel %vm435, %v434, %v431
    %v437 = vld [vmem:[%s5] sm:$0x3]
    %v438 = vld [vmem:[%s6] sm:$0x3]
    %440 = vset.pattern.permute.xlu0 0
    %441 = vperm.xlu0 %440, %v438
    %v442 = vpop.permute.xlu0 %441
    %vm444 = vcmask 31744
    %v446 = vsel %vm444, %v437, 0
    %v449 = vsel %vm162, %v436, 0
    %451 = vmatprep.subr.mxu0 0.0
    %452 = vmatpush1.msra.mxu0 0.0
    %453 = vmatprep.subr.mxu0 0.0
    %454 = vmatpush1.msra.mxu0 0.0
    %455 = vmatprep.subr.mxu0 0.0
    %456 = vmatpush1.msra.mxu0 0.0
    %457 = vmatprep.subr.mxu0 0.0
    %458 = vmatpush1.msra.mxu0 0.0
    %459 = vmatprep.subr.mxu0 0.0
    %460 = vmatpush1.msra.mxu0 0.0
    %461 = vmatprep.subr.mxu0 0.0
    %462 = vmatpush1.msra.mxu0 0.0
    %463 = vmatprep.subr.mxu0 0.0
    %464 = vmatpush1.msra.mxu0 0.0
    %465 = vmatprep.subr.mxu0 0.0
    %466 = vmatpush1.msra.mxu0 0.0
    %467 = vmatprep.subr.mxu0 0.0
    %468 = vmatpush1.msra.mxu0 0.0
    %469 = vmatprep.subr.mxu0 0.0
    %470 = vmatpush1.msra.mxu0 0.0
    %471 = vmatprep.subr.mxu0 0.0
    %472 = vmatpush1.msra.mxu0 0.0
    %473 = vmatprep.subr.mxu0 0.0
    %474 = vmatpush1.msra.mxu0 0.0
    %475 = vmatprep.subr.mxu0 0.0
    %476 = vmatpush1.msra.mxu0 0.0
    %477 = vmatprep.subr.mxu0 0.0
    %478 = vmatpush1.msra.mxu0 0.0
    %479 = vmatprep.subr.mxu0 0.0
    %480 = vmatpush1.msra.mxu0 0.0
    %481 = vmatprep.subr.mxu0 0.0
    %482 = vmatpush1.msra.mxu0 %v449
    %483 = vmatprep.subr.mxu0 0.0
    %484 = vmatpush2.msra.mxu0 0.0
    %485 = vmatprep.subr.mxu0 0.0
    %486 = vmatpush2.msra.mxu0 0.0
    %487 = vmatprep.subr.mxu0 0.0
    %488 = vmatpush2.msra.mxu0 0.0
    %489 = vmatprep.subr.mxu0 0.0
    %490 = vmatpush2.msra.mxu0 0.0
    %491 = vmatprep.subr.mxu0 0.0
    %492 = vmatpush2.msra.mxu0 0.0
    %493 = vmatprep.subr.mxu0 0.0
    %494 = vmatpush2.msra.mxu0 0.0
    %495 = vmatprep.subr.mxu0 0.0
    %496 = vmatpush2.msra.mxu0 0.0
    %497 = vmatprep.subr.mxu0 0.0
    %498 = vmatpush2.msra.mxu0 0.0
    %499 = vmatprep.subr.mxu0 0.0
    %500 = vmatpush2.msra.mxu0 0.0
    %501 = vmatprep.subr.mxu0 0.0
    %502 = vmatpush2.msra.mxu0 0.0
    %503 = vmatprep.subr.mxu0 0.0
    %504 = vmatpush2.msra.mxu0 0.0
    %505 = vmatprep.subr.mxu0 0.0
    %506 = vmatpush2.msra.mxu0 0.0
    %507 = vmatprep.subr.mxu0 0.0
    %508 = vmatpush2.msra.mxu0 0.0
    %509 = vmatprep.subr.mxu0 0.0
    %510 = vmatpush2.msra.mxu0 0.0
    %511 = vmatprep.subr.mxu0 0.0
    %512 = vmatpush2.msra.mxu0 0.0
    %513 = vmatprep.subr.mxu0 0.0
    %514 = vmatpush2.msra.mxu0 0.0
    %515 = vmatprep.mubr.f32.mxu0 0.0
    %516 = vmatmul.mubr.f32.gmra.mxu0 %v446
    %v517 = vpop.f32.mrf.mxu0
    %v518 = vadd.f32 %v442, %v517
    %v519 = vpop.f32.mrf.mxu0
    %520 = vdwg.mxu0
    %v521 = vmax.f32 %v518, 0.0
    %v522 = vld [vmem:[%s7] sm:$0xf]
    %v523 = vld [vmem:[%s8] sm:$0xf]
    %525 = vset.pattern.permute.xlu0 0
    %526 = vperm.xlu0 %525, %v523
    %v527 = vpop.permute.xlu0 %526
    %v530 = vsel %vm433, %v522, 0
    %vm532 = vcmask 1041408
    %v534 = vsel %vm532, %v521, 0
    %536 = vmatprep.subr.mxu0 0.0
    %537 = vmatpush1.msra.mxu0 0.0
    %538 = vmatprep.subr.mxu0 0.0
    %539 = vmatpush1.msra.mxu0 0.0
    %540 = vmatprep.subr.mxu0 0.0
    %541 = vmatpush1.msra.mxu0 0.0
    %542 = vmatprep.subr.mxu0 0.0
    %543 = vmatpush1.msra.mxu0 0.0
    %544 = vmatprep.subr.mxu0 0.0
    %545 = vmatpush1.msra.mxu0 0.0
    %546 = vmatprep.subr.mxu0 0.0
    %547 = vmatpush1.msra.mxu0 0.0
    %548 = vmatprep.subr.mxu0 0.0
    %549 = vmatpush1.msra.mxu0 0.0
    %550 = vmatprep.subr.mxu0 0.0
    %551 = vmatpush1.msra.mxu0 0.0
    %552 = vmatprep.subr.mxu0 0.0
    %553 = vmatpush1.msra.mxu0 0.0
    %554 = vmatprep.subr.mxu0 0.0
    %555 = vmatpush1.msra.mxu0 0.0
    %556 = vmatprep.subr.mxu0 0.0
    %557 = vmatpush1.msra.mxu0 0.0
    %558 = vmatprep.subr.mxu0 0.0
    %559 = vmatpush1.msra.mxu0 0.0
    %560 = vmatprep.subr.mxu0 0.0
    %561 = vmatpush1.msra.mxu0 0.0
    %562 = vmatprep.subr.mxu0 0.0
    %563 = vmatpush1.msra.mxu0 0.0
    %564 = vmatprep.subr.mxu0 0.0
    %565 = vmatpush1.msra.mxu0 0.0
    %566 = vmatprep.subr.mxu0 0.0
    %567 = vmatpush1.msra.mxu0 %v534
    %568 = vmatprep.subr.mxu0 0.0
    %569 = vmatpush2.msra.mxu0 0.0
    %570 = vmatprep.subr.mxu0 0.0
    %571 = vmatpush2.msra.mxu0 0.0
    %572 = vmatprep.subr.mxu0 0.0
    %573 = vmatpush2.msra.mxu0 0.0
    %574 = vmatprep.subr.mxu0 0.0
    %575 = vmatpush2.msra.mxu0 0.0
    %576 = vmatprep.subr.mxu0 0.0
    %577 = vmatpush2.msra.mxu0 0.0
    %578 = vmatprep.subr.mxu0 0.0
    %579 = vmatpush2.msra.mxu0 0.0
    %580 = vmatprep.subr.mxu0 0.0
    %581 = vmatpush2.msra.mxu0 0.0
    %582 = vmatprep.subr.mxu0 0.0
    %583 = vmatpush2.msra.mxu0 0.0
    %584 = vmatprep.subr.mxu0 0.0
    %585 = vmatpush2.msra.mxu0 0.0
    %586 = vmatprep.subr.mxu0 0.0
    %587 = vmatpush2.msra.mxu0 0.0
    %588 = vmatprep.subr.mxu0 0.0
    %589 = vmatpush2.msra.mxu0 0.0
    %590 = vmatprep.subr.mxu0 0.0
    %591 = vmatpush2.msra.mxu0 0.0
    %592 = vmatprep.subr.mxu0 0.0
    %593 = vmatpush2.msra.mxu0 0.0
    %594 = vmatprep.subr.mxu0 0.0
    %595 = vmatpush2.msra.mxu0 0.0
    %596 = vmatprep.subr.mxu0 0.0
    %597 = vmatpush2.msra.mxu0 0.0
    %598 = vmatprep.subr.mxu0 0.0
    %599 = vmatpush2.msra.mxu0 0.0
    %600 = vmatprep.mubr.f32.mxu0 0.0
    %601 = vmatmul.mubr.f32.gmra.mxu0 %v530
    %v602 = vpop.f32.mrf.mxu0
    %v603 = vadd.f32 %v527, %v602
    %v604 = vpop.f32.mrf.mxu0
    %605 = vdwg.mxu0
    %607 = vrot.lane.b32.xlu0 %v603, 126
    %v608 = vpop.permute.xlu0 %607
    %v610 = vadd.f32 %v603, %v608
    %v611 = vand.u32 2147483647, %v610
    %v612 = vsub.f32 0.0, %v611
    %v613 = vmul.f32 %v612, 1.442695
    %v614 = vpow.pop %v613
    %vm615 = vcmp.ge.f32.partialorder %v610, 0.0
    %v616 = vadd.f32 %v614, 1.0
    %v617 = vrcp.pop %v616
    %v618 = vmul.f32 1.0, %v617
    %v619 = vmul.f32 %v614, %v617
    %v620 = vsel %vm615, %v618, %v619
    %622 = vset.pattern.permute.xlu0 0
    %623 = vperm.xlu0 %622, %v620
    %v624 = vpop.permute.xlu0 %623
    %v626 = vmul.f32 %v410, %v624
    %627 = vset.pattern.permute.xlu0 1
    %628 = vperm.xlu0 %627, %v620
    %v629 = vpop.permute.xlu0 %628
    %v631 = vmul.f32 %v410, %v629
    %vm632 = vcmask 523264
    %v633 = vsel %vm632, %v626, %v631
    %v634 = vsel %vm162, %v633, 0.0
    %v635 = vrot.slane %v634, 4
    %v636 = vadd.f32 %v634, %v635
    %v637 = vrot.slane %v636, 2
    %v638 = vadd.f32 %v636, %v637
    %v639 = vrot.slane %v638, 1
    %v640 = vadd.f32 %v638, %v639
    %v641 = vrcp.pop 4.0
    %v642 = vmul.f32 %v640, %v641
    %v643 = vsel %vm162, %v633, -inf
    %v644 = vrot.slane %v643, 4
    %v645 = vmax.f32 %v643, %v644
    %v646 = vrot.slane %v645, 2
    %v647 = vmax.f32 %v645, %v646
    %v648 = vrot.slane %v647, 1
    %v649 = vmax.f32 %v647, %v648
    %vm650 = vcmask 1040384
    %v651 = vsel %vm650, %v642, %v649
    %v652 = vld [vmem:[%s9] sm:$0x3]
    %654 = vrot.lane.b32.xlu0 %v651, 27
    %v655 = vpop.permute.xlu0 %654
    %v657 = vld [vmem:[%s16] sm:$0x1]
    %v658 = vlaneseq
    %v659 = vshrl.u32 %v658, 7
    %v660 = vsub.s32 0, %v659
    %v661 = vrot.slane %v657, %v660
    %v662 = vmul.f32 %v655, %v661
    %664 = vset.pattern.permute.xlu0 0
    %665 = vperm.xlu0 %664, %v652
    %v666 = vpop.permute.xlu0 %665
    %v668 = vmul.f32 %v662, %v666
    %v669 = vadd.f32 %v668, 0.0
    %670 = vrot.lane.b32.xlu0 %v651, 26
    %v671 = vpop.permute.xlu0 %670
    %v673 = vld [vmem:[%s16 + $0x1] sm:$0x1]
    %v674 = vlaneseq
    %v675 = vshrl.u32 %v674, 7
    %v676 = vsub.s32 0, %v675
    %v677 = vrot.slane %v673, %v676
    %v678 = vmul.f32 %v671, %v677
    %679 = vset.pattern.permute.xlu0 1
    %680 = vperm.xlu0 %679, %v652
    %v681 = vpop.permute.xlu0 %680
    %v683 = vmul.f32 %v678, %v681
    %v684 = vadd.f32 %v669, %v683
    %685 = vrot.lane.b32.xlu0 %v651, 25
    %v686 = vpop.permute.xlu0 %685
    %v688 = vld [vmem:[%s16 + $0x2] sm:$0x1]
    %v689 = vlaneseq
    %v690 = vshrl.u32 %v689, 7
    %v691 = vsub.s32 0, %v690
    %v692 = vrot.slane %v688, %v691
    %v693 = vmul.f32 %v686, %v692
    %694 = vset.pattern.permute.xlu0 2
    %695 = vperm.xlu0 %694, %v652
    %v696 = vpop.permute.xlu0 %695
    %v698 = vmul.f32 %v693, %v696
    %v699 = vadd.f32 %v684, %v698
    %700 = vrot.lane.b32.xlu0 %v651, 24
    %v701 = vpop.permute.xlu0 %700
    %v703 = vld [vmem:[%s16 + $0x3] sm:$0x1]
    %v704 = vlaneseq
    %v705 = vshrl.u32 %v704, 7
    %v706 = vsub.s32 0, %v705
    %v707 = vrot.slane %v703, %v706
    %v708 = vmul.f32 %v701, %v707
    %709 = vset.pattern.permute.xlu0 3
    %710 = vperm.xlu0 %709, %v652
    %v711 = vpop.permute.xlu0 %710
    %v713 = vmul.f32 %v708, %v711
    %v714 = vadd.f32 %v699, %v713
    %715 = vrot.lane.b32.xlu0 %v651, 23
    %v716 = vpop.permute.xlu0 %715
    %v718 = vld [vmem:[%s16 + $0x4] sm:$0x1]
    %v719 = vlaneseq
    %v720 = vshrl.u32 %v719, 7
    %v721 = vsub.s32 0, %v720
    %v722 = vrot.slane %v718, %v721
    %v723 = vmul.f32 %v716, %v722
    %724 = vset.pattern.permute.xlu0 4
    %725 = vperm.xlu0 %724, %v652
    %v726 = vpop.permute.xlu0 %725
    %v728 = vmul.f32 %v723, %v726
    %v729 = vadd.f32 %v714, %v728
    %730 = vrot.lane.b32.xlu0 %v651, 22
    %v731 = vpop.permute.xlu0 %730
    %v733 = vld [vmem:[%s16 + $0x5] sm:$0x1]
    %v734 = vlaneseq
    %v735 = vshrl.u32 %v734, 7
    %v736 = vsub.s32 0, %v735
    %v737 = vrot.slane %v733, %v736
    %v738 = vmul.f32 %v731, %v737
    %739 = vset.pattern.permute.xlu0 5
    %740 = vperm.xlu0 %739, %v652
    %v741 = vpop.permute.xlu0 %740
    %v743 = vmul.f32 %v738, %v741
    %v744 = vadd.f32 %v729, %v743
    %745 = vrot.lane.b32.xlu0 %v651, 21
    %v746 = vpop.permute.xlu0 %745
    %v748 = vld [vmem:[%s16 + $0x6] sm:$0x1]
    %v749 = vlaneseq
    %v750 = vshrl.u32 %v749, 7
    %v751 = vsub.s32 0, %v750
    %v752 = vrot.slane %v748, %v751
    %v753 = vmul.f32 %v746, %v752
    %754 = vset.pattern.permute.xlu0 6
    %755 = vperm.xlu0 %754, %v652
    %v756 = vpop.permute.xlu0 %755
    %v758 = vmul.f32 %v753, %v756
    %v759 = vadd.f32 %v744, %v758
    %760 = vrot.lane.b32.xlu0 %v651, 19
    %v761 = vpop.permute.xlu0 %760
    %v763 = vld [vmem:[%s16 + $0x7] sm:$0x1]
    %v764 = vlaneseq
    %v765 = vshrl.u32 %v764, 7
    %v766 = vsub.s32 0, %v765
    %v767 = vrot.slane %v763, %v766
    %v768 = vmul.f32 %v761, %v767
    %769 = vset.pattern.permute.xlu0 7
    %770 = vperm.xlu0 %769, %v652
    %v771 = vpop.permute.xlu0 %770
    %v773 = vmul.f32 %v768, %v771
    %v774 = vadd.f32 %v759, %v773
    %775 = vrot.lane.b32.xlu0 %v651, 18
    %v776 = vpop.permute.xlu0 %775
    %v778 = vld [vmem:[%s16 + $0x8] sm:$0x1]
    %v779 = vlaneseq
    %v780 = vshrl.u32 %v779, 7
    %v781 = vsub.s32 0, %v780
    %v782 = vrot.slane %v778, %v781
    %v783 = vmul.f32 %v776, %v782
    %784 = vset.pattern.permute.xlu0 8
    %785 = vperm.xlu0 %784, %v652
    %v786 = vpop.permute.xlu0 %785
    %v788 = vmul.f32 %v783, %v786
    %v789 = vadd.f32 %v774, %v788
    %790 = vrot.lane.b32.xlu0 %v651, 17
    %v791 = vpop.permute.xlu0 %790
    %v793 = vld [vmem:[%s16 + $0x9] sm:$0x1]
    %v794 = vlaneseq
    %v795 = vshrl.u32 %v794, 7
    %v796 = vsub.s32 0, %v795
    %v797 = vrot.slane %v793, %v796
    %v798 = vmul.f32 %v791, %v797
    %799 = vset.pattern.permute.xlu0 9
    %800 = vperm.xlu0 %799, %v652
    %v801 = vpop.permute.xlu0 %800
    %v803 = vmul.f32 %v798, %v801
    %v804 = vadd.f32 %v789, %v803
    %805 = vrot.lane.b32.xlu0 %v651, 16
    %v806 = vpop.permute.xlu0 %805
    %vm808 = vcmask 130048
    %v809 = vld [vmem:[%s16 + $0xa] sm:$0x1]
    %v810 = vlaneseq
    %v811 = vshrl.u32 %v810, 7
    %v812 = vsub.s32 0, %v811
    %v813 = vrot.slane %v809, %v812
    %v814 = vmul.f32 %v806, %v813
    %815 = vset.pattern.permute.xlu0 10
    %816 = vperm.xlu0 %815, %v652
    %v817 = vpop.permute.xlu0 %816
    %v819 = vmul.f32 %v814, %v817
    %v820 = vadd.f32 %v804, %v819
    %821 = vrot.lane.b32.xlu0 %v651, 15
    %v822 = vpop.permute.xlu0 %821
    %v824 = vld [vmem:[%s16 + $0xb] sm:$0x1]
    %v825 = vlaneseq
    %v826 = vshrl.u32 %v825, 7
    %v827 = vsub.s32 0, %v826
    %v828 = vrot.slane %v824, %v827
    %v829 = vmul.f32 %v822, %v828
    %830 = vset.pattern.permute.xlu0 11
    %831 = vperm.xlu0 %830, %v652
    %v832 = vpop.permute.xlu0 %831
    %v834 = vmul.f32 %v829, %v832
    %v835 = vadd.f32 %v820, %v834
    %836 = vrot.lane.b32.xlu0 %v651, 14
    %v837 = vpop.permute.xlu0 %836
    %v839 = vld [vmem:[%s16 + $0xc] sm:$0x1]
    %v840 = vlaneseq
    %v841 = vshrl.u32 %v840, 7
    %v842 = vsub.s32 0, %v841
    %v843 = vrot.slane %v839, %v842
    %v844 = vmul.f32 %v837, %v843
    %845 = vset.pattern.permute.xlu0 12
    %846 = vperm.xlu0 %845, %v652
    %v847 = vpop.permute.xlu0 %846
    %v849 = vmul.f32 %v844, %v847
    %v850 = vadd.f32 %v835, %v849
    %851 = vrot.lane.b32.xlu0 %v651, 13
    %v852 = vpop.permute.xlu0 %851
    %v854 = vld [vmem:[%s16 + $0xd] sm:$0x1]
    %v855 = vlaneseq
    %v856 = vshrl.u32 %v855, 7
    %v857 = vsub.s32 0, %v856
    %v858 = vrot.slane %v854, %v857
    %v859 = vmul.f32 %v852, %v858
    %860 = vset.pattern.permute.xlu0 13
    %861 = vperm.xlu0 %860, %v652
    %v862 = vpop.permute.xlu0 %861
    %v864 = vmul.f32 %v859, %v862
    %v865 = vadd.f32 %v850, %v864
    %866 = vrot.lane.b32.xlu0 %v651, 11
    %v867 = vpop.permute.xlu0 %866
    %v869 = vld [vmem:[%s16 + $0xe] sm:$0x1]
    %v870 = vlaneseq
    %v871 = vshrl.u32 %v870, 7
    %v872 = vsub.s32 0, %v871
    %v873 = vrot.slane %v869, %v872
    %v874 = vmul.f32 %v867, %v873
    %875 = vset.pattern.permute.xlu0 14
    %876 = vperm.xlu0 %875, %v652
    %v877 = vpop.permute.xlu0 %876
    %v879 = vmul.f32 %v874, %v877
    %v880 = vadd.f32 %v865, %v879
    %881 = vrot.lane.b32.xlu0 %v651, 10
    %v882 = vpop.permute.xlu0 %881
    %v884 = vld [vmem:[%s16 + $0xf] sm:$0x1]
    %v885 = vlaneseq
    %v886 = vshrl.u32 %v885, 7
    %v887 = vsub.s32 0, %v886
    %v888 = vrot.slane %v884, %v887
    %v889 = vmul.f32 %v882, %v888
    %890 = vset.pattern.permute.xlu0 15
    %891 = vperm.xlu0 %890, %v652
    %v892 = vpop.permute.xlu0 %891
    %v894 = vmul.f32 %v889, %v892
    %v895 = vadd.f32 %v880, %v894
    %896 = vrot.lane.b32.xlu0 %v651, 9
    %v897 = vpop.permute.xlu0 %896
    %v899 = vld [vmem:[%s16 + $0x10] sm:$0x1]
    %v900 = vlaneseq
    %v901 = vshrl.u32 %v900, 7
    %v902 = vsub.s32 0, %v901
    %v903 = vrot.slane %v899, %v902
    %v904 = vmul.f32 %v897, %v903
    %905 = vset.pattern.permute.xlu0 16
    %906 = vperm.xlu0 %905, %v652
    %v907 = vpop.permute.xlu0 %906
    %v909 = vmul.f32 %v904, %v907
    %v910 = vadd.f32 %v895, %v909
    %911 = vrot.lane.b32.xlu0 %v651, 8
    %v912 = vpop.permute.xlu0 %911
    %v914 = vld [vmem:[%s16 + $0x11] sm:$0x1]
    %v915 = vlaneseq
    %v916 = vshrl.u32 %v915, 7
    %v917 = vsub.s32 0, %v916
    %v918 = vrot.slane %v914, %v917
    %v919 = vmul.f32 %v912, %v918
    %920 = vset.pattern.permute.xlu0 17
    %921 = vperm.xlu0 %920, %v652
    %v922 = vpop.permute.xlu0 %921
    %v924 = vmul.f32 %v919, %v922
    %v925 = vadd.f32 %v910, %v924
    %926 = vrot.lane.b32.xlu0 %v651, 7
    %v927 = vpop.permute.xlu0 %926
    %v929 = vld [vmem:[%s16 + $0x12] sm:$0x1]
    %v930 = vlaneseq
    %v931 = vshrl.u32 %v930, 7
    %v932 = vsub.s32 0, %v931
    %v933 = vrot.slane %v929, %v932
    %v934 = vmul.f32 %v927, %v933
    %935 = vset.pattern.permute.xlu0 18
    %936 = vperm.xlu0 %935, %v652
    %v937 = vpop.permute.xlu0 %936
    %v939 = vmul.f32 %v934, %v937
    %v940 = vadd.f32 %v925, %v939
    %941 = vrot.lane.b32.xlu0 %v651, 6
    %v942 = vpop.permute.xlu0 %941
    %v944 = vld [vmem:[%s16 + $0x13] sm:$0x1]
    %v945 = vlaneseq
    %v946 = vshrl.u32 %v945, 7
    %v947 = vsub.s32 0, %v946
    %v948 = vrot.slane %v944, %v947
    %v949 = vmul.f32 %v942, %v948
    %950 = vset.pattern.permute.xlu0 19
    %951 = vperm.xlu0 %950, %v652
    %v952 = vpop.permute.xlu0 %951
    %v954 = vmul.f32 %v949, %v952
    %v955 = vadd.f32 %v940, %v954
    %956 = vrot.lane.b32.xlu0 %v651, 5
    %v957 = vpop.permute.xlu0 %956
    %v959 = vld [vmem:[%s16 + $0x14] sm:$0x1]
    %v960 = vlaneseq
    %v961 = vshrl.u32 %v960, 7
    %v962 = vsub.s32 0, %v961
    %v963 = vrot.slane %v959, %v962
    %v964 = vmul.f32 %v957, %v963
    %965 = vset.pattern.permute.xlu0 20
    %966 = vperm.xlu0 %965, %v652
    %v967 = vpop.permute.xlu0 %966
    %v969 = vmul.f32 %v964, %v967
    %v970 = vadd.f32 %v955, %v969
    %971 = vrot.lane.b32.xlu0 %v651, 3
    %v972 = vpop.permute.xlu0 %971
    %v974 = vld [vmem:[%s16 + $0x15] sm:$0x1]
    %v975 = vlaneseq
    %v976 = vshrl.u32 %v975, 7
    %v977 = vsub.s32 0, %v976
    %v978 = vrot.slane %v974, %v977
    %v979 = vmul.f32 %v972, %v978
    %980 = vset.pattern.permute.xlu0 21
    %981 = vperm.xlu0 %980, %v652
    %v982 = vpop.permute.xlu0 %981
    %v984 = vmul.f32 %v979, %v982
    %v985 = vadd.f32 %v970, %v984
    %986 = vrot.lane.b32.xlu0 %v651, 2
    %v987 = vpop.permute.xlu0 %986
    %v989 = vld [vmem:[%s16 + $0x16] sm:$0x1]
    %v990 = vlaneseq
    %v991 = vshrl.u32 %v990, 7
    %v992 = vsub.s32 0, %v991
    %v993 = vrot.slane %v989, %v992
    %v994 = vmul.f32 %v987, %v993
    %995 = vset.pattern.permute.xlu0 22
    %996 = vperm.xlu0 %995, %v652
    %v997 = vpop.permute.xlu0 %996
    %v999 = vmul.f32 %v994, %v997
    %v1000 = vadd.f32 %v985, %v999
    %1001 = vrot.lane.b32.xlu0 %v651, 1
    %v1002 = vpop.permute.xlu0 %1001
    %v1004 = vld [vmem:[%s16 + $0x17] sm:$0x1]
    %v1005 = vlaneseq
    %v1006 = vshrl.u32 %v1005, 7
    %v1007 = vsub.s32 0, %v1006
    %v1008 = vrot.slane %v1004, %v1007
    %v1009 = vmul.f32 %v1002, %v1008
    %1010 = vset.pattern.permute.xlu0 23
    %1011 = vperm.xlu0 %1010, %v652
    %v1012 = vpop.permute.xlu0 %1011
    %v1014 = vmul.f32 %v1009, %v1012
    %v1015 = vadd.f32 %v1000, %v1014
    %1016 = vset.pattern.permute.xlu0 24
    %1017 = vperm.xlu0 %1016, %v652
    %v1018 = vpop.permute.xlu0 %1017
    %v1020 = vmul.f32 %v651, %v1018
    %v1021 = vadd.f32 %v1015, %v1020
    %1022 = vrot.lane.b32.xlu0 %v651, 127
    %v1023 = vpop.permute.xlu0 %1022
    %v1025 = vld [vmem:[%s16 + $0x19] sm:$0x1]
    %v1026 = vlaneseq
    %v1027 = vshrl.u32 %v1026, 7
    %v1028 = vsub.s32 0, %v1027
    %v1029 = vrot.slane %v1025, %v1028
    %v1030 = vmul.f32 %v1023, %v1029
    %1031 = vset.pattern.permute.xlu0 25
    %1032 = vperm.xlu0 %1031, %v652
    %v1033 = vpop.permute.xlu0 %1032
    %v1035 = vmul.f32 %v1030, %v1033
    %v1036 = vadd.f32 %v1021, %v1035
    %1037 = vrot.lane.b32.xlu0 %v651, 126
    %v1038 = vpop.permute.xlu0 %1037
    %v1040 = vld [vmem:[%s16 + $0x1a] sm:$0x1]
    %v1041 = vlaneseq
    %v1042 = vshrl.u32 %v1041, 7
    %v1043 = vsub.s32 0, %v1042
    %v1044 = vrot.slane %v1040, %v1043
    %v1045 = vmul.f32 %v1038, %v1044
    %1046 = vset.pattern.permute.xlu0 26
    %1047 = vperm.xlu0 %1046, %v652
    %v1048 = vpop.permute.xlu0 %1047
    %v1050 = vmul.f32 %v1045, %v1048
    %v1051 = vadd.f32 %v1036, %v1050
    %1052 = vrot.lane.b32.xlu0 %v651, 125
    %v1053 = vpop.permute.xlu0 %1052
    %v1055 = vld [vmem:[%s16 + $0x1b] sm:$0x1]
    %v1056 = vlaneseq
    %v1057 = vshrl.u32 %v1056, 7
    %v1058 = vsub.s32 0, %v1057
    %v1059 = vrot.slane %v1055, %v1058
    %v1060 = vmul.f32 %v1053, %v1059
    %1061 = vset.pattern.permute.xlu0 27
    %1062 = vperm.xlu0 %1061, %v652
    %v1063 = vpop.permute.xlu0 %1062
    %v1065 = vmul.f32 %v1060, %v1063
    %v1066 = vadd.f32 %v1051, %v1065
    %1067 = vrot.lane.b32.xlu0 %v651, 123
    %v1068 = vpop.permute.xlu0 %1067
    %v1070 = vld [vmem:[%s16 + $0x1c] sm:$0x1]
    %v1071 = vlaneseq
    %v1072 = vshrl.u32 %v1071, 7
    %v1073 = vsub.s32 0, %v1072
    %v1074 = vrot.slane %v1070, %v1073
    %v1075 = vmul.f32 %v1068, %v1074
    %1076 = vset.pattern.permute.xlu0 28
    %1077 = vperm.xlu0 %1076, %v652
    %v1078 = vpop.permute.xlu0 %1077
    %v1080 = vmul.f32 %v1075, %v1078
    %v1081 = vadd.f32 %v1066, %v1080
    %1082 = vrot.lane.b32.xlu0 %v651, 122
    %v1083 = vpop.permute.xlu0 %1082
    %v1085 = vld [vmem:[%s16 + $0x1d] sm:$0x1]
    %v1086 = vlaneseq
    %v1087 = vshrl.u32 %v1086, 7
    %v1088 = vsub.s32 0, %v1087
    %v1089 = vrot.slane %v1085, %v1088
    %v1090 = vmul.f32 %v1083, %v1089
    %1091 = vset.pattern.permute.xlu0 29
    %1092 = vperm.xlu0 %1091, %v652
    %v1093 = vpop.permute.xlu0 %1092
    %v1095 = vmul.f32 %v1090, %v1093
    %v1096 = vadd.f32 %v1081, %v1095
    %1097 = vrot.lane.b32.xlu0 %v651, 121
    %v1098 = vpop.permute.xlu0 %1097
    %v1100 = vld [vmem:[%s16 + $0x1e] sm:$0x1]
    %v1101 = vlaneseq
    %v1102 = vshrl.u32 %v1101, 7
    %v1103 = vsub.s32 0, %v1102
    %v1104 = vrot.slane %v1100, %v1103
    %v1105 = vmul.f32 %v1098, %v1104
    %1106 = vset.pattern.permute.xlu0 30
    %1107 = vperm.xlu0 %1106, %v652
    %v1108 = vpop.permute.xlu0 %1107
    %v1110 = vmul.f32 %v1105, %v1108
    %v1111 = vadd.f32 %v1096, %v1110
    %1112 = vrot.lane.b32.xlu0 %v651, 120
    %v1113 = vpop.permute.xlu0 %1112
    %v1115 = vld [vmem:[%s16 + $0x1f] sm:$0x1]
    %v1116 = vlaneseq
    %v1117 = vshrl.u32 %v1116, 7
    %v1118 = vsub.s32 0, %v1117
    %v1119 = vrot.slane %v1115, %v1118
    %v1120 = vmul.f32 %v1113, %v1119
    %1121 = vset.pattern.permute.xlu0 31
    %1122 = vperm.xlu0 %1121, %v652
    %v1123 = vpop.permute.xlu0 %1122
    %v1125 = vmul.f32 %v1120, %v1123
    %v1126 = vadd.f32 %v1111, %v1125
    %1127 = vrot.lane.b32.xlu0 %v651, 119
    %v1128 = vpop.permute.xlu0 %1127
    %v1130 = vld [vmem:[%s16 + $0x20] sm:$0x1]
    %v1131 = vlaneseq
    %v1132 = vshrl.u32 %v1131, 7
    %v1133 = vsub.s32 0, %v1132
    %v1134 = vrot.slane %v1130, %v1133
    %v1135 = vmul.f32 %v1128, %v1134
    %1136 = vset.pattern.permute.xlu0 32
    %1137 = vperm.xlu0 %1136, %v652
    %v1138 = vpop.permute.xlu0 %1137
    %v1140 = vmul.f32 %v1135, %v1138
    %v1141 = vadd.f32 %v1126, %v1140
    %1142 = vrot.lane.b32.xlu0 %v651, 118
    %v1143 = vpop.permute.xlu0 %1142
    %v1145 = vld [vmem:[%s16 + $0x21] sm:$0x1]
    %v1146 = vlaneseq
    %v1147 = vshrl.u32 %v1146, 7
    %v1148 = vsub.s32 0, %v1147
    %v1149 = vrot.slane %v1145, %v1148
    %v1150 = vmul.f32 %v1143, %v1149
    %1151 = vset.pattern.permute.xlu0 33
    %1152 = vperm.xlu0 %1151, %v652
    %v1153 = vpop.permute.xlu0 %1152
    %v1155 = vmul.f32 %v1150, %v1153
    %v1156 = vadd.f32 %v1141, %v1155
    %1157 = vrot.lane.b32.xlu0 %v651, 117
    %v1158 = vpop.permute.xlu0 %1157
    %v1160 = vld [vmem:[%s16 + $0x22] sm:$0x1]
    %v1161 = vlaneseq
    %v1162 = vshrl.u32 %v1161, 7
    %v1163 = vsub.s32 0, %v1162
    %v1164 = vrot.slane %v1160, %v1163
    %v1165 = vmul.f32 %v1158, %v1164
    %1166 = vset.pattern.permute.xlu0 34
    %1167 = vperm.xlu0 %1166, %v652
    %v1168 = vpop.permute.xlu0 %1167
    %v1170 = vmul.f32 %v1165, %v1168
    %v1171 = vadd.f32 %v1156, %v1170
    %1172 = vrot.lane.b32.xlu0 %v651, 115
    %v1173 = vpop.permute.xlu0 %1172
    %v1175 = vld [vmem:[%s16 + $0x23] sm:$0x1]
    %v1176 = vlaneseq
    %v1177 = vshrl.u32 %v1176, 7
    %v1178 = vsub.s32 0, %v1177
    %v1179 = vrot.slane %v1175, %v1178
    %v1180 = vmul.f32 %v1173, %v1179
    %1181 = vset.pattern.permute.xlu0 35
    %1182 = vperm.xlu0 %1181, %v652
    %v1183 = vpop.permute.xlu0 %1182
    %v1185 = vmul.f32 %v1180, %v1183
    %v1186 = vadd.f32 %v1171, %v1185
    %1187 = vrot.lane.b32.xlu0 %v651, 114
    %v1188 = vpop.permute.xlu0 %1187
    %v1190 = vld [vmem:[%s16 + $0x24] sm:$0x1]
    %v1191 = vlaneseq
    %v1192 = vshrl.u32 %v1191, 7
    %v1193 = vsub.s32 0, %v1192
    %v1194 = vrot.slane %v1190, %v1193
    %v1195 = vmul.f32 %v1188, %v1194
    %1196 = vset.pattern.permute.xlu0 36
    %1197 = vperm.xlu0 %1196, %v652
    %v1198 = vpop.permute.xlu0 %1197
    %v1200 = vmul.f32 %v1195, %v1198
    %v1201 = vadd.f32 %v1186, %v1200
    %1202 = vrot.lane.b32.xlu0 %v651, 113
    %v1203 = vpop.permute.xlu0 %1202
    %v1205 = vld [vmem:[%s16 + $0x25] sm:$0x1]
    %v1206 = vlaneseq
    %v1207 = vshrl.u32 %v1206, 7
    %v1208 = vsub.s32 0, %v1207
    %v1209 = vrot.slane %v1205, %v1208
    %v1210 = vmul.f32 %v1203, %v1209
    %1211 = vset.pattern.permute.xlu0 37
    %1212 = vperm.xlu0 %1211, %v652
    %v1213 = vpop.permute.xlu0 %1212
    %v1215 = vmul.f32 %v1210, %v1213
    %v1216 = vadd.f32 %v1201, %v1215
    %1217 = vrot.lane.b32.xlu0 %v651, 112
    %v1218 = vpop.permute.xlu0 %1217
    %v1220 = vld [vmem:[%s16 + $0x26] sm:$0x1]
    %v1221 = vlaneseq
    %v1222 = vshrl.u32 %v1221, 7
    %v1223 = vsub.s32 0, %v1222
    %v1224 = vrot.slane %v1220, %v1223
    %v1225 = vmul.f32 %v1218, %v1224
    %1226 = vset.pattern.permute.xlu0 38
    %1227 = vperm.xlu0 %1226, %v652
    %v1228 = vpop.permute.xlu0 %1227
    %v1230 = vmul.f32 %v1225, %v1228
    %v1231 = vadd.f32 %v1216, %v1230
    %1232 = vrot.lane.b32.xlu0 %v651, 111
    %v1233 = vpop.permute.xlu0 %1232
    %v1235 = vld [vmem:[%s16 + $0x27] sm:$0x1]
    %v1236 = vlaneseq
    %v1237 = vshrl.u32 %v1236, 7
    %v1238 = vsub.s32 0, %v1237
    %v1239 = vrot.slane %v1235, %v1238
    %v1240 = vmul.f32 %v1233, %v1239
    %1241 = vset.pattern.permute.xlu0 39
    %1242 = vperm.xlu0 %1241, %v652
    %v1243 = vpop.permute.xlu0 %1242
    %v1245 = vmul.f32 %v1240, %v1243
    %v1246 = vadd.f32 %v1231, %v1245
    %1247 = vrot.lane.b32.xlu0 %v651, 110
    %v1248 = vpop.permute.xlu0 %1247
    %v1250 = vld [vmem:[%s16 + $0x28] sm:$0x1]
    %v1251 = vlaneseq
    %v1252 = vshrl.u32 %v1251, 7
    %v1253 = vsub.s32 0, %v1252
    %v1254 = vrot.slane %v1250, %v1253
    %v1255 = vmul.f32 %v1248, %v1254
    %1256 = vset.pattern.permute.xlu0 40
    %1257 = vperm.xlu0 %1256, %v652
    %v1258 = vpop.permute.xlu0 %1257
    %v1260 = vmul.f32 %v1255, %v1258
    %v1261 = vadd.f32 %v1246, %v1260
    %1262 = vrot.lane.b32.xlu0 %v651, 109
    %v1263 = vpop.permute.xlu0 %1262
    %v1265 = vld [vmem:[%s16 + $0x29] sm:$0x1]
    %v1266 = vlaneseq
    %v1267 = vshrl.u32 %v1266, 7
    %v1268 = vsub.s32 0, %v1267
    %v1269 = vrot.slane %v1265, %v1268
    %v1270 = vmul.f32 %v1263, %v1269
    %1271 = vset.pattern.permute.xlu0 41
    %1272 = vperm.xlu0 %1271, %v652
    %v1273 = vpop.permute.xlu0 %1272
    %v1275 = vmul.f32 %v1270, %v1273
    %v1276 = vadd.f32 %v1261, %v1275
    %1277 = vrot.lane.b32.xlu0 %v651, 107
    %v1278 = vpop.permute.xlu0 %1277
    %v1280 = vld [vmem:[%s16 + $0x2a] sm:$0x1]
    %v1281 = vlaneseq
    %v1282 = vshrl.u32 %v1281, 7
    %v1283 = vsub.s32 0, %v1282
    %v1284 = vrot.slane %v1280, %v1283
    %v1285 = vmul.f32 %v1278, %v1284
    %1286 = vset.pattern.permute.xlu0 42
    %1287 = vperm.xlu0 %1286, %v652
    %v1288 = vpop.permute.xlu0 %1287
    %v1290 = vmul.f32 %v1285, %v1288
    %v1291 = vadd.f32 %v1276, %v1290
    %1292 = vrot.lane.b32.xlu0 %v651, 106
    %v1293 = vpop.permute.xlu0 %1292
    %v1295 = vld [vmem:[%s16 + $0x2b] sm:$0x1]
    %v1296 = vlaneseq
    %v1297 = vshrl.u32 %v1296, 7
    %v1298 = vsub.s32 0, %v1297
    %v1299 = vrot.slane %v1295, %v1298
    %v1300 = vmul.f32 %v1293, %v1299
    %1301 = vset.pattern.permute.xlu0 43
    %1302 = vperm.xlu0 %1301, %v652
    %v1303 = vpop.permute.xlu0 %1302
    %v1305 = vmul.f32 %v1300, %v1303
    %v1306 = vadd.f32 %v1291, %v1305
    %1307 = vrot.lane.b32.xlu0 %v651, 105
    %v1308 = vpop.permute.xlu0 %1307
    %v1310 = vld [vmem:[%s16 + $0x2c] sm:$0x1]
    %v1311 = vlaneseq
    %v1312 = vshrl.u32 %v1311, 7
    %v1313 = vsub.s32 0, %v1312
    %v1314 = vrot.slane %v1310, %v1313
    %v1315 = vmul.f32 %v1308, %v1314
    %1316 = vset.pattern.permute.xlu0 44
    %1317 = vperm.xlu0 %1316, %v652
    %v1318 = vpop.permute.xlu0 %1317
    %v1320 = vmul.f32 %v1315, %v1318
    %v1321 = vadd.f32 %v1306, %v1320
    %1322 = vrot.lane.b32.xlu0 %v651, 104
    %v1323 = vpop.permute.xlu0 %1322
    %v1325 = vld [vmem:[%s16 + $0x2d] sm:$0x1]
    %v1326 = vlaneseq
    %v1327 = vshrl.u32 %v1326, 7
    %v1328 = vsub.s32 0, %v1327
    %v1329 = vrot.slane %v1325, %v1328
    %v1330 = vmul.f32 %v1323, %v1329
    %1331 = vset.pattern.permute.xlu0 45
    %1332 = vperm.xlu0 %1331, %v652
    %v1333 = vpop.permute.xlu0 %1332
    %v1335 = vmul.f32 %v1330, %v1333
    %v1336 = vadd.f32 %v1321, %v1335
    %1337 = vrot.lane.b32.xlu0 %v651, 103
    %v1338 = vpop.permute.xlu0 %1337
    %v1340 = vld [vmem:[%s16 + $0x2e] sm:$0x1]
    %v1341 = vlaneseq
    %v1342 = vshrl.u32 %v1341, 7
    %v1343 = vsub.s32 0, %v1342
    %v1344 = vrot.slane %v1340, %v1343
    %v1345 = vmul.f32 %v1338, %v1344
    %1346 = vset.pattern.permute.xlu0 46
    %1347 = vperm.xlu0 %1346, %v652
    %v1348 = vpop.permute.xlu0 %1347
    %v1350 = vmul.f32 %v1345, %v1348
    %v1351 = vadd.f32 %v1336, %v1350
    %1352 = vrot.lane.b32.xlu0 %v651, 102
    %v1353 = vpop.permute.xlu0 %1352
    %v1355 = vld [vmem:[%s16 + $0x2f] sm:$0x1]
    %v1356 = vlaneseq
    %v1357 = vshrl.u32 %v1356, 7
    %v1358 = vsub.s32 0, %v1357
    %v1359 = vrot.slane %v1355, %v1358
    %v1360 = vmul.f32 %v1353, %v1359
    %1361 = vset.pattern.permute.xlu0 47
    %1362 = vperm.xlu0 %1361, %v652
    %v1363 = vpop.permute.xlu0 %1362
    %v1365 = vmul.f32 %v1360, %v1363
    %v1366 = vadd.f32 %v1351, %v1365
    %1367 = vrot.lane.b32.xlu0 %v651, 101
    %v1368 = vpop.permute.xlu0 %1367
    %v1370 = vld [vmem:[%s16 + $0x30] sm:$0x1]
    %v1371 = vlaneseq
    %v1372 = vshrl.u32 %v1371, 7
    %v1373 = vsub.s32 0, %v1372
    %v1374 = vrot.slane %v1370, %v1373
    %v1375 = vmul.f32 %v1368, %v1374
    %1376 = vset.pattern.permute.xlu0 48
    %1377 = vperm.xlu0 %1376, %v652
    %v1378 = vpop.permute.xlu0 %1377
    %v1380 = vmul.f32 %v1375, %v1378
    %v1381 = vadd.f32 %v1366, %v1380
    %v1382 = vsel %vm532, %v1381, 0.0
    %v1383 = vrot.slane %v1382, 4
    %v1384 = vadd.f32 %v1382, %v1383
    %v1385 = vrot.slane %v1384, 2
    %v1386 = vadd.f32 %v1384, %v1385
    %v1387 = vrot.slane %v1386, 1
    %v1388 = vadd.f32 %v1386, %v1387
    %v1389 = vld [vmem:[#allocation3] sm:$0x1]
    %1391 = vset.pattern.permute.xlu0 0
    %1392 = vperm.xlu0 %1391, %v1389
    %v1393 = vpop.permute.xlu0 %1392
    %v1395 = vlaneseq
    %v1396 = vshrl.u32 %v1395, 7
    %v1397 = vsub.s32 0, %v1396
    %v1398 = vrot.slane %v1393, %v1397
    %v1399 = vadd.f32 %v1388, %v1398
    %v1400 = vand.u32 2147483647, %v1399
    %v1401 = vsub.f32 0.0, %v1400
    %v1402 = vmul.f32 %v1401, 1.442695
    %v1403 = vpow.pop %v1402
    %vm1404 = vcmp.ge.f32.partialorder %v1399, 0.0
    %v1405 = vadd.f32 %v1403, 1.0
    %v1406 = vrcp.pop %v1405
    %v1407 = vmul.f32 1.0, %v1406
    %v1408 = vmul.f32 %v1403, %v1406
    %v1409 = vsel %vm1404, %v1407, %v1408
    %v1410 = vmul.f32 %v633, %v1409
    %v1411 = vld [vmem:[%s11] sm:$0xf]
    %1413 = vset.pattern.permute.xlu0 0
    %1414 = vperm.xlu0 %1413, %v1411
    %v1415 = vpop.permute.xlu0 %1414
    %v1417 = vmul.f32 %v1410, %v1415
    %v1418 = vld [vmem:[%s12] sm:$0xf]
    %1420 = vset.pattern.permute.xlu0 0
    %1421 = vperm.xlu0 %1420, %v1418
    %v1422 = vpop.permute.xlu0 %1421
    %v1424 = vadd.f32 %v1417, %v1422
    %1426 = vrot.lane.b32.xlu0 %v1424, 127
    %v1427 = vpop.permute.xlu0 %1426
    %v1429 = vmax.f32 %v1424, %v1427
    %1431 = vrot.lane.b32.xlu0 %v1429, 120
    %v1432 = vpop.permute.xlu0 %1431
    %v1434 = vmax.f32 %v1429, %v1432
    %v1435 = vld [vmem:[%s17] sm:$0xff]
    %v1436 = vld [vmem:[%s17 + $0x8] sm:$0xff]
    %v1437 = vld [vmem:[%s17 + $0x10] sm:$0xff]
    %v1438 = vld [vmem:[%s17 + $0x18] sm:$0xff]
    %v1439 = vld [vmem:[%s17 + $0x20] sm:$0xff]
    %v1440 = vld [vmem:[%s17 + $0x28] sm:$0xff]
    %v1441 = vld [vmem:[%s17 + $0x30] sm:$0xff]
    %v1442 = vld [vmem:[%s17 + $0x38] sm:$0xff]
    %v1443 = vld [vmem:[%s17 + $0x40] sm:$0xff]
    %v1444 = vld [vmem:[%s17 + $0x48] sm:$0xff]
    %v1445 = vld [vmem:[%s17 + $0x50] sm:$0xff]
    %v1446 = vld [vmem:[%s17 + $0x58] sm:$0xff]
    %v1447 = vld [vmem:[%s17 + $0x60] sm:$0xff]
    %v1448 = vld [vmem:[%s17 + $0x68] sm:$0xff]
    %v1449 = vld [vmem:[%s17 + $0x70] sm:$0xff]
    %v1450 = vld [vmem:[%s17 + $0x78] sm:$0xff]
    %1451 = vmatprep.subr.mxu0 0.0
    %1452 = vmatpush1.msra.mxu0 %v1450
    %1453 = vmatprep.subr.mxu0 0.0
    %1454 = vmatpush1.msra.mxu0 %v1449
    %1455 = vmatprep.subr.mxu0 0.0
    %1456 = vmatpush1.msra.mxu0 %v1448
    %1457 = vmatprep.subr.mxu0 0.0
    %1458 = vmatpush1.msra.mxu0 %v1447
    %1459 = vmatprep.subr.mxu0 0.0
    %1460 = vmatpush1.msra.mxu0 %v1446
    %1461 = vmatprep.subr.mxu0 0.0
    %1462 = vmatpush1.msra.mxu0 %v1445
    %1463 = vmatprep.subr.mxu0 0.0
    %1464 = vmatpush1.msra.mxu0 %v1444
    %1465 = vmatprep.subr.mxu0 0.0
    %1466 = vmatpush1.msra.mxu0 %v1443
    %1467 = vmatprep.subr.mxu0 0.0
    %1468 = vmatpush1.msra.mxu0 %v1442
    %1469 = vmatprep.subr.mxu0 0.0
    %1470 = vmatpush1.msra.mxu0 %v1441
    %1471 = vmatprep.subr.mxu0 0.0
    %1472 = vmatpush1.msra.mxu0 %v1440
    %1473 = vmatprep.subr.mxu0 0.0
    %1474 = vmatpush1.msra.mxu0 %v1439
    %1475 = vmatprep.subr.mxu0 0.0
    %1476 = vmatpush1.msra.mxu0 %v1438
    %1477 = vmatprep.subr.mxu0 0.0
    %1478 = vmatpush1.msra.mxu0 %v1437
    %1479 = vmatprep.subr.mxu0 0.0
    %1480 = vmatpush1.msra.mxu0 %v1436
    %1481 = vmatprep.subr.mxu0 0.0
    %1482 = vmatpush1.msra.mxu0 %v1435
    %1483 = vmatprep.subr.mxu0 0.0
    %1484 = vmatpush2.msra.mxu0 0.0
    %1485 = vmatprep.subr.mxu0 0.0
    %1486 = vmatpush2.msra.mxu0 0.0
    %1487 = vmatprep.subr.mxu0 0.0
    %1488 = vmatpush2.msra.mxu0 0.0
    %1489 = vmatprep.subr.mxu0 0.0
    %1490 = vmatpush2.msra.mxu0 0.0
    %1491 = vmatprep.subr.mxu0 0.0
    %1492 = vmatpush2.msra.mxu0 0.0
    %1493 = vmatprep.subr.mxu0 0.0
    %1494 = vmatpush2.msra.mxu0 0.0
    %1495 = vmatprep.subr.mxu0 0.0
    %1496 = vmatpush2.msra.mxu0 0.0
    %1497 = vmatprep.subr.mxu0 0.0
    %1498 = vmatpush2.msra.mxu0 0.0
    %1499 = vmatprep.subr.mxu0 0.0
    %1500 = vmatpush2.msra.mxu0 0.0
    %1501 = vmatprep.subr.mxu0 0.0
    %1502 = vmatpush2.msra.mxu0 0.0
    %1503 = vmatprep.subr.mxu0 0.0
    %1504 = vmatpush2.msra.mxu0 0.0
    %1505 = vmatprep.subr.mxu0 0.0
    %1506 = vmatpush2.msra.mxu0 0.0
    %1507 = vmatprep.subr.mxu0 0.0
    %1508 = vmatpush2.msra.mxu0 0.0
    %1509 = vmatprep.subr.mxu0 0.0
    %1510 = vmatpush2.msra.mxu0 0.0
    %1511 = vmatprep.subr.mxu0 0.0
    %1512 = vmatpush2.msra.mxu0 0.0
    %1513 = vmatprep.subr.mxu0 0.0
    %1514 = vmatpush2.msra.mxu0 0.0
    %1515 = vmatprep.mubr.f32.mxu0 0.0
    %1516 = vmatmul.mubr.f32.gmra.mxu0 %v1434
    %v1517 = vpop.f32.mrf.mxu0
    %v1518 = vadd.f32 0.0, %v1517
    %v1519 = vpop.f32.mrf.mxu0
    %1520 = vdwg.mxu0
    %v1522 = vrot.slane %v1518, 1
    %1523 = vrot.lane.b32.xlu0 %v1522, 16
    %v1524 = vpop.permute.xlu0 %1523
    %v1526 = vrot.slane %v1518, 2
    %1527 = vrot.lane.b32.xlu0 %v1526, 32
    %v1528 = vpop.permute.xlu0 %1527
    %v1530 = vrot.slane %v1518, 3
    %1531 = vrot.lane.b32.xlu0 %v1530, 48
    %v1532 = vpop.permute.xlu0 %1531
    %v1534 = vsel %vm808, %v1518, %v1524
    %vm1535 = vcmask 261120
    %v1536 = vsel %vm1535, %v1534, %v1528
    %vm1537 = vcmask 392192
    %v1538 = vsel %vm1537, %v1536, %v1532
    %1539 = vrot.lane.b32.xlu0 %v1518, 112
    %v1540 = vpop.permute.xlu0 %1539
    %1543 = vrot.lane.b32.xlu0 %v1526, 16
    %v1544 = vpop.permute.xlu0 %1543
    %1546 = vrot.lane.b32.xlu0 %v1530, 32
    %v1547 = vpop.permute.xlu0 %1546
    %v1549 = vsel %vm808, %v1540, %v1522
    %v1550 = vsel %vm1535, %v1549, %v1544
    %v1551 = vsel %vm1537, %v1550, %v1547
    %v1553 = vrot.slane %v1551, 7
    %v1555 = vsel %vm650, %v1538, %v1553
    %v1556 = vld [vmem:[%s13] sm:$0xff]
    %v1557 = vld [vmem:[%s13 + $0x8] sm:$0xff]
    %v1558 = vld [vmem:[%s13 + $0x10] sm:$0xff]
    %v1559 = vld [vmem:[%s13 + $0x18] sm:$0xff]
    %v1560 = vld [vmem:[%s13 + $0x20] sm:$0xff]
    %v1561 = vld [vmem:[%s13 + $0x28] sm:$0xff]
    %v1562 = vld [vmem:[%s13 + $0x30] sm:$0xff]
    %v1563 = vld [vmem:[%s13 + $0x38] sm:$0xff]
    %v1564 = vld [vmem:[%s14] sm:$0x1]
    %v1566 = vlaneseq
    %v1567 = vshrl.u32 %v1566, 7
    %v1568 = vsub.s32 0, %v1567
    %v1569 = vrot.slane %v1564, %v1568
    %v1572 = vsel %vm632, %v1555, 0
    %1574 = vmatprep.subr.mxu0 0.0
    %1575 = vmatpush1.msra.mxu0 0.0
    %1576 = vmatprep.subr.mxu0 0.0
    %1577 = vmatpush1.msra.mxu0 0.0
    %1578 = vmatprep.subr.mxu0 0.0
    %1579 = vmatpush1.msra.mxu0 0.0
    %1580 = vmatprep.subr.mxu0 0.0
    %1581 = vmatpush1.msra.mxu0 0.0
    %1582 = vmatprep.subr.mxu0 0.0
    %1583 = vmatpush1.msra.mxu0 0.0
    %1584 = vmatprep.subr.mxu0 0.0
    %1585 = vmatpush1.msra.mxu0 0.0
    %1586 = vmatprep.subr.mxu0 0.0
    %1587 = vmatpush1.msra.mxu0 0.0
    %1588 = vmatprep.subr.mxu0 0.0
    %1589 = vmatpush1.msra.mxu0 0.0
    %1590 = vmatprep.subr.mxu0 0.0
    %1591 = vmatpush1.msra.mxu0 %v1563
    %1592 = vmatprep.subr.mxu0 0.0
    %1593 = vmatpush1.msra.mxu0 %v1562
    %1594 = vmatprep.subr.mxu0 0.0
    %1595 = vmatpush1.msra.mxu0 %v1561
    %1596 = vmatprep.subr.mxu0 0.0
    %1597 = vmatpush1.msra.mxu0 %v1560
    %1598 = vmatprep.subr.mxu0 0.0
    %1599 = vmatpush1.msra.mxu0 %v1559
    %1600 = vmatprep.subr.mxu0 0.0
    %1601 = vmatpush1.msra.mxu0 %v1558
    %1602 = vmatprep.subr.mxu0 0.0
    %1603 = vmatpush1.msra.mxu0 %v1557
    %1604 = vmatprep.subr.mxu0 0.0
    %1605 = vmatpush1.msra.mxu0 %v1556
    %1606 = vmatprep.subr.mxu0 0.0
    %1607 = vmatpush2.msra.mxu0 0.0
    %1608 = vmatprep.subr.mxu0 0.0
    %1609 = vmatpush2.msra.mxu0 0.0
    %1610 = vmatprep.subr.mxu0 0.0
    %1611 = vmatpush2.msra.mxu0 0.0
    %1612 = vmatprep.subr.mxu0 0.0
    %1613 = vmatpush2.msra.mxu0 0.0
    %1614 = vmatprep.subr.mxu0 0.0
    %1615 = vmatpush2.msra.mxu0 0.0
    %1616 = vmatprep.subr.mxu0 0.0
    %1617 = vmatpush2.msra.mxu0 0.0
    %1618 = vmatprep.subr.mxu0 0.0
    %1619 = vmatpush2.msra.mxu0 0.0
    %1620 = vmatprep.subr.mxu0 0.0
    %1621 = vmatpush2.msra.mxu0 0.0
    %1622 = vmatprep.subr.mxu0 0.0
    %1623 = vmatpush2.msra.mxu0 0.0
    %1624 = vmatprep.subr.mxu0 0.0
    %1625 = vmatpush2.msra.mxu0 0.0
    %1626 = vmatprep.subr.mxu0 0.0
    %1627 = vmatpush2.msra.mxu0 0.0
    %1628 = vmatprep.subr.mxu0 0.0
    %1629 = vmatpush2.msra.mxu0 0.0
    %1630 = vmatprep.subr.mxu0 0.0
    %1631 = vmatpush2.msra.mxu0 0.0
    %1632 = vmatprep.subr.mxu0 0.0
    %1633 = vmatpush2.msra.mxu0 0.0
    %1634 = vmatprep.subr.mxu0 0.0
    %1635 = vmatpush2.msra.mxu0 0.0
    %1636 = vmatprep.subr.mxu0 0.0
    %1637 = vmatpush2.msra.mxu0 0.0
    %1638 = vmatprep.mubr.f32.mxu0 0.0
    %1639 = vmatmul.mubr.f32.gmra.mxu0 %v1572
    %v1640 = vpop.f32.mrf.mxu0
    %v1641 = vadd.f32 %v1569, %v1640
    %v1642 = vpop.f32.mrf.mxu0
    %1643 = vdwg.mxu0
    %vm1644 = vcmask 74752
    %1645 = vst.msk [vmem:[#allocation4] sm:$0x3] %vm1644, %v1641
    // Predicated region
    $region74: #{cbam_feature_mapping.1} parent=1 // pred_check
      _
    $region75: #{cbam_feature_mapping.1} parent=1 // pred_check_branch
      %1647 = sbr.rel (0) target = $region77
    $region76: #{cbam_feature_mapping.1} parent=1 // pred_region
      %s1649 = ssub.s32 32, 32
      %1650 = vsyncadd [#allocation5], %s1649
      %s1652 = sshll.u32 [#allocation4], 4
      %s1653 = int_to_ptr.vmem [resolvable:$true] %s1652
      %1655 = dma.vmem_to_hbm [thread:$0]  %s1653, 32, %s18, [#allocation5]
    $region77: #{cbam_feature_mapping.1} parent=1 // pred_fallthru
      _
    // Predicated region
    $region78: #{cbam_feature_mapping.1} parent=1 // pred_check
      _
    $region79: #{cbam_feature_mapping.1} parent=1 // pred_check_branch
      %1657 = sbr.rel (0) target = $region81
    $region80: #{cbam_feature_mapping.1} parent=1 // pred_region
      %1658 = dma.done [#allocation5], 32
    $region81: #{cbam_feature_mapping.1} parent=1 // pred_fallthru
      _
    %1659 = vsyncpa [#allocation5], 1

</llo_original>
